<compile_context>
chip_gen: v5e
topology: v5e:2x2
jax: 0.10.0
libtpu: 0.0.40
codegen_flags: <defaults>
</compile_context>

<pallas_src>
import functools

import numpy as np
import jax
import jax.numpy as jnp
from jax.experimental import pallas as pl
from jax.experimental.pallas import tpu as pltpu

C_OUT = 8        # conv output channels
KSIZE = 5        # conv kernel size
PAD = KSIZE // 2
POOL_OUT = 50    # AdaptiveAvgPool1d output size
FC_OUT = 16      # Linear output size
NLANE = C_OUT * FC_OUT   # 128: packed weight lane width


def _round_up(v, m):
    return ((v + m - 1) // m) * m


def alphacnn_kernel(x_ref, wp_ref, cw_ref, cb_ref, bfc_ref, out_ref, *, L, conv_dtype):
    """All compute for one batch tile of AlphaCNN.

    x_ref   : (tile_B, Lp) f32  VMEM  zero-padded input rows; the signal lives
                                      at columns [PAD, PAD+L), zeros elsewhere,
                                      so x[:, k:k+L] is exactly the tap-k operand.
    wp_ref  : (L, 128)     bf16 VMEM  lane-dense fused pool@fc weights
                                      (columns [16c, 16c+16) = conv channel c).
    cw_ref  : (8, 5)  f32 SMEM  conv1 weights (scalar reads)
    cb_ref  : (8,)    f32 SMEM  conv1 bias
    bfc_ref : (1, 16) f32 VMEM  fc bias
    out_ref : (tile_B, 16) f32 VMEM
    """
    x = x_ref[...]
    if conv_dtype != jnp.float32:
        x = x.astype(conv_dtype)

    # Hoisted shifted conv operands: xs[k][b, i] == x_orig[b, i + k - PAD]
    # (zero outside range thanks to the wrapper-side zero pad).  5 static
    # slices total, shared by all 8 output channels; no zero-concats.
    xs = [x[:, k:k + L] for k in range(KSIZE)]

    w = wp_ref[...]                                                    # (L, 128) bf16

    # Accumulate the FC output; start from the fc bias (hoisted broadcast).
    out = jnp.broadcast_to(bfc_ref[...], out_ref.shape).astype(jnp.float32)

    for c in range(C_OUT):                                             # statically unrolled
        # Conv1d(in=1, k=5, pad=2) tap-by-tap on the VPU (in conv_dtype).
        acc = xs[0] * cw_ref[c, 0].astype(conv_dtype)
        for k in range(1, KSIZE):
            acc = acc + xs[k] * cw_ref[c, k].astype(conv_dtype)
        y = jnp.maximum(acc + cb_ref[c].astype(conv_dtype), 0.0)       # ReLU, (tile_B, L)

        # Fused AdaptiveAvgPool(50) + per-channel FC slice: one bf16 MXU matmul
        # (M = tile_B, K = L, N = 128) against the shared lane-dense slab;
        # only lane group c is valid for this channel -> slice + accumulate.
        d = jnp.dot(y.astype(jnp.bfloat16), w, preferred_element_type=jnp.float32)
        out = out + d[:, c * FC_OUT:(c + 1) * FC_OUT]

    out_ref[...] = out


def build_pool_matrix(L, out_size):
    """(L, out_size) matrix reproducing torch.nn.AdaptiveAvgPool1d exactly."""
    P = np.zeros((L, out_size), np.float32)
    for i in range(out_size):
        s = (i * L) // out_size                      # floor(i*L/out)
        e = -(((-(i + 1)) * L) // out_size)          # ceil((i+1)*L/out)
        P[s:e, i] = 1.0 / (e - s)
    return P


def _default_tile_cap():
    """Batch-tile cap per TPU generation (safe fallback = 256)."""
    try:
        kind = jax.devices()[0].device_kind.lower()
    except Exception:
        kind = ""
    # v6e / v7x have the VMEM headroom (and 256-wide MXU) for bigger tiles;
    # v5e's tighter scoped VMEM and 128-wide MXU make 256 the sweet spot.
    if "v6" in kind or "v7" in kind or "7x" in kind:
        return 512
    return 256


def alphacnn_forward(x, conv_w, conv_b, fc_w, fc_b, *, tile_b=None,
                     conv_dtype=jnp.float32):
    """x: (B, L) f32.  conv_w: (8,5) (== PyTorch conv1.weight.squeeze(1)),
    conv_b: (8,), fc_w: (16, 400), fc_b: (16,).  Returns (B, 16) f32.

    conv_dtype: set to jnp.bfloat16 on v6e/v7x to run the VPU conv chain in
    packed bf16 (bf16 VALUs); keep float32 on v5e (no bf16 VPU path).
    """
    B, L = x.shape

    if tile_b is None:
        if B <= 8:
            tile_b = B
        else:
            # >= 2 grid steps whenever possible (uses both v7x TensorCores and
            # gives the BlockSpec pipeline something to overlap), rounded to a
            # sublane multiple, capped per generation.
            tile_b = min(_default_tile_cap(), _round_up(pl.cdiv(B, 2), 8))
    grid_b = pl.cdiv(B, tile_b)

    # Wrapper-side zero pad: +-PAD halo plus lane alignment.  The kernel is
    # VPU/MXU-bound, so the tiny extra HBM traffic is free and it removes all
    # in-kernel zero-concat work for the shifted conv operands.
    Lp = _round_up(L + 2 * PAD, 128)
    xp = jnp.pad(x, ((0, 0), (PAD, Lp - L - PAD)))

    # Offline fusion: AdaptiveAvgPool(50) matrix folded into the per-channel FC
    # slice, then packed lane-dense into a single (L, 128) bf16 slab where
    # columns [16c, 16c+16) hold channel c's fused weights.
    pool_mat = jnp.asarray(build_pool_matrix(L, POOL_OUT))                   # (L, 50)
    fc3 = fc_w.reshape(FC_OUT, C_OUT, POOL_OUT)                              # (16, 8, 50)
    w_fused = jnp.einsum('lp,ocp->clo', pool_mat, fc3)                       # (8, L, 16)
    w_packed = jnp.transpose(w_fused, (1, 0, 2)).reshape(L, NLANE)           # (L, 128)
    w_packed = w_packed.astype(jnp.bfloat16)
    bfc = fc_b.reshape(1, FC_OUT).astype(jnp.float32)

    # Working set: double-buffered x tile + 5 hoisted f32 slices + acc/y temps
    # + the 256 KB weight slab.  Raise the scoped-VMEM limit so larger tiles
    # never hit v5e's 16 MiB default; cap well under v7x's 64 MiB physical.
    vmem_limit = int(min(max(12 * tile_b * Lp * 4 + (4 << 20), 32 << 20), 56 << 20))

    kernel = functools.partial(alphacnn_kernel, L=L, conv_dtype=conv_dtype)

    return pl.pallas_call(
        kernel,
        out_shape=jax.ShapeDtypeStruct((B, FC_OUT), jnp.float32),
        grid=(grid_b,),
        in_specs=[
            pl.BlockSpec((tile_b, Lp), lambda i: (i, 0)),              # x (batch-tiled)
            pl.BlockSpec((L, NLANE), lambda i: (0, 0)),                # packed pool+fc weight (bf16)
            pl.BlockSpec(memory_space=pltpu.MemorySpace.SMEM),         # conv weights
            pl.BlockSpec(memory_space=pltpu.MemorySpace.SMEM),         # conv bias
            pl.BlockSpec((1, FC_OUT), lambda i: (0, 0)),               # fc bias
        ],
        out_specs=pl.BlockSpec((tile_b, FC_OUT), lambda i: (i, 0)),
        compiler_params=pltpu.CompilerParams(
            dimension_semantics=("parallel",),
            vmem_limit_bytes=vmem_limit),
    )(xp, w_packed, conv_w, conv_b, bfc)


def reference_forward(x, conv_w, conv_b, fc_w, fc_b):
    """Pure-JAX reference mirroring the PyTorch forward for validation."""
    B, L = x.shape
    xp = jnp.pad(x, ((0, 0), (PAD, PAD)))
    ys = []
    for c in range(C_OUT):
        acc = sum(conv_w[c, k] * xp[:, k:k + L] for k in range(KSIZE)) + conv_b[c]
        ys.append(acc)
    y = jnp.maximum(jnp.stack(ys, axis=1), 0.0)                        # (B, 8, L)
    pool_mat = jnp.asarray(build_pool_matrix(L, POOL_OUT))
    pooled = jnp.einsum('bcl,lo->bco', y, pool_mat)                    # (B, 8, 50)
    flat = pooled.reshape(B, -1)                                       # (B, 400)
    return flat @ fc_w.T + fc_b


if __name__ == "__main__":
    # Module default input_length=1000 (pool 1000->50, fc 400->16); small batch.
    # The default tile_b heuristic picks tile_b=8 -> grid=(2,), exercising the
    # batch grid / pipeline.
    B, L = 16, 1000

    key = jax.random.PRNGKey(0)
    k_x, k_cw, k_cb, k_fw, k_fb = jax.random.split(key, 5)

    x = jax.random.normal(k_x, (B, L), dtype=jnp.float32)

    # Deterministic parameter init (uniform +-1/sqrt(fan_in), PyTorch-style scale)
    conv_fan_in = 1 * KSIZE
    conv_w = jax.random.uniform(k_cw, (C_OUT, KSIZE), jnp.float32,
                                minval=-1.0, maxval=1.0) / np.sqrt(conv_fan_in)
    conv_b = jax.random.uniform(k_cb, (C_OUT,), jnp.float32,
                                minval=-1.0, maxval=1.0) / np.sqrt(conv_fan_in)
    fc_fan_in = C_OUT * POOL_OUT
    fc_w = jax.random.uniform(k_fw, (FC_OUT, fc_fan_in), jnp.float32,
                              minval=-1.0, maxval=1.0) / np.sqrt(fc_fan_in)
    fc_b = jax.random.uniform(k_fb, (FC_OUT,), jnp.float32,
                              minval=-1.0, maxval=1.0) / np.sqrt(fc_fan_in)

    ref = jax.block_until_ready(reference_forward(x, conv_w, conv_b, fc_w, fc_b))

    # Default path: f32 conv chain, bf16 MXU operands (safe on v5e/v6e/v7x).
    out = jax.block_until_ready(alphacnn_forward(x, conv_w, conv_b, fc_w, fc_b))
    assert out.shape == (B, FC_OUT)
    # bf16 matmul operands with f32 accumulation: comfortably within 2e-3.
    assert jnp.allclose(out, ref, atol=2e-3, rtol=2e-3), "mismatch vs JAX reference"

    # Optional v6e/v7x path: VPU conv chain in packed bf16 (looser tolerance).
    out_bf = jax.block_until_ready(
        alphacnn_forward(x, conv_w, conv_b, fc_w, fc_b, conv_dtype=jnp.bfloat16))
    assert jnp.allclose(out_bf, ref, atol=1e-2, rtol=1e-2), "bf16-conv path mismatch"

    print("KERNEL_OK")
</pallas_src>

<mosaic_0001>
module attributes {stable_mosaic.version = 11 : i64} {
  func.func @alphacnn_kernel(%arg0: i32, %arg1: memref<8x1024xf32, #tpu.memory_space<vmem>>, %arg2: memref<1000x128xbf16, #tpu.memory_space<vmem>>, %arg3: memref<8x5xf32, #tpu.memory_space<smem>>, %arg4: memref<8xf32, #tpu.memory_space<smem>>, %arg5: memref<1x16xf32, #tpu.memory_space<vmem>>, %arg6: memref<8x16xf32, #tpu.memory_space<vmem>>) attributes {dimension_semantics = [#tpu.dimension_semantics<parallel>], iteration_bounds = array<i64: 2>, scalar_prefetch = 0 : i64, scratch_operands = 0 : i64, tpu.core_type = #tpu.core_type<tc>, window_params = [{transform_indices = @transform_0, window_bounds = array<i64: 8, 1024>}, {pipeline_mode = #tpu.pipeline_mode<synchronous>, transform_indices = @transform_1, window_bounds = array<i64: 1000, 128>}, {transform_indices = @transform_2, window_bounds = array<i64: 8, 5>}, {transform_indices = @transform_3, window_bounds = array<i64: 8>}, {pipeline_mode = #tpu.pipeline_mode<synchronous>, transform_indices = @transform_4, window_bounds = array<i64: 1, 16>}, {transform_indices = @transform_5, window_bounds = array<i64: 8, 16>}]} {
    %c0 = arith.constant 0 : index
    %c0_0 = arith.constant 0 : index
    %0 = vector.load %arg1[%c0, %c0_0] : memref<8x1024xf32, #tpu.memory_space<vmem>>, vector<8x1024xf32>
    %1 = vector.extract_strided_slice %0 {offsets = [0, 0], sizes = [8, 1000], strides = [1, 1]} : vector<8x1024xf32> to vector<8x1000xf32>
    %2 = vector.extract_strided_slice %0 {offsets = [0, 1], sizes = [8, 1000], strides = [1, 1]} : vector<8x1024xf32> to vector<8x1000xf32>
    %3 = vector.extract_strided_slice %0 {offsets = [0, 2], sizes = [8, 1000], strides = [1, 1]} : vector<8x1024xf32> to vector<8x1000xf32>
    %4 = vector.extract_strided_slice %0 {offsets = [0, 3], sizes = [8, 1000], strides = [1, 1]} : vector<8x1024xf32> to vector<8x1000xf32>
    %5 = vector.extract_strided_slice %0 {offsets = [0, 4], sizes = [8, 1000], strides = [1, 1]} : vector<8x1024xf32> to vector<8x1000xf32>
    %c0_1 = arith.constant 0 : index
    %c0_2 = arith.constant 0 : index
    %6 = vector.load %arg2[%c0_1, %c0_2] : memref<1000x128xbf16, #tpu.memory_space<vmem>>, vector<1000x128xbf16>
    %c0_3 = arith.constant 0 : index
    %c0_4 = arith.constant 0 : index
    %7 = vector.load %arg5[%c0_3, %c0_4] : memref<1x16xf32, #tpu.memory_space<vmem>>, vector<1x16xf32>
    %8 = vector.shape_cast %7 : vector<1x16xf32> to vector<1x16xf32>
    %9 = vector.broadcast %8 : vector<1x16xf32> to vector<8x16xf32>
    %c0_5 = arith.constant 0 : index
    %c0_6 = arith.constant 0 : index
    %10 = memref.load %arg3[%c0_5, %c0_6] : memref<8x5xf32, #tpu.memory_space<smem>>
    %11 = vector.broadcast %10 : f32 to vector<8x1000xf32>
    %12 = arith.mulf %1, %11 : vector<8x1000xf32>
    %c0_7 = arith.constant 0 : index
    %c1 = arith.constant 1 : index
    %13 = memref.load %arg3[%c0_7, %c1] : memref<8x5xf32, #tpu.memory_space<smem>>
    %14 = vector.broadcast %13 : f32 to vector<8x1000xf32>
    %15 = arith.mulf %2, %14 : vector<8x1000xf32>
    %16 = arith.addf %12, %15 : vector<8x1000xf32>
    %c0_8 = arith.constant 0 : index
    %c2 = arith.constant 2 : index
    %17 = memref.load %arg3[%c0_8, %c2] : memref<8x5xf32, #tpu.memory_space<smem>>
    %18 = vector.broadcast %17 : f32 to vector<8x1000xf32>
    %19 = arith.mulf %3, %18 : vector<8x1000xf32>
    %20 = arith.addf %16, %19 : vector<8x1000xf32>
    %c0_9 = arith.constant 0 : index
    %c3 = arith.constant 3 : index
    %21 = memref.load %arg3[%c0_9, %c3] : memref<8x5xf32, #tpu.memory_space<smem>>
    %22 = vector.broadcast %21 : f32 to vector<8x1000xf32>
    %23 = arith.mulf %4, %22 : vector<8x1000xf32>
    %24 = arith.addf %20, %23 : vector<8x1000xf32>
    %c0_10 = arith.constant 0 : index
    %c4 = arith.constant 4 : index
    %25 = memref.load %arg3[%c0_10, %c4] : memref<8x5xf32, #tpu.memory_space<smem>>
    %26 = vector.broadcast %25 : f32 to vector<8x1000xf32>
    %27 = arith.mulf %5, %26 : vector<8x1000xf32>
    %28 = arith.addf %24, %27 : vector<8x1000xf32>
    %c0_11 = arith.constant 0 : index
    %29 = memref.load %arg4[%c0_11] : memref<8xf32, #tpu.memory_space<smem>>
    %30 = vector.broadcast %29 : f32 to vector<8x1000xf32>
    %31 = arith.addf %28, %30 : vector<8x1000xf32>
    %cst = arith.constant 0.000000e+00 : f32
    %32 = vector.broadcast %cst : f32 to vector<8x1000xf32>
    %33 = arith.maximumf %31, %32 : vector<8x1000xf32>
    %34 = arith.truncf %33 : vector<8x1000xf32> to vector<8x1000xbf16>
    %cst_12 = arith.constant dense<0.000000e+00> : vector<8x128xf32>
    %35 = tpu.matmul %34, %6, %cst_12 {dimension_numbers = #tpu.dot_dimension_numbers<[1], [0], [0], [1], [0, 0, 1, 1], [], []>} : vector<8x1000xbf16>, vector<1000x128xbf16>, vector<8x128xf32> -> vector<8x128xf32>
    %36 = vector.extract_strided_slice %35 {offsets = [0, 0], sizes = [8, 16], strides = [1, 1]} : vector<8x128xf32> to vector<8x16xf32>
    %37 = arith.addf %9, %36 : vector<8x16xf32>
    %c1_13 = arith.constant 1 : index
    %c0_14 = arith.constant 0 : index
    %38 = memref.load %arg3[%c1_13, %c0_14] : memref<8x5xf32, #tpu.memory_space<smem>>
    %39 = vector.broadcast %38 : f32 to vector<8x1000xf32>
    %40 = arith.mulf %1, %39 : vector<8x1000xf32>
    %c1_15 = arith.constant 1 : index
    %c1_16 = arith.constant 1 : index
    %41 = memref.load %arg3[%c1_15, %c1_16] : memref<8x5xf32, #tpu.memory_space<smem>>
    %42 = vector.broadcast %41 : f32 to vector<8x1000xf32>
    %43 = arith.mulf %2, %42 : vector<8x1000xf32>
    %44 = arith.addf %40, %43 : vector<8x1000xf32>
    %c1_17 = arith.constant 1 : index
    %c2_18 = arith.constant 2 : index
    %45 = memref.load %arg3[%c1_17, %c2_18] : memref<8x5xf32, #tpu.memory_space<smem>>
    %46 = vector.broadcast %45 : f32 to vector<8x1000xf32>
    %47 = arith.mulf %3, %46 : vector<8x1000xf32>
    %48 = arith.addf %44, %47 : vector<8x1000xf32>
    %c1_19 = arith.constant 1 : index
    %c3_20 = arith.constant 3 : index
    %49 = memref.load %arg3[%c1_19, %c3_20] : memref<8x5xf32, #tpu.memory_space<smem>>
    %50 = vector.broadcast %49 : f32 to vector<8x1000xf32>
    %51 = arith.mulf %4, %50 : vector<8x1000xf32>
    %52 = arith.addf %48, %51 : vector<8x1000xf32>
    %c1_21 = arith.constant 1 : index
    %c4_22 = arith.constant 4 : index
    %53 = memref.load %arg3[%c1_21, %c4_22] : memref<8x5xf32, #tpu.memory_space<smem>>
    %54 = vector.broadcast %53 : f32 to vector<8x1000xf32>
    %55 = arith.mulf %5, %54 : vector<8x1000xf32>
    %56 = arith.addf %52, %55 : vector<8x1000xf32>
    %c1_23 = arith.constant 1 : index
    %57 = memref.load %arg4[%c1_23] : memref<8xf32, #tpu.memory_space<smem>>
    %58 = vector.broadcast %57 : f32 to vector<8x1000xf32>
    %59 = arith.addf %56, %58 : vector<8x1000xf32>
    %cst_24 = arith.constant 0.000000e+00 : f32
    %60 = vector.broadcast %cst_24 : f32 to vector<8x1000xf32>
    %61 = arith.maximumf %59, %60 : vector<8x1000xf32>
    %62 = arith.truncf %61 : vector<8x1000xf32> to vector<8x1000xbf16>
    %cst_25 = arith.constant dense<0.000000e+00> : vector<8x128xf32>
    %63 = tpu.matmul %62, %6, %cst_25 {dimension_numbers = #tpu.dot_dimension_numbers<[1], [0], [0], [1], [0, 0, 1, 1], [], []>} : vector<8x1000xbf16>, vector<1000x128xbf16>, vector<8x128xf32> -> vector<8x128xf32>
    %64 = vector.extract_strided_slice %63 {offsets = [0, 16], sizes = [8, 16], strides = [1, 1]} : vector<8x128xf32> to vector<8x16xf32>
    %65 = arith.addf %37, %64 : vector<8x16xf32>
    %c2_26 = arith.constant 2 : index
    %c0_27 = arith.constant 0 : index
    %66 = memref.load %arg3[%c2_26, %c0_27] : memref<8x5xf32, #tpu.memory_space<smem>>
    %67 = vector.broadcast %66 : f32 to vector<8x1000xf32>
    %68 = arith.mulf %1, %67 : vector<8x1000xf32>
    %c2_28 = arith.constant 2 : index
    %c1_29 = arith.constant 1 : index
    %69 = memref.load %arg3[%c2_28, %c1_29] : memref<8x5xf32, #tpu.memory_space<smem>>
    %70 = vector.broadcast %69 : f32 to vector<8x1000xf32>
    %71 = arith.mulf %2, %70 : vector<8x1000xf32>
    %72 = arith.addf %68, %71 : vector<8x1000xf32>
    %c2_30 = arith.constant 2 : index
    %c2_31 = arith.constant 2 : index
    %73 = memref.load %arg3[%c2_30, %c2_31] : memref<8x5xf32, #tpu.memory_space<smem>>
    %74 = vector.broadcast %73 : f32 to vector<8x1000xf32>
    %75 = arith.mulf %3, %74 : vector<8x1000xf32>
    %76 = arith.addf %72, %75 : vector<8x1000xf32>
    %c2_32 = arith.constant 2 : index
    %c3_33 = arith.constant 3 : index
    %77 = memref.load %arg3[%c2_32, %c3_33] : memref<8x5xf32, #tpu.memory_space<smem>>
    %78 = vector.broadcast %77 : f32 to vector<8x1000xf32>
    %79 = arith.mulf %4, %78 : vector<8x1000xf32>
    %80 = arith.addf %76, %79 : vector<8x1000xf32>
    %c2_34 = arith.constant 2 : index
    %c4_35 = arith.constant 4 : index
    %81 = memref.load %arg3[%c2_34, %c4_35] : memref<8x5xf32, #tpu.memory_space<smem>>
    %82 = vector.broadcast %81 : f32 to vector<8x1000xf32>
    %83 = arith.mulf %5, %82 : vector<8x1000xf32>
    %84 = arith.addf %80, %83 : vector<8x1000xf32>
    %c2_36 = arith.constant 2 : index
    %85 = memref.load %arg4[%c2_36] : memref<8xf32, #tpu.memory_space<smem>>
    %86 = vector.broadcast %85 : f32 to vector<8x1000xf32>
    %87 = arith.addf %84, %86 : vector<8x1000xf32>
    %cst_37 = arith.constant 0.000000e+00 : f32
    %88 = vector.broadcast %cst_37 : f32 to vector<8x1000xf32>
    %89 = arith.maximumf %87, %88 : vector<8x1000xf32>
    %90 = arith.truncf %89 : vector<8x1000xf32> to vector<8x1000xbf16>
    %cst_38 = arith.constant dense<0.000000e+00> : vector<8x128xf32>
    %91 = tpu.matmul %90, %6, %cst_38 {dimension_numbers = #tpu.dot_dimension_numbers<[1], [0], [0], [1], [0, 0, 1, 1], [], []>} : vector<8x1000xbf16>, vector<1000x128xbf16>, vector<8x128xf32> -> vector<8x128xf32>
    %92 = vector.extract_strided_slice %91 {offsets = [0, 32], sizes = [8, 16], strides = [1, 1]} : vector<8x128xf32> to vector<8x16xf32>
    %93 = arith.addf %65, %92 : vector<8x16xf32>
    %c3_39 = arith.constant 3 : index
    %c0_40 = arith.constant 0 : index
    %94 = memref.load %arg3[%c3_39, %c0_40] : memref<8x5xf32, #tpu.memory_space<smem>>
    %95 = vector.broadcast %94 : f32 to vector<8x1000xf32>
    %96 = arith.mulf %1, %95 : vector<8x1000xf32>
    %c3_41 = arith.constant 3 : index
    %c1_42 = arith.constant 1 : index
    %97 = memref.load %arg3[%c3_41, %c1_42] : memref<8x5xf32, #tpu.memory_space<smem>>
    %98 = vector.broadcast %97 : f32 to vector<8x1000xf32>
    %99 = arith.mulf %2, %98 : vector<8x1000xf32>
    %100 = arith.addf %96, %99 : vector<8x1000xf32>
    %c3_43 = arith.constant 3 : index
    %c2_44 = arith.constant 2 : index
    %101 = memref.load %arg3[%c3_43, %c2_44] : memref<8x5xf32, #tpu.memory_space<smem>>
    %102 = vector.broadcast %101 : f32 to vector<8x1000xf32>
    %103 = arith.mulf %3, %102 : vector<8x1000xf32>
    %104 = arith.addf %100, %103 : vector<8x1000xf32>
    %c3_45 = arith.constant 3 : index
    %c3_46 = arith.constant 3 : index
    %105 = memref.load %arg3[%c3_45, %c3_46] : memref<8x5xf32, #tpu.memory_space<smem>>
    %106 = vector.broadcast %105 : f32 to vector<8x1000xf32>
    %107 = arith.mulf %4, %106 : vector<8x1000xf32>
    %108 = arith.addf %104, %107 : vector<8x1000xf32>
    %c3_47 = arith.constant 3 : index
    %c4_48 = arith.constant 4 : index
    %109 = memref.load %arg3[%c3_47, %c4_48] : memref<8x5xf32, #tpu.memory_space<smem>>
    %110 = vector.broadcast %109 : f32 to vector<8x1000xf32>
    %111 = arith.mulf %5, %110 : vector<8x1000xf32>
    %112 = arith.addf %108, %111 : vector<8x1000xf32>
    %c3_49 = arith.constant 3 : index
    %113 = memref.load %arg4[%c3_49] : memref<8xf32, #tpu.memory_space<smem>>
    %114 = vector.broadcast %113 : f32 to vector<8x1000xf32>
    %115 = arith.addf %112, %114 : vector<8x1000xf32>
    %cst_50 = arith.constant 0.000000e+00 : f32
    %116 = vector.broadcast %cst_50 : f32 to vector<8x1000xf32>
    %117 = arith.maximumf %115, %116 : vector<8x1000xf32>
    %118 = arith.truncf %117 : vector<8x1000xf32> to vector<8x1000xbf16>
    %cst_51 = arith.constant dense<0.000000e+00> : vector<8x128xf32>
    %119 = tpu.matmul %118, %6, %cst_51 {dimension_numbers = #tpu.dot_dimension_numbers<[1], [0], [0], [1], [0, 0, 1, 1], [], []>} : vector<8x1000xbf16>, vector<1000x128xbf16>, vector<8x128xf32> -> vector<8x128xf32>
    %120 = vector.extract_strided_slice %119 {offsets = [0, 48], sizes = [8, 16], strides = [1, 1]} : vector<8x128xf32> to vector<8x16xf32>
    %121 = arith.addf %93, %120 : vector<8x16xf32>
    %c4_52 = arith.constant 4 : index
    %c0_53 = arith.constant 0 : index
    %122 = memref.load %arg3[%c4_52, %c0_53] : memref<8x5xf32, #tpu.memory_space<smem>>
    %123 = vector.broadcast %122 : f32 to vector<8x1000xf32>
    %124 = arith.mulf %1, %123 : vector<8x1000xf32>
    %c4_54 = arith.constant 4 : index
    %c1_55 = arith.constant 1 : index
    %125 = memref.load %arg3[%c4_54, %c1_55] : memref<8x5xf32, #tpu.memory_space<smem>>
    %126 = vector.broadcast %125 : f32 to vector<8x1000xf32>
    %127 = arith.mulf %2, %126 : vector<8x1000xf32>
    %128 = arith.addf %124, %127 : vector<8x1000xf32>
    %c4_56 = arith.constant 4 : index
    %c2_57 = arith.constant 2 : index
    %129 = memref.load %arg3[%c4_56, %c2_57] : memref<8x5xf32, #tpu.memory_space<smem>>
    %130 = vector.broadcast %129 : f32 to vector<8x1000xf32>
    %131 = arith.mulf %3, %130 : vector<8x1000xf32>
    %132 = arith.addf %128, %131 : vector<8x1000xf32>
    %c4_58 = arith.constant 4 : index
    %c3_59 = arith.constant 3 : index
    %133 = memref.load %arg3[%c4_58, %c3_59] : memref<8x5xf32, #tpu.memory_space<smem>>
    %134 = vector.broadcast %133 : f32 to vector<8x1000xf32>
    %135 = arith.mulf %4, %134 : vector<8x1000xf32>
    %136 = arith.addf %132, %135 : vector<8x1000xf32>
    %c4_60 = arith.constant 4 : index
    %c4_61 = arith.constant 4 : index
    %137 = memref.load %arg3[%c4_60, %c4_61] : memref<8x5xf32, #tpu.memory_space<smem>>
    %138 = vector.broadcast %137 : f32 to vector<8x1000xf32>
    %139 = arith.mulf %5, %138 : vector<8x1000xf32>
    %140 = arith.addf %136, %139 : vector<8x1000xf32>
    %c4_62 = arith.constant 4 : index
    %141 = memref.load %arg4[%c4_62] : memref<8xf32, #tpu.memory_space<smem>>
    %142 = vector.broadcast %141 : f32 to vector<8x1000xf32>
    %143 = arith.addf %140, %142 : vector<8x1000xf32>
    %cst_63 = arith.constant 0.000000e+00 : f32
    %144 = vector.broadcast %cst_63 : f32 to vector<8x1000xf32>
    %145 = arith.maximumf %143, %144 : vector<8x1000xf32>
    %146 = arith.truncf %145 : vector<8x1000xf32> to vector<8x1000xbf16>
    %cst_64 = arith.constant dense<0.000000e+00> : vector<8x128xf32>
    %147 = tpu.matmul %146, %6, %cst_64 {dimension_numbers = #tpu.dot_dimension_numbers<[1], [0], [0], [1], [0, 0, 1, 1], [], []>} : vector<8x1000xbf16>, vector<1000x128xbf16>, vector<8x128xf32> -> vector<8x128xf32>
    %148 = vector.extract_strided_slice %147 {offsets = [0, 64], sizes = [8, 16], strides = [1, 1]} : vector<8x128xf32> to vector<8x16xf32>
    %149 = arith.addf %121, %148 : vector<8x16xf32>
    %c5 = arith.constant 5 : index
    %c0_65 = arith.constant 0 : index
    %150 = memref.load %arg3[%c5, %c0_65] : memref<8x5xf32, #tpu.memory_space<smem>>
    %151 = vector.broadcast %150 : f32 to vector<8x1000xf32>
    %152 = arith.mulf %1, %151 : vector<8x1000xf32>
    %c5_66 = arith.constant 5 : index
    %c1_67 = arith.constant 1 : index
    %153 = memref.load %arg3[%c5_66, %c1_67] : memref<8x5xf32, #tpu.memory_space<smem>>
    %154 = vector.broadcast %153 : f32 to vector<8x1000xf32>
    %155 = arith.mulf %2, %154 : vector<8x1000xf32>
    %156 = arith.addf %152, %155 : vector<8x1000xf32>
    %c5_68 = arith.constant 5 : index
    %c2_69 = arith.constant 2 : index
    %157 = memref.load %arg3[%c5_68, %c2_69] : memref<8x5xf32, #tpu.memory_space<smem>>
    %158 = vector.broadcast %157 : f32 to vector<8x1000xf32>
    %159 = arith.mulf %3, %158 : vector<8x1000xf32>
    %160 = arith.addf %156, %159 : vector<8x1000xf32>
    %c5_70 = arith.constant 5 : index
    %c3_71 = arith.constant 3 : index
    %161 = memref.load %arg3[%c5_70, %c3_71] : memref<8x5xf32, #tpu.memory_space<smem>>
    %162 = vector.broadcast %161 : f32 to vector<8x1000xf32>
    %163 = arith.mulf %4, %162 : vector<8x1000xf32>
    %164 = arith.addf %160, %163 : vector<8x1000xf32>
    %c5_72 = arith.constant 5 : index
    %c4_73 = arith.constant 4 : index
    %165 = memref.load %arg3[%c5_72, %c4_73] : memref<8x5xf32, #tpu.memory_space<smem>>
    %166 = vector.broadcast %165 : f32 to vector<8x1000xf32>
    %167 = arith.mulf %5, %166 : vector<8x1000xf32>
    %168 = arith.addf %164, %167 : vector<8x1000xf32>
    %c5_74 = arith.constant 5 : index
    %169 = memref.load %arg4[%c5_74] : memref<8xf32, #tpu.memory_space<smem>>
    %170 = vector.broadcast %169 : f32 to vector<8x1000xf32>
    %171 = arith.addf %168, %170 : vector<8x1000xf32>
    %cst_75 = arith.constant 0.000000e+00 : f32
    %172 = vector.broadcast %cst_75 : f32 to vector<8x1000xf32>
    %173 = arith.maximumf %171, %172 : vector<8x1000xf32>
    %174 = arith.truncf %173 : vector<8x1000xf32> to vector<8x1000xbf16>
    %cst_76 = arith.constant dense<0.000000e+00> : vector<8x128xf32>
    %175 = tpu.matmul %174, %6, %cst_76 {dimension_numbers = #tpu.dot_dimension_numbers<[1], [0], [0], [1], [0, 0, 1, 1], [], []>} : vector<8x1000xbf16>, vector<1000x128xbf16>, vector<8x128xf32> -> vector<8x128xf32>
    %176 = vector.extract_strided_slice %175 {offsets = [0, 80], sizes = [8, 16], strides = [1, 1]} : vector<8x128xf32> to vector<8x16xf32>
    %177 = arith.addf %149, %176 : vector<8x16xf32>
    %c6 = arith.constant 6 : index
    %c0_77 = arith.constant 0 : index
    %178 = memref.load %arg3[%c6, %c0_77] : memref<8x5xf32, #tpu.memory_space<smem>>
    %179 = vector.broadcast %178 : f32 to vector<8x1000xf32>
    %180 = arith.mulf %1, %179 : vector<8x1000xf32>
    %c6_78 = arith.constant 6 : index
    %c1_79 = arith.constant 1 : index
    %181 = memref.load %arg3[%c6_78, %c1_79] : memref<8x5xf32, #tpu.memory_space<smem>>
    %182 = vector.broadcast %181 : f32 to vector<8x1000xf32>
    %183 = arith.mulf %2, %182 : vector<8x1000xf32>
    %184 = arith.addf %180, %183 : vector<8x1000xf32>
    %c6_80 = arith.constant 6 : index
    %c2_81 = arith.constant 2 : index
    %185 = memref.load %arg3[%c6_80, %c2_81] : memref<8x5xf32, #tpu.memory_space<smem>>
    %186 = vector.broadcast %185 : f32 to vector<8x1000xf32>
    %187 = arith.mulf %3, %186 : vector<8x1000xf32>
    %188 = arith.addf %184, %187 : vector<8x1000xf32>
    %c6_82 = arith.constant 6 : index
    %c3_83 = arith.constant 3 : index
    %189 = memref.load %arg3[%c6_82, %c3_83] : memref<8x5xf32, #tpu.memory_space<smem>>
    %190 = vector.broadcast %189 : f32 to vector<8x1000xf32>
    %191 = arith.mulf %4, %190 : vector<8x1000xf32>
    %192 = arith.addf %188, %191 : vector<8x1000xf32>
    %c6_84 = arith.constant 6 : index
    %c4_85 = arith.constant 4 : index
    %193 = memref.load %arg3[%c6_84, %c4_85] : memref<8x5xf32, #tpu.memory_space<smem>>
    %194 = vector.broadcast %193 : f32 to vector<8x1000xf32>
    %195 = arith.mulf %5, %194 : vector<8x1000xf32>
    %196 = arith.addf %192, %195 : vector<8x1000xf32>
    %c6_86 = arith.constant 6 : index
    %197 = memref.load %arg4[%c6_86] : memref<8xf32, #tpu.memory_space<smem>>
    %198 = vector.broadcast %197 : f32 to vector<8x1000xf32>
    %199 = arith.addf %196, %198 : vector<8x1000xf32>
    %cst_87 = arith.constant 0.000000e+00 : f32
    %200 = vector.broadcast %cst_87 : f32 to vector<8x1000xf32>
    %201 = arith.maximumf %199, %200 : vector<8x1000xf32>
    %202 = arith.truncf %201 : vector<8x1000xf32> to vector<8x1000xbf16>
    %cst_88 = arith.constant dense<0.000000e+00> : vector<8x128xf32>
    %203 = tpu.matmul %202, %6, %cst_88 {dimension_numbers = #tpu.dot_dimension_numbers<[1], [0], [0], [1], [0, 0, 1, 1], [], []>} : vector<8x1000xbf16>, vector<1000x128xbf16>, vector<8x128xf32> -> vector<8x128xf32>
    %204 = vector.extract_strided_slice %203 {offsets = [0, 96], sizes = [8, 16], strides = [1, 1]} : vector<8x128xf32> to vector<8x16xf32>
    %205 = arith.addf %177, %204 : vector<8x16xf32>
    %c7 = arith.constant 7 : index
    %c0_89 = arith.constant 0 : index
    %206 = memref.load %arg3[%c7, %c0_89] : memref<8x5xf32, #tpu.memory_space<smem>>
    %207 = vector.broadcast %206 : f32 to vector<8x1000xf32>
    %208 = arith.mulf %1, %207 : vector<8x1000xf32>
    %c7_90 = arith.constant 7 : index
    %c1_91 = arith.constant 1 : index
    %209 = memref.load %arg3[%c7_90, %c1_91] : memref<8x5xf32, #tpu.memory_space<smem>>
    %210 = vector.broadcast %209 : f32 to vector<8x1000xf32>
    %211 = arith.mulf %2, %210 : vector<8x1000xf32>
    %212 = arith.addf %208, %211 : vector<8x1000xf32>
    %c7_92 = arith.constant 7 : index
    %c2_93 = arith.constant 2 : index
    %213 = memref.load %arg3[%c7_92, %c2_93] : memref<8x5xf32, #tpu.memory_space<smem>>
    %214 = vector.broadcast %213 : f32 to vector<8x1000xf32>
    %215 = arith.mulf %3, %214 : vector<8x1000xf32>
    %216 = arith.addf %212, %215 : vector<8x1000xf32>
    %c7_94 = arith.constant 7 : index
    %c3_95 = arith.constant 3 : index
    %217 = memref.load %arg3[%c7_94, %c3_95] : memref<8x5xf32, #tpu.memory_space<smem>>
    %218 = vector.broadcast %217 : f32 to vector<8x1000xf32>
    %219 = arith.mulf %4, %218 : vector<8x1000xf32>
    %220 = arith.addf %216, %219 : vector<8x1000xf32>
    %c7_96 = arith.constant 7 : index
    %c4_97 = arith.constant 4 : index
    %221 = memref.load %arg3[%c7_96, %c4_97] : memref<8x5xf32, #tpu.memory_space<smem>>
    %222 = vector.broadcast %221 : f32 to vector<8x1000xf32>
    %223 = arith.mulf %5, %222 : vector<8x1000xf32>
    %224 = arith.addf %220, %223 : vector<8x1000xf32>
    %c7_98 = arith.constant 7 : index
    %225 = memref.load %arg4[%c7_98] : memref<8xf32, #tpu.memory_space<smem>>
    %226 = vector.broadcast %225 : f32 to vector<8x1000xf32>
    %227 = arith.addf %224, %226 : vector<8x1000xf32>
    %cst_99 = arith.constant 0.000000e+00 : f32
    %228 = vector.broadcast %cst_99 : f32 to vector<8x1000xf32>
    %229 = arith.maximumf %227, %228 : vector<8x1000xf32>
    %230 = arith.truncf %229 : vector<8x1000xf32> to vector<8x1000xbf16>
    %cst_100 = arith.constant dense<0.000000e+00> : vector<8x128xf32>
    %231 = tpu.matmul %230, %6, %cst_100 {dimension_numbers = #tpu.dot_dimension_numbers<[1], [0], [0], [1], [0, 0, 1, 1], [], []>} : vector<8x1000xbf16>, vector<1000x128xbf16>, vector<8x128xf32> -> vector<8x128xf32>
    %232 = vector.extract_strided_slice %231 {offsets = [0, 112], sizes = [8, 16], strides = [1, 1]} : vector<8x128xf32> to vector<8x16xf32>
    %233 = arith.addf %205, %232 : vector<8x16xf32>
    %c0_101 = arith.constant 0 : index
    %c0_102 = arith.constant 0 : index
    %234 = vector.load %arg6[%c0_101, %c0_102] : memref<8x16xf32, #tpu.memory_space<vmem>>, vector<8x16xf32>
    tpu.vector_store %arg6[%c0_101, %c0_102], %233 {strides = array<i32>} : memref<8x16xf32, #tpu.memory_space<vmem>>, vector<8x16xf32>,
    return
  }
  func.func @transform_0(%arg0: i32) -> (i32, i32) {
    %c0_i32 = arith.constant 0 : i32
    %c0_i32_0 = arith.constant 0 : i32
    return %arg0, %c0_i32 : i32, i32
  }
  func.func @transform_1(%arg0: i32) -> (i32, i32) {
    %c0_i32 = arith.constant 0 : i32
    %c0_i32_0 = arith.constant 0 : i32
    %c0_i32_1 = arith.constant 0 : i32
    return %c0_i32, %c0_i32_0 : i32, i32
  }
  func.func @transform_2(%arg0: i32) -> (i32, i32) {
    %c0_i32 = arith.constant 0 : i32
    %c0_i32_0 = arith.constant 0 : i32
    %c0_i32_1 = arith.constant 0 : i32
    return %c0_i32, %c0_i32_0 : i32, i32
  }
  func.func @transform_3(%arg0: i32) -> i32 {
    %c0_i32 = arith.constant 0 : i32
    %c0_i32_0 = arith.constant 0 : i32
    return %c0_i32 : i32
  }
  func.func @transform_4(%arg0: i32) -> (i32, i32) {
    %c0_i32 = arith.constant 0 : i32
    %c0_i32_0 = arith.constant 0 : i32
    %c0_i32_1 = arith.constant 0 : i32
    return %c0_i32, %c0_i32_0 : i32, i32
  }
  func.func @transform_5(%arg0: i32) -> (i32, i32) {
    %c0_i32 = arith.constant 0 : i32
    %c0_i32_0 = arith.constant 0 : i32
    return %arg0, %c0_i32 : i32, i32
  }
}

</mosaic_0001>

<llo_original>
// kernel: tpu_custom_call.1
$region0: #{tpu_custom_call.1}
  #allocation0 [shape = 'u32[]', space=smem, size = 0x4, offset = 0x4, fixed_abs, tag = 'smem constant byte address 0x4 - core index']
  #allocation1 [shape = 'u32[72,128]{1,0:T(1,128)}', space=vmem, size = 0x9000, scoped, tag = 'internal scratch']
  %s0 = inlined_call_operand.hbm [shape: f32[16,1024], index: 0, kind: input, shape index: {}]
  %s1 = inlined_call_operand.hbm [shape: bf16[1000,128], index: 1, kind: input, shape index: {}]
  %s2 = inlined_call_operand.hbm [shape: f32[8,5], index: 2, kind: input, shape index: {}]
  %s3 = inlined_call_operand.vmem [shape: f32[8], index: 3, kind: input, shape index: {}]
  %s4 = inlined_call_operand.vmem [shape: f32[1,16], index: 4, kind: input, shape index: {}]
  %s5 = inlined_call_operand.hbm [shape: f32[16,16], index: 5, kind: output, shape index: {}]
  %s6 = sld [smem:[#allocation0]]
  $region69: #{tpu_custom_call.1} parent=0
    _
  %s8 = ssub.s32 1, %s6
  %s9 = scalar_select 0, %s8, %s6
  $region1: #{tpu_custom_call.1} parent=0
    #allocation2 [shape = 'u8[65536]{0}', space=vmem, size = 0x10000, scoped, tag = 'input window, operand 0']
    #allocation3 [shape = 's32[2]{0}', space=sflag, size = 0x8, scoped, tag = 'scoped memory for tpu_custom_call.1']
    #allocation4 [shape = 's32[2]{0}', space=sflag, size = 0x8, scoped, tag = 'scoped memory for tpu_custom_call.1']
    #allocation5 [shape = 's32[2]{0}', space=sflag, size = 0x8, scoped, tag = 'scoped memory for tpu_custom_call.1']
    #allocation6 [shape = 's32[2]{0}', space=sflag, size = 0x8, scoped, tag = 'scoped memory for tpu_custom_call.1']
    #allocation7 [shape = 'u8[256000]{0}', space=vmem, size = 0x3e800, scoped, tag = 'input window, operand 1, single buffered']
    #allocation8 [shape = 's32[1]{0}', space=sflag, size = 0x4, scoped, tag = 'scoped memory for tpu_custom_call.1']
    #allocation9 [shape = 'u8[4096]{0}', space=smem, size = 0x1000, scoped, tag = 'input window, operand 2, single buffered']
    #allocation10 [shape = 'u8[512]{0}', space=smem, size = 0x200, scoped, tag = 'input window, operand 3, single buffered']
    #allocation11 [shape = 'u8[8192]{0}', space=vmem, size = 0x2000, scoped, tag = 'output window, operand 0']
    %10 = vsyncpa [#allocation3], 0
    %s11 = scalar_lea.sflag [#allocation3], 1
    %12 = vsyncpa %s11, 0
    %13 = vsyncpa [#allocation8], 0
    %14 = vsyncpa [#allocation5], 0
    %15 = vsyncpa [#allocation6], 0
    %16 = vsyncpa [#allocation4], 0
    %s17 = scalar_lea.sflag [#allocation4], 1
    %18 = vsyncpa %s17, 0
    loop: start=0, step=1, limit=4
    $region2: #{tpu_custom_call.1} parent=1 // loop_pre_header
      _
    $region3: #{tpu_custom_call.1} parent=1 // loop_header
      %s20 = sphi 0, %s24
      %p21 = scmp.ge.s32.totalorder %s20, 4
      %s30 = sphi 0, %s32
      %s33 = sphi 0, %s30
      %s34 = sphi 0, %s33
      %s50 = sphi 0, %s34
      %s54 = sphi 0, %s54
      %s56 = sphi 0, %s54
      %s57 = sphi 0, %s56
      %s71 = sphi 0, %s57
      %s75 = sphi 0, %s75
      %s77 = sphi 0, %s75
      %s78 = sphi 0, %s77
      %s92 = sphi 0, %s78
      %s96 = sphi 0, %s96
      %s98 = sphi 0, %s96
      %s99 = sphi 0, %s98
      %s113 = sphi 0, %s99
      %s117 = sphi 0, %s117
      %s119 = sphi 0, %s117
      %s120 = sphi 0, %s119
      %s134 = sphi 0, %s120
      %s140 = sphi 0, %s142
      %s143 = sphi 0, %s140
      %s144 = sphi 0, %s143
      %s160 = sphi 0, %s144
    $region4: #{tpu_custom_call.1} parent=1 // loop_header_branch
      %23 = sbr.rel (%p21) target = $region8
    $region5: #{tpu_custom_call.1} parent=1 // loop_body
      %s25 = ssub.s32 %s20, 1
      %s26 = ssub.s32 %s20, 2
      %s27 = sadd.s32 %s20, 1
      %s28 = ssub.s32 %s20, %s27
      %p29 = scmp.eq.s32.totalorder %s28, 0
      %s31 = sadd.s32 %s30, 1
      %s32 = scalar_select %p29, %s30, %s31
      %p35 = pneg %p29
      %p36 = scmp.eq.s32.totalorder %s20, 1
      %p37 = por %p35, %p36
      %p38 = scmp.ne.s32.totalorder %s30, %s33
      %p39 = scmp.eq.s32.totalorder %s20, 0
      %p40 = por %p38, %p39
      %p41 = scmp.ne.s32.totalorder %s30, %s33
      %p42 = scmp.eq.s32.totalorder %s25, 1
      %p43 = por %p41, %p42
      %p44 = scmp.ne.s32.totalorder %s33, %s34
      %p45 = scmp.eq.s32.totalorder %s25, 0
      %p46 = por %p44, %p45
      %p47 = scmp.ne.s32.totalorder %s33, %s34
      %p48 = scmp.eq.s32.totalorder %s26, 1
      %p49 = por %p47, %p48
      %p51 = scmp.ne.s32.totalorder %s34, %s50
      %p52 = scmp.eq.s32.totalorder %s26, 0
      %p53 = por %p51, %p52
      %s55 = sadd.s32 %s54, 1
      %p58 = scmp.eq.s32.totalorder %s20, 1
      %p59 = scmp.ne.s32.totalorder %s54, %s56
      %p60 = scmp.eq.s32.totalorder %s20, 0
      %p61 = por %p59, %p60
      %p62 = scmp.ne.s32.totalorder %s54, %s56
      %p63 = scmp.eq.s32.totalorder %s25, 1
      %p64 = por %p62, %p63
      %p65 = scmp.ne.s32.totalorder %s56, %s57
      %p66 = scmp.eq.s32.totalorder %s25, 0
      %p67 = por %p65, %p66
      %p68 = scmp.ne.s32.totalorder %s56, %s57
      %p69 = scmp.eq.s32.totalorder %s26, 1
      %p70 = por %p68, %p69
      %p72 = scmp.ne.s32.totalorder %s57, %s71
      %p73 = scmp.eq.s32.totalorder %s26, 0
      %p74 = por %p72, %p73
      %s76 = sadd.s32 %s75, 1
      %p79 = scmp.eq.s32.totalorder %s20, 1
      %p80 = scmp.ne.s32.totalorder %s75, %s77
      %p81 = scmp.eq.s32.totalorder %s20, 0
      %p82 = por %p80, %p81
      %p83 = scmp.ne.s32.totalorder %s75, %s77
      %p84 = scmp.eq.s32.totalorder %s25, 1
      %p85 = por %p83, %p84
      %p86 = scmp.ne.s32.totalorder %s77, %s78
      %p87 = scmp.eq.s32.totalorder %s25, 0
      %p88 = por %p86, %p87
      %p89 = scmp.ne.s32.totalorder %s77, %s78
      %p90 = scmp.eq.s32.totalorder %s26, 1
      %p91 = por %p89, %p90
      %p93 = scmp.ne.s32.totalorder %s78, %s92
      %p94 = scmp.eq.s32.totalorder %s26, 0
      %p95 = por %p93, %p94
      %s97 = sadd.s32 %s96, 1
      %p100 = scmp.eq.s32.totalorder %s20, 1
      %p101 = scmp.ne.s32.totalorder %s96, %s98
      %p102 = scmp.eq.s32.totalorder %s20, 0
      %p103 = por %p101, %p102
      %p104 = scmp.ne.s32.totalorder %s96, %s98
      %p105 = scmp.eq.s32.totalorder %s25, 1
      %p106 = por %p104, %p105
      %p107 = scmp.ne.s32.totalorder %s98, %s99
      %p108 = scmp.eq.s32.totalorder %s25, 0
      %p109 = por %p107, %p108
      %p110 = scmp.ne.s32.totalorder %s98, %s99
      %p111 = scmp.eq.s32.totalorder %s26, 1
      %p112 = por %p110, %p111
      %p114 = scmp.ne.s32.totalorder %s99, %s113
      %p115 = scmp.eq.s32.totalorder %s26, 0
      %p116 = por %p114, %p115
      %s118 = sadd.s32 %s117, 1
      %p121 = scmp.eq.s32.totalorder %s20, 1
      %p122 = scmp.ne.s32.totalorder %s117, %s119
      %p123 = scmp.eq.s32.totalorder %s20, 0
      %p124 = por %p122, %p123
      %p125 = scmp.ne.s32.totalorder %s117, %s119
      %p126 = scmp.eq.s32.totalorder %s25, 1
      %p127 = por %p125, %p126
      %p128 = scmp.ne.s32.totalorder %s119, %s120
      %p129 = scmp.eq.s32.totalorder %s25, 0
      %p130 = por %p128, %p129
      %p131 = scmp.ne.s32.totalorder %s119, %s120
      %p132 = scmp.eq.s32.totalorder %s26, 1
      %p133 = por %p131, %p132
      %p135 = scmp.ne.s32.totalorder %s120, %s134
      %p136 = scmp.eq.s32.totalorder %s26, 0
      %p137 = por %p135, %p136
      %s138 = ssub.s32 %s20, %s27
      %p139 = scmp.eq.s32.totalorder %s138, 0
      %s141 = sadd.s32 %s140, 1
      %s142 = scalar_select %p139, %s140, %s141
      %p145 = pneg %p139
      %p146 = scmp.eq.s32.totalorder %s20, 1
      %p147 = por %p145, %p146
      %p148 = scmp.ne.s32.totalorder %s140, %s143
      %p149 = scmp.eq.s32.totalorder %s20, 0
      %p150 = por %p148, %p149
      %p151 = scmp.ne.s32.totalorder %s140, %s143
      %p152 = scmp.eq.s32.totalorder %s25, 1
      %p153 = por %p151, %p152
      %p154 = scmp.ne.s32.totalorder %s143, %s144
      %p155 = scmp.eq.s32.totalorder %s25, 0
      %p156 = por %p154, %p155
      %p157 = scmp.ne.s32.totalorder %s143, %s144
      %p158 = scmp.eq.s32.totalorder %s26, 1
      %p159 = por %p157, %p158
      %p161 = scmp.ne.s32.totalorder %s144, %s160
      %p162 = scmp.eq.s32.totalorder %s26, 0
      %p163 = por %p161, %p162
      %p164 = scmp.le.s32.totalorder 1, %s20
      %p165 = scmp.lt.s32.totalorder %s20, 3
      %p166 = pnand %p164, %p165
      %p167 = pneg %p166
      // Predicated region
      $region9: #{tpu_custom_call.1} parent=5 // pred_check
        _
      $region10: #{tpu_custom_call.1} parent=5 // pred_check_branch
        %169 = sbr.rel (%p166) target = $region12
      $region11: #{tpu_custom_call.1} parent=5 // pred_region
        %s170 = ssub.s32 %s20, 1
        // Predicated region
        $region13: #{tpu_custom_call.1} parent=11 // pred_check
          %p171 = pneg %p67
        $region14: #{tpu_custom_call.1} parent=11 // pred_check_branch
          %173 = sbr.rel (%p171) target = $region16
        $region15: #{tpu_custom_call.1} parent=11 // pred_region
          %175 = vsyncadd [#allocation8], 0
          %s176 = sshll.u32 %s1, 4
          %s177 = int_to_ptr.hbm [resolvable:$true] %s176
          %s178 = sshll.u32 [#allocation7], 4
          %s179 = int_to_ptr.vmem [resolvable:$true] %s178
          %184 = dma.hbm_to_vmem [thread:$0]  %s177, 8000, %s179, [#allocation8], 64, 64, 4
        $region16: #{tpu_custom_call.1} parent=11 // pred_fallthru
          _
        // Predicated region
        $region17: #{tpu_custom_call.1} parent=11 // pred_check
          %p185 = pneg %p88
        $region18: #{tpu_custom_call.1} parent=11 // pred_check_branch
          %187 = sbr.rel (%p185) target = $region20
        $region19: #{tpu_custom_call.1} parent=11 // pred_region
          %189 = vsyncadd [#allocation5], 0
          %s191 = sshll.u32 %s2, 4
          %s192 = int_to_ptr.hbm [resolvable:$true] %s191
          %194 = dma.hbm_to_smem %s192, 128, [#allocation9], [#allocation5]
        $region20: #{tpu_custom_call.1} parent=11 // pred_fallthru
          _
        // Predicated region
        $region21: #{tpu_custom_call.1} parent=11 // pred_check
          %p195 = pneg %p109
        $region22: #{tpu_custom_call.1} parent=11 // pred_check_branch
          %197 = sbr.rel (%p195) target = $region24
        $region23: #{tpu_custom_call.1} parent=11 // pred_region
          %199 = vsyncadd [#allocation6], 0
          %s201 = sshll.u32 %s3, 4
          %s202 = int_to_ptr.vmem [resolvable:$true] %s201
          %204 = dma.vmem_to_smem %s202, 16, [#allocation10], [#allocation6]
        $region24: #{tpu_custom_call.1} parent=11 // pred_fallthru
          _
        // Predicated region
        $region25: #{tpu_custom_call.1} parent=11 // pred_check
          %p205 = pneg %p130
        $region26: #{tpu_custom_call.1} parent=11 // pred_check_branch
          %207 = sbr.rel (%p205) target = $region28
        $region27: #{tpu_custom_call.1} parent=11 // pred_region
          _
        $region28: #{tpu_custom_call.1} parent=11 // pred_fallthru
          _
      $region12: #{tpu_custom_call.1} parent=5 // pred_fallthru
        _
      %p208 = scmp.lt.s32.totalorder %s20, 2
      // Predicated region
      $region29: #{tpu_custom_call.1} parent=5 // pred_check
        %p209 = pneg %p208
      $region30: #{tpu_custom_call.1} parent=5 // pred_check_branch
        %211 = sbr.rel (%p209) target = $region32
      $region31: #{tpu_custom_call.1} parent=5 // pred_region
        // Predicated region
        $region33: #{tpu_custom_call.1} parent=31 // pred_check
          %p212 = pneg %p40
        $region34: #{tpu_custom_call.1} parent=31 // pred_check_branch
          %214 = sbr.rel (%p212) target = $region36
        $region35: #{tpu_custom_call.1} parent=31 // pred_region
          %s215 = sand.u32 %s30, 1
          %s216 = scalar_lea.sflag [#allocation3], %s215
          %s217 = sand.u32 %s30, 1
          %s218 = smul.addr %s217, 64
          %s219 = scalar_lea.vmem [#allocation2], %s218
          %221 = vsyncadd %s216, 0
          %s222 = smul.addr %s20, 8
          %s223 = smul.addr %s222, 8
          %s224 = scalar_lea.hbm %s0, %s223
          %s226 = sshll.u32 %s224, 4
          %s227 = int_to_ptr.hbm [resolvable:$true] %s226
          %s228 = sshll.u32 %s219, 4
          %s229 = int_to_ptr.vmem [resolvable:$true] %s228
          %231 = dma.hbm_to_vmem [thread:$0]  %s227, 1024, %s229, %s216
        $region36: #{tpu_custom_call.1} parent=31 // pred_fallthru
          _
      $region32: #{tpu_custom_call.1} parent=5 // pred_fallthru
        _
      %p232 = scmp.le.s32.totalorder 1, %s20
      %p233 = scmp.lt.s32.totalorder %s20, 3
      %p234 = pnand %p232, %p233
      %p235 = pneg %p234
      // Predicated region
      $region37: #{tpu_custom_call.1} parent=5 // pred_check
        _
      $region38: #{tpu_custom_call.1} parent=5 // pred_check_branch
        %237 = sbr.rel (%p234) target = $region40
      $region39: #{tpu_custom_call.1} parent=5 // pred_region
        %s238 = ssub.s32 %s20, 1
        %s239 = sand.u32 %s33, 1
        %s240 = scalar_lea.sflag [#allocation3], %s239
        %s241 = sand.u32 %s33, 1
        %s242 = smul.addr %s241, 64
        %s243 = scalar_lea.vmem [#allocation2], %s242
        // Predicated region
        $region41: #{tpu_custom_call.1} parent=39 // pred_check
          %p244 = pneg %p46
        $region42: #{tpu_custom_call.1} parent=39 // pred_check_branch
          %246 = sbr.rel (%p244) target = $region44
        $region43: #{tpu_custom_call.1} parent=39 // pred_region
          %248 = dma.done %s240, 1024
        $region44: #{tpu_custom_call.1} parent=39 // pred_fallthru
          _
        // Predicated region
        $region45: #{tpu_custom_call.1} parent=39 // pred_check
          %p249 = pneg %p67
        $region46: #{tpu_custom_call.1} parent=39 // pred_check_branch
          %251 = sbr.rel (%p249) target = $region48
        $region47: #{tpu_custom_call.1} parent=39 // pred_region
          %253 = dma.done [#allocation8], 8000
        $region48: #{tpu_custom_call.1} parent=39 // pred_fallthru
          _
        // Predicated region
        $region49: #{tpu_custom_call.1} parent=39 // pred_check
          %p254 = pneg %p88
        $region50: #{tpu_custom_call.1} parent=39 // pred_check_branch
          %256 = sbr.rel (%p254) target = $region52
        $region51: #{tpu_custom_call.1} parent=39 // pred_region
          %258 = dma.done [#allocation5], 128
        $region52: #{tpu_custom_call.1} parent=39 // pred_fallthru
          _
        // Predicated region
        $region53: #{tpu_custom_call.1} parent=39 // pred_check
          %p259 = pneg %p109
        $region54: #{tpu_custom_call.1} parent=39 // pred_check_branch
          %261 = sbr.rel (%p259) target = $region56
        $region55: #{tpu_custom_call.1} parent=39 // pred_region
          %263 = dma.done [#allocation6], 16
        $region56: #{tpu_custom_call.1} parent=39 // pred_fallthru
          _
        %264 = sfence
        %s265 = sand.u32 %s33, 1
        %s266 = scalar_lea.sflag [#allocation3], %s265
        %s267 = sand.u32 %s33, 1
        %s268 = smul.addr %s267, 64
        %s269 = scalar_lea.vmem [#allocation2], %s268
        %p270 = pneg %p46
        %p271 = pneg %p43
        %p272 = pneg %p67
        %p273 = pneg %p64
        %p274 = pneg %p88
        %p275 = pneg %p85
        %p276 = pneg %p109
        %p277 = pneg %p106
        %p278 = pneg %p130
        %p279 = pneg %p127
        %p280 = pneg %p156
        %p281 = pneg %p153
        %s282 = sand.u32 %s143, 1
        %s283 = scalar_lea.sflag [#allocation4], %s282
        %s284 = sand.u32 %s143, 1
        %s285 = smul.addr %s284, 8
        %s286 = scalar_lea.vmem [#allocation11], %s285
        %v288 = vld [vmem:[%s243] sm:$0xff]
        %v289 = vld [vmem:[%s243 + $0x8] sm:$0xff]
        %v290 = vld [vmem:[%s243 + $0x10] sm:$0xff]
        %v291 = vld [vmem:[%s243 + $0x18] sm:$0xff]
        %v292 = vld [vmem:[%s243 + $0x20] sm:$0xff]
        %v293 = vld [vmem:[%s243 + $0x28] sm:$0xff]
        %v294 = vld [vmem:[%s243 + $0x30] sm:$0xff]
        %v295 = vld [vmem:[%s243 + $0x38] sm:$0xff]
        %v296 = vld [vmem:[#allocation7] sm:$0xf]
        %v297 = vld [vmem:[#allocation7 + $0x4] sm:$0xf]
        %v298 = vld [vmem:[#allocation7 + $0x8] sm:$0xf]
        %v299 = vld [vmem:[#allocation7 + $0xc] sm:$0xf]
        %v300 = vld [vmem:[#allocation7 + $0x10] sm:$0xf]
        %v301 = vld [vmem:[#allocation7 + $0x14] sm:$0xf]
        %v302 = vld [vmem:[#allocation7 + $0x18] sm:$0xf]
        %v303 = vld [vmem:[#allocation7 + $0x1c] sm:$0xf]
        %v304 = vld [vmem:[#allocation7 + $0x20] sm:$0xf]
        %v305 = vld [vmem:[#allocation7 + $0x24] sm:$0xf]
        %v306 = vld [vmem:[#allocation7 + $0x28] sm:$0xf]
        %v307 = vld [vmem:[#allocation7 + $0x2c] sm:$0xf]
        %v308 = vld [vmem:[#allocation7 + $0x30] sm:$0xf]
        %v309 = vld [vmem:[#allocation7 + $0x34] sm:$0xf]
        %v310 = vld [vmem:[#allocation7 + $0x38] sm:$0xf]
        %v311 = vld [vmem:[#allocation7 + $0x3c] sm:$0xf]
        %v312 = vld [vmem:[#allocation7 + $0x40] sm:$0xf]
        %v313 = vld [vmem:[#allocation7 + $0x44] sm:$0xf]
        %v314 = vld [vmem:[#allocation7 + $0x48] sm:$0xf]
        %v315 = vld [vmem:[#allocation7 + $0x4c] sm:$0xf]
        %v316 = vld [vmem:[#allocation7 + $0x50] sm:$0xf]
        %v317 = vld [vmem:[#allocation7 + $0x54] sm:$0xf]
        %v318 = vld [vmem:[#allocation7 + $0x58] sm:$0xf]
        %v319 = vld [vmem:[#allocation7 + $0x5c] sm:$0xf]
        %v320 = vld [vmem:[#allocation7 + $0x60] sm:$0xf]
        %v321 = vld [vmem:[#allocation7 + $0x64] sm:$0xf]
        %v322 = vld [vmem:[#allocation7 + $0x68] sm:$0xf]
        %v323 = vld [vmem:[#allocation7 + $0x6c] sm:$0xf]
        %v324 = vld [vmem:[#allocation7 + $0x70] sm:$0xf]
        %v325 = vld [vmem:[#allocation7 + $0x74] sm:$0xf]
        %v326 = vld [vmem:[#allocation7 + $0x78] sm:$0xf]
        %v327 = vld [vmem:[#allocation7 + $0x7c] sm:$0xf]
        %v328 = vld [vmem:[#allocation7 + $0x80] sm:$0xf]
        %v329 = vld [vmem:[#allocation7 + $0x84] sm:$0xf]
        %v330 = vld [vmem:[#allocation7 + $0x88] sm:$0xf]
        %v331 = vld [vmem:[#allocation7 + $0x8c] sm:$0xf]
        %v332 = vld [vmem:[#allocation7 + $0x90] sm:$0xf]
        %v333 = vld [vmem:[#allocation7 + $0x94] sm:$0xf]
        %v334 = vld [vmem:[#allocation7 + $0x98] sm:$0xf]
        %v335 = vld [vmem:[#allocation7 + $0x9c] sm:$0xf]
        %v336 = vld [vmem:[#allocation7 + $0xa0] sm:$0xf]
        %v337 = vld [vmem:[#allocation7 + $0xa4] sm:$0xf]
        %v338 = vld [vmem:[#allocation7 + $0xa8] sm:$0xf]
        %v339 = vld [vmem:[#allocation7 + $0xac] sm:$0xf]
        %v340 = vld [vmem:[#allocation7 + $0xb0] sm:$0xf]
        %v341 = vld [vmem:[#allocation7 + $0xb4] sm:$0xf]
        %v342 = vld [vmem:[#allocation7 + $0xb8] sm:$0xf]
        %v343 = vld [vmem:[#allocation7 + $0xbc] sm:$0xf]
        %v344 = vld [vmem:[#allocation7 + $0xc0] sm:$0xf]
        %v345 = vld [vmem:[#allocation7 + $0xc4] sm:$0xf]
        %v346 = vld [vmem:[#allocation7 + $0xc8] sm:$0xf]
        %v347 = vld [vmem:[#allocation7 + $0xcc] sm:$0xf]
        %v348 = vld [vmem:[#allocation7 + $0xd0] sm:$0xf]
        %v349 = vld [vmem:[#allocation7 + $0xd4] sm:$0xf]
        %v350 = vld [vmem:[#allocation7 + $0xd8] sm:$0xf]
        %v351 = vld [vmem:[#allocation7 + $0xdc] sm:$0xf]
        %v352 = vld [vmem:[#allocation7 + $0xe0] sm:$0xf]
        %v353 = vld [vmem:[#allocation7 + $0xe4] sm:$0xf]
        %v354 = vld [vmem:[#allocation7 + $0xe8] sm:$0xf]
        %v355 = vld [vmem:[#allocation7 + $0xec] sm:$0xf]
        %v356 = vld [vmem:[#allocation7 + $0xf0] sm:$0xf]
        %v357 = vld [vmem:[#allocation7 + $0xf4] sm:$0xf]
        %v358 = vld [vmem:[#allocation7 + $0xf8] sm:$0xf]
        %v359 = vld [vmem:[#allocation7 + $0xfc] sm:$0xf]
        %v360 = vld [vmem:[#allocation7 + $0x100] sm:$0xf]
        %v361 = vld [vmem:[#allocation7 + $0x104] sm:$0xf]
        %v362 = vld [vmem:[#allocation7 + $0x108] sm:$0xf]
        %v363 = vld [vmem:[#allocation7 + $0x10c] sm:$0xf]
        %v364 = vld [vmem:[#allocation7 + $0x110] sm:$0xf]
        %v365 = vld [vmem:[#allocation7 + $0x114] sm:$0xf]
        %v366 = vld [vmem:[#allocation7 + $0x118] sm:$0xf]
        %v367 = vld [vmem:[#allocation7 + $0x11c] sm:$0xf]
        %v368 = vld [vmem:[#allocation7 + $0x120] sm:$0xf]
        %v369 = vld [vmem:[#allocation7 + $0x124] sm:$0xf]
        %v370 = vld [vmem:[#allocation7 + $0x128] sm:$0xf]
        %v371 = vld [vmem:[#allocation7 + $0x12c] sm:$0xf]
        %v372 = vld [vmem:[#allocation7 + $0x130] sm:$0xf]
        %v373 = vld [vmem:[#allocation7 + $0x134] sm:$0xf]
        %v374 = vld [vmem:[#allocation7 + $0x138] sm:$0xf]
        %v375 = vld [vmem:[#allocation7 + $0x13c] sm:$0xf]
        %v376 = vld [vmem:[#allocation7 + $0x140] sm:$0xf]
        %v377 = vld [vmem:[#allocation7 + $0x144] sm:$0xf]
        %v378 = vld [vmem:[#allocation7 + $0x148] sm:$0xf]
        %v379 = vld [vmem:[#allocation7 + $0x14c] sm:$0xf]
        %v380 = vld [vmem:[#allocation7 + $0x150] sm:$0xf]
        %v381 = vld [vmem:[#allocation7 + $0x154] sm:$0xf]
        %v382 = vld [vmem:[#allocation7 + $0x158] sm:$0xf]
        %v383 = vld [vmem:[#allocation7 + $0x15c] sm:$0xf]
        %v384 = vld [vmem:[#allocation7 + $0x160] sm:$0xf]
        %v385 = vld [vmem:[#allocation7 + $0x164] sm:$0xf]
        %v386 = vld [vmem:[#allocation7 + $0x168] sm:$0xf]
        %v387 = vld [vmem:[#allocation7 + $0x16c] sm:$0xf]
        %v388 = vld [vmem:[#allocation7 + $0x170] sm:$0xf]
        %v389 = vld [vmem:[#allocation7 + $0x174] sm:$0xf]
        %v390 = vld [vmem:[#allocation7 + $0x178] sm:$0xf]
        %v391 = vld [vmem:[#allocation7 + $0x17c] sm:$0xf]
        %v392 = vld [vmem:[#allocation7 + $0x180] sm:$0xf]
        %v393 = vld [vmem:[#allocation7 + $0x184] sm:$0xf]
        %v394 = vld [vmem:[#allocation7 + $0x188] sm:$0xf]
        %v395 = vld [vmem:[#allocation7 + $0x18c] sm:$0xf]
        %v396 = vld [vmem:[#allocation7 + $0x190] sm:$0xf]
        %v397 = vld [vmem:[#allocation7 + $0x194] sm:$0xf]
        %v398 = vld [vmem:[#allocation7 + $0x198] sm:$0xf]
        %v399 = vld [vmem:[#allocation7 + $0x19c] sm:$0xf]
        %v400 = vld [vmem:[#allocation7 + $0x1a0] sm:$0xf]
        %v401 = vld [vmem:[#allocation7 + $0x1a4] sm:$0xf]
        %v402 = vld [vmem:[#allocation7 + $0x1a8] sm:$0xf]
        %v403 = vld [vmem:[#allocation7 + $0x1ac] sm:$0xf]
        %v404 = vld [vmem:[#allocation7 + $0x1b0] sm:$0xf]
        %v405 = vld [vmem:[#allocation7 + $0x1b4] sm:$0xf]
        %v406 = vld [vmem:[#allocation7 + $0x1b8] sm:$0xf]
        %v407 = vld [vmem:[#allocation7 + $0x1bc] sm:$0xf]
        %v408 = vld [vmem:[#allocation7 + $0x1c0] sm:$0xf]
        %v409 = vld [vmem:[#allocation7 + $0x1c4] sm:$0xf]
        %v410 = vld [vmem:[#allocation7 + $0x1c8] sm:$0xf]
        %v411 = vld [vmem:[#allocation7 + $0x1cc] sm:$0xf]
        %v412 = vld [vmem:[#allocation7 + $0x1d0] sm:$0xf]
        %v413 = vld [vmem:[#allocation7 + $0x1d4] sm:$0xf]
        %v414 = vld [vmem:[#allocation7 + $0x1d8] sm:$0xf]
        %v415 = vld [vmem:[#allocation7 + $0x1dc] sm:$0xf]
        %v416 = vld [vmem:[#allocation7 + $0x1e0] sm:$0xf]
        %v417 = vld [vmem:[#allocation7 + $0x1e4] sm:$0xf]
        %v418 = vld [vmem:[#allocation7 + $0x1e8] sm:$0xf]
        %v419 = vld [vmem:[#allocation7 + $0x1ec] sm:$0xf]
        %v420 = vld [vmem:[#allocation7 + $0x1f0] sm:$0xf]
        %v421 = vld [vmem:[%s4] sm:$0x1]
        %v423 = vperm.slane %v421, 0
        %s425 = sld [smem:[#allocation9]]
        %v426 = vstv %s425
        %v427 = vmul.f32 %v288, %v426
        %v428 = vmul.f32 %v289, %v426
        %v429 = vmul.f32 %v290, %v426
        %v430 = vmul.f32 %v291, %v426
        %v431 = vmul.f32 %v292, %v426
        %v432 = vmul.f32 %v293, %v426
        %v433 = vmul.f32 %v294, %v426
        %v434 = vmul.f32 %v295, %v426
        %s435 = sld [smem:[#allocation9 + $0x1]]
        %v436 = vstv %s435
        %v437 = vmul.f32 %v288, %v436
        %v438 = vmul.f32 %v289, %v436
        %v439 = vmul.f32 %v290, %v436
        %v440 = vmul.f32 %v291, %v436
        %v441 = vmul.f32 %v292, %v436
        %v442 = vmul.f32 %v293, %v436
        %v443 = vmul.f32 %v294, %v436
        %v444 = vmul.f32 %v295, %v436
        %453 = vrot.lane.b32.xlu0 %v437, 127
        %v454 = vpop.permute.xlu0 %453
        %455 = vrot.lane.b32.xlu0 %v438, 127
        %v456 = vpop.permute.xlu0 %455
        %457 = vrot.lane.b32.xlu0 %v439, 127
        %v458 = vpop.permute.xlu0 %457
        %459 = vrot.lane.b32.xlu0 %v440, 127
        %v460 = vpop.permute.xlu0 %459
        %461 = vrot.lane.b32.xlu0 %v441, 127
        %v462 = vpop.permute.xlu0 %461
        %463 = vrot.lane.b32.xlu0 %v442, 127
        %v464 = vpop.permute.xlu0 %463
        %465 = vrot.lane.b32.xlu0 %v443, 127
        %v466 = vpop.permute.xlu0 %465
        %467 = vrot.lane.b32.xlu0 %v444, 127
        %v468 = vpop.permute.xlu0 %467
        %vm469 = vcmask 1039360
        %v470 = vsel %vm469, %v454, %v456
        %v471 = vsel %vm469, %v456, %v458
        %v472 = vsel %vm469, %v458, %v460
        %v473 = vsel %vm469, %v460, %v462
        %v474 = vsel %vm469, %v462, %v464
        %v475 = vsel %vm469, %v464, %v466
        %v476 = vsel %vm469, %v466, %v468
        %v485 = vadd.f32 %v427, %v470
        %v486 = vadd.f32 %v428, %v471
        %v487 = vadd.f32 %v429, %v472
        %v488 = vadd.f32 %v430, %v473
        %v489 = vadd.f32 %v431, %v474
        %v490 = vadd.f32 %v432, %v475
        %v491 = vadd.f32 %v433, %v476
        %v492 = vadd.f32 %v434, %v468
        %s493 = sld [smem:[#allocation9 + $0x2]]
        %v494 = vstv %s493
        %v495 = vmul.f32 %v288, %v494
        %v496 = vmul.f32 %v289, %v494
        %v497 = vmul.f32 %v290, %v494
        %v498 = vmul.f32 %v291, %v494
        %v499 = vmul.f32 %v292, %v494
        %v500 = vmul.f32 %v293, %v494
        %v501 = vmul.f32 %v294, %v494
        %v502 = vmul.f32 %v295, %v494
        %511 = vrot.lane.b32.xlu0 %v495, 126
        %v512 = vpop.permute.xlu0 %511
        %513 = vrot.lane.b32.xlu0 %v496, 126
        %v514 = vpop.permute.xlu0 %513
        %515 = vrot.lane.b32.xlu0 %v497, 126
        %v516 = vpop.permute.xlu0 %515
        %517 = vrot.lane.b32.xlu0 %v498, 126
        %v518 = vpop.permute.xlu0 %517
        %519 = vrot.lane.b32.xlu0 %v499, 126
        %v520 = vpop.permute.xlu0 %519
        %521 = vrot.lane.b32.xlu0 %v500, 126
        %v522 = vpop.permute.xlu0 %521
        %523 = vrot.lane.b32.xlu0 %v501, 126
        %v524 = vpop.permute.xlu0 %523
        %525 = vrot.lane.b32.xlu0 %v502, 126
        %v526 = vpop.permute.xlu0 %525
        %vm527 = vcmask 1031168
        %v528 = vsel %vm527, %v512, %v514
        %v529 = vsel %vm527, %v514, %v516
        %v530 = vsel %vm527, %v516, %v518
        %v531 = vsel %vm527, %v518, %v520
        %v532 = vsel %vm527, %v520, %v522
        %v533 = vsel %vm527, %v522, %v524
        %v534 = vsel %vm527, %v524, %v526
        %v543 = vadd.f32 %v485, %v528
        %v544 = vadd.f32 %v486, %v529
        %v545 = vadd.f32 %v487, %v530
        %v546 = vadd.f32 %v488, %v531
        %v547 = vadd.f32 %v489, %v532
        %v548 = vadd.f32 %v490, %v533
        %v549 = vadd.f32 %v491, %v534
        %v550 = vadd.f32 %v492, %v526
        %s551 = sld [smem:[#allocation9 + $0x3]]
        %v552 = vstv %s551
        %v553 = vmul.f32 %v288, %v552
        %v554 = vmul.f32 %v289, %v552
        %v555 = vmul.f32 %v290, %v552
        %v556 = vmul.f32 %v291, %v552
        %v557 = vmul.f32 %v292, %v552
        %v558 = vmul.f32 %v293, %v552
        %v559 = vmul.f32 %v294, %v552
        %v560 = vmul.f32 %v295, %v552
        %569 = vrot.lane.b32.xlu0 %v553, 125
        %v570 = vpop.permute.xlu0 %569
        %571 = vrot.lane.b32.xlu0 %v554, 125
        %v572 = vpop.permute.xlu0 %571
        %573 = vrot.lane.b32.xlu0 %v555, 125
        %v574 = vpop.permute.xlu0 %573
        %575 = vrot.lane.b32.xlu0 %v556, 125
        %v576 = vpop.permute.xlu0 %575
        %577 = vrot.lane.b32.xlu0 %v557, 125
        %v578 = vpop.permute.xlu0 %577
        %579 = vrot.lane.b32.xlu0 %v558, 125
        %v580 = vpop.permute.xlu0 %579
        %581 = vrot.lane.b32.xlu0 %v559, 125
        %v582 = vpop.permute.xlu0 %581
        %583 = vrot.lane.b32.xlu0 %v560, 125
        %v584 = vpop.permute.xlu0 %583
        %vm585 = vcmask 1022976
        %v586 = vsel %vm585, %v570, %v572
        %v587 = vsel %vm585, %v572, %v574
        %v588 = vsel %vm585, %v574, %v576
        %v589 = vsel %vm585, %v576, %v578
        %v590 = vsel %vm585, %v578, %v580
        %v591 = vsel %vm585, %v580, %v582
        %v592 = vsel %vm585, %v582, %v584
        %v601 = vadd.f32 %v543, %v586
        %v602 = vadd.f32 %v544, %v587
        %v603 = vadd.f32 %v545, %v588
        %v604 = vadd.f32 %v546, %v589
        %v605 = vadd.f32 %v547, %v590
        %v606 = vadd.f32 %v548, %v591
        %v607 = vadd.f32 %v549, %v592
        %v608 = vadd.f32 %v550, %v584
        %s609 = sld [smem:[#allocation9 + $0x4]]
        %v610 = vstv %s609
        %v611 = vmul.f32 %v288, %v610
        %v612 = vmul.f32 %v289, %v610
        %v613 = vmul.f32 %v290, %v610
        %v614 = vmul.f32 %v291, %v610
        %v615 = vmul.f32 %v292, %v610
        %v616 = vmul.f32 %v293, %v610
        %v617 = vmul.f32 %v294, %v610
        %v618 = vmul.f32 %v295, %v610
        %627 = vrot.lane.b32.xlu0 %v611, 124
        %v628 = vpop.permute.xlu0 %627
        %629 = vrot.lane.b32.xlu0 %v612, 124
        %v630 = vpop.permute.xlu0 %629
        %631 = vrot.lane.b32.xlu0 %v613, 124
        %v632 = vpop.permute.xlu0 %631
        %633 = vrot.lane.b32.xlu0 %v614, 124
        %v634 = vpop.permute.xlu0 %633
        %635 = vrot.lane.b32.xlu0 %v615, 124
        %v636 = vpop.permute.xlu0 %635
        %637 = vrot.lane.b32.xlu0 %v616, 124
        %v638 = vpop.permute.xlu0 %637
        %639 = vrot.lane.b32.xlu0 %v617, 124
        %v640 = vpop.permute.xlu0 %639
        %641 = vrot.lane.b32.xlu0 %v618, 124
        %v642 = vpop.permute.xlu0 %641
        %vm643 = vcmask 1014784
        %v644 = vsel %vm643, %v628, %v630
        %v645 = vsel %vm643, %v630, %v632
        %v646 = vsel %vm643, %v632, %v634
        %v647 = vsel %vm643, %v634, %v636
        %v648 = vsel %vm643, %v636, %v638
        %v649 = vsel %vm643, %v638, %v640
        %v650 = vsel %vm643, %v640, %v642
        %v659 = vadd.f32 %v601, %v644
        %v660 = vadd.f32 %v602, %v645
        %v661 = vadd.f32 %v603, %v646
        %v662 = vadd.f32 %v604, %v647
        %v663 = vadd.f32 %v605, %v648
        %v664 = vadd.f32 %v606, %v649
        %v665 = vadd.f32 %v607, %v650
        %v666 = vadd.f32 %v608, %v642
        %s667 = sld [smem:[#allocation10]]
        %v668 = vstv %s667
        %v669 = vadd.f32 %v659, %v668
        %v670 = vadd.f32 %v660, %v668
        %v671 = vadd.f32 %v661, %v668
        %v672 = vadd.f32 %v662, %v668
        %v673 = vadd.f32 %v663, %v668
        %v674 = vadd.f32 %v664, %v668
        %v675 = vadd.f32 %v665, %v668
        %v676 = vadd.f32 %v666, %v668
        %v677 = vmax.f32 %v669, 0.0
        %v678 = vmax.f32 %v670, 0.0
        %v679 = vmax.f32 %v671, 0.0
        %v680 = vmax.f32 %v672, 0.0
        %v681 = vmax.f32 %v673, 0.0
        %v682 = vmax.f32 %v674, 0.0
        %v683 = vmax.f32 %v675, 0.0
        %v684 = vmax.f32 %v676, 0.0
        %v685 = vpack.c.bf16 %v677, %v677
        %v686 = vpack.c.bf16 %v678, %v678
        %v687 = vpack.c.bf16 %v679, %v679
        %v688 = vpack.c.bf16 %v680, %v680
        %v689 = vpack.c.bf16 %v681, %v681
        %v690 = vpack.c.bf16 %v682, %v682
        %v691 = vpack.c.bf16 %v683, %v683
        %v692 = vpack.c.bf16 %v684, %v684
        %v818 = vunpack.c.l.b16 %v296
        %v819 = vunpack.c.l.b16 %v297
        %v820 = vunpack.c.l.b16 %v298
        %v821 = vunpack.c.l.b16 %v299
        %v822 = vunpack.c.l.b16 %v300
        %v823 = vunpack.c.l.b16 %v301
        %v824 = vunpack.c.l.b16 %v302
        %v825 = vunpack.c.l.b16 %v303
        %v826 = vunpack.c.l.b16 %v304
        %v827 = vunpack.c.l.b16 %v305
        %v828 = vunpack.c.l.b16 %v306
        %v829 = vunpack.c.l.b16 %v307
        %v830 = vunpack.c.l.b16 %v308
        %v831 = vunpack.c.l.b16 %v309
        %v832 = vunpack.c.l.b16 %v310
        %v833 = vunpack.c.l.b16 %v311
        %v834 = vunpack.c.l.b16 %v312
        %v835 = vunpack.c.l.b16 %v313
        %v836 = vunpack.c.l.b16 %v314
        %v837 = vunpack.c.l.b16 %v315
        %v838 = vunpack.c.l.b16 %v316
        %v839 = vunpack.c.l.b16 %v317
        %v840 = vunpack.c.l.b16 %v318
        %v841 = vunpack.c.l.b16 %v319
        %v842 = vunpack.c.l.b16 %v320
        %v843 = vunpack.c.l.b16 %v321
        %v844 = vunpack.c.l.b16 %v322
        %v845 = vunpack.c.l.b16 %v323
        %v846 = vunpack.c.l.b16 %v324
        %v847 = vunpack.c.l.b16 %v325
        %v848 = vunpack.c.l.b16 %v326
        %v849 = vunpack.c.l.b16 %v327
        %v850 = vunpack.c.l.b16 %v328
        %v851 = vunpack.c.l.b16 %v329
        %v852 = vunpack.c.l.b16 %v330
        %v853 = vunpack.c.l.b16 %v331
        %v854 = vunpack.c.l.b16 %v332
        %v855 = vunpack.c.l.b16 %v333
        %v856 = vunpack.c.l.b16 %v334
        %v857 = vunpack.c.l.b16 %v335
        %v858 = vunpack.c.l.b16 %v336
        %v859 = vunpack.c.l.b16 %v337
        %v860 = vunpack.c.l.b16 %v338
        %v861 = vunpack.c.l.b16 %v339
        %v862 = vunpack.c.l.b16 %v340
        %v863 = vunpack.c.l.b16 %v341
        %v864 = vunpack.c.l.b16 %v342
        %v865 = vunpack.c.l.b16 %v343
        %v866 = vunpack.c.l.b16 %v344
        %v867 = vunpack.c.l.b16 %v345
        %v868 = vunpack.c.l.b16 %v346
        %v869 = vunpack.c.l.b16 %v347
        %v870 = vunpack.c.l.b16 %v348
        %v871 = vunpack.c.l.b16 %v349
        %v872 = vunpack.c.l.b16 %v350
        %v873 = vunpack.c.l.b16 %v351
        %v874 = vunpack.c.l.b16 %v352
        %v875 = vunpack.c.l.b16 %v353
        %v876 = vunpack.c.l.b16 %v354
        %v877 = vunpack.c.l.b16 %v355
        %v878 = vunpack.c.l.b16 %v356
        %v879 = vunpack.c.l.b16 %v357
        %v880 = vunpack.c.l.b16 %v358
        %v881 = vunpack.c.l.b16 %v359
        %v882 = vunpack.c.l.b16 %v360
        %v883 = vunpack.c.l.b16 %v361
        %v884 = vunpack.c.l.b16 %v362
        %v885 = vunpack.c.l.b16 %v363
        %v886 = vunpack.c.l.b16 %v364
        %v887 = vunpack.c.l.b16 %v365
        %v888 = vunpack.c.l.b16 %v366
        %v889 = vunpack.c.l.b16 %v367
        %v890 = vunpack.c.l.b16 %v368
        %v891 = vunpack.c.l.b16 %v369
        %v892 = vunpack.c.l.b16 %v370
        %v893 = vunpack.c.l.b16 %v371
        %v894 = vunpack.c.l.b16 %v372
        %v895 = vunpack.c.l.b16 %v373
        %v896 = vunpack.c.l.b16 %v374
        %v897 = vunpack.c.l.b16 %v375
        %v898 = vunpack.c.l.b16 %v376
        %v899 = vunpack.c.l.b16 %v377
        %v900 = vunpack.c.l.b16 %v378
        %v901 = vunpack.c.l.b16 %v379
        %v902 = vunpack.c.l.b16 %v380
        %v903 = vunpack.c.l.b16 %v381
        %v904 = vunpack.c.l.b16 %v382
        %v905 = vunpack.c.l.b16 %v383
        %v906 = vunpack.c.l.b16 %v384
        %v907 = vunpack.c.l.b16 %v385
        %v908 = vunpack.c.l.b16 %v386
        %v909 = vunpack.c.l.b16 %v387
        %v910 = vunpack.c.l.b16 %v388
        %v911 = vunpack.c.l.b16 %v389
        %v912 = vunpack.c.l.b16 %v390
        %v913 = vunpack.c.l.b16 %v391
        %v914 = vunpack.c.l.b16 %v392
        %v915 = vunpack.c.l.b16 %v393
        %v916 = vunpack.c.l.b16 %v394
        %v917 = vunpack.c.l.b16 %v395
        %v918 = vunpack.c.l.b16 %v396
        %v919 = vunpack.c.l.b16 %v397
        %v920 = vunpack.c.l.b16 %v398
        %v921 = vunpack.c.l.b16 %v399
        %v922 = vunpack.c.l.b16 %v400
        %v923 = vunpack.c.l.b16 %v401
        %v924 = vunpack.c.l.b16 %v402
        %v925 = vunpack.c.l.b16 %v403
        %v926 = vunpack.c.l.b16 %v404
        %v927 = vunpack.c.l.b16 %v405
        %v928 = vunpack.c.l.b16 %v406
        %v929 = vunpack.c.l.b16 %v407
        %v930 = vunpack.c.l.b16 %v408
        %v931 = vunpack.c.l.b16 %v409
        %v932 = vunpack.c.l.b16 %v410
        %v933 = vunpack.c.l.b16 %v411
        %v934 = vunpack.c.l.b16 %v412
        %v935 = vunpack.c.l.b16 %v413
        %v936 = vunpack.c.l.b16 %v414
        %v937 = vunpack.c.l.b16 %v415
        %v938 = vunpack.c.l.b16 %v416
        %v939 = vunpack.c.l.b16 %v417
        %v940 = vunpack.c.l.b16 %v418
        %v941 = vunpack.c.l.b16 %v419
        %v942 = vunpack.c.l.b16 %v420
        %v943 = vpack.c.b16 %v819, %v818
        %v944 = vpack.c.b16 %v821, %v820
        %v945 = vpack.c.b16 %v823, %v822
        %v946 = vpack.c.b16 %v825, %v824
        %v947 = vpack.c.b16 %v827, %v826
        %v948 = vpack.c.b16 %v829, %v828
        %v949 = vpack.c.b16 %v831, %v830
        %v950 = vpack.c.b16 %v833, %v832
        %v951 = vpack.c.b16 %v835, %v834
        %v952 = vpack.c.b16 %v837, %v836
        %v953 = vpack.c.b16 %v839, %v838
        %v954 = vpack.c.b16 %v841, %v840
        %v955 = vpack.c.b16 %v843, %v842
        %v956 = vpack.c.b16 %v845, %v844
        %v957 = vpack.c.b16 %v847, %v846
        %v958 = vpack.c.b16 %v849, %v848
        %v959 = vpack.c.b16 %v851, %v850
        %v960 = vpack.c.b16 %v853, %v852
        %v961 = vpack.c.b16 %v855, %v854
        %v962 = vpack.c.b16 %v857, %v856
        %v963 = vpack.c.b16 %v859, %v858
        %v964 = vpack.c.b16 %v861, %v860
        %v965 = vpack.c.b16 %v863, %v862
        %v966 = vpack.c.b16 %v865, %v864
        %v967 = vpack.c.b16 %v867, %v866
        %v968 = vpack.c.b16 %v869, %v868
        %v969 = vpack.c.b16 %v871, %v870
        %v970 = vpack.c.b16 %v873, %v872
        %v971 = vpack.c.b16 %v875, %v874
        %v972 = vpack.c.b16 %v877, %v876
        %v973 = vpack.c.b16 %v879, %v878
        %v974 = vpack.c.b16 %v881, %v880
        %v975 = vpack.c.b16 %v883, %v882
        %v976 = vpack.c.b16 %v885, %v884
        %v977 = vpack.c.b16 %v887, %v886
        %v978 = vpack.c.b16 %v889, %v888
        %v979 = vpack.c.b16 %v891, %v890
        %v980 = vpack.c.b16 %v893, %v892
        %v981 = vpack.c.b16 %v895, %v894
        %v982 = vpack.c.b16 %v897, %v896
        %v983 = vpack.c.b16 %v899, %v898
        %v984 = vpack.c.b16 %v901, %v900
        %v985 = vpack.c.b16 %v903, %v902
        %v986 = vpack.c.b16 %v905, %v904
        %v987 = vpack.c.b16 %v907, %v906
        %v988 = vpack.c.b16 %v909, %v908
        %v989 = vpack.c.b16 %v911, %v910
        %v990 = vpack.c.b16 %v913, %v912
        %v991 = vpack.c.b16 %v915, %v914
        %v992 = vpack.c.b16 %v917, %v916
        %v993 = vpack.c.b16 %v919, %v918
        %v994 = vpack.c.b16 %v921, %v920
        %v995 = vpack.c.b16 %v923, %v922
        %v996 = vpack.c.b16 %v925, %v924
        %v997 = vpack.c.b16 %v927, %v926
        %v998 = vpack.c.b16 %v929, %v928
        %v999 = vpack.c.b16 %v931, %v930
        %v1000 = vpack.c.b16 %v933, %v932
        %v1001 = vpack.c.b16 %v935, %v934
        %v1002 = vpack.c.b16 %v937, %v936
        %v1003 = vpack.c.b16 %v939, %v938
        %v1004 = vpack.c.b16 %v941, %v940
        %v1005 = vpack.c.b16 %v942, %v942
        %vm1068 = vcmask 850944
        %v1070 = vsel %vm1068, %v692, 0
        %vm1072 = vcmask 1043456
        %v1074 = vsel %vm1072, %v1005, 0
        %1076 = vmatpush.bf16.msra.mxu0 %v950
        %1077 = vmatpush.bf16.msra.mxu0 %v949
        %1078 = vmatpush.bf16.msra.mxu0 %v948
        %1079 = vmatpush.bf16.msra.mxu0 %v947
        %1080 = vmatpush.bf16.msra.mxu0 %v946
        %1081 = vmatpush.bf16.msra.mxu0 %v945
        %1082 = vmatpush.bf16.msra.mxu0 %v944
        %1083 = vmatpush.bf16.msra.mxu0 %v943
        %1084 = vmatmul.bf16.gmra.mxu0 %v685
        %v1085 = vpop.f32.mrf.mxu0
        %v1086 = vadd.f32 0.0, %v1085
        %v1087 = vpop.f32.mrf.mxu0
        %1088 = vdwg.mxu0
        %1089 = vmatpush.bf16.msra.mxu0 %v958
        %1090 = vmatpush.bf16.msra.mxu0 %v957
        %1091 = vmatpush.bf16.msra.mxu0 %v956
        %1092 = vmatpush.bf16.msra.mxu0 %v955
        %1093 = vmatpush.bf16.msra.mxu0 %v954
        %1094 = vmatpush.bf16.msra.mxu0 %v953
        %1095 = vmatpush.bf16.msra.mxu0 %v952
        %1096 = vmatpush.bf16.msra.mxu0 %v951
        %1097 = vmatmul.bf16.gmra.mxu0 %v686
        %v1098 = vpop.f32.mrf.mxu0
        %v1099 = vadd.f32 %v1086, %v1098
        %v1100 = vpop.f32.mrf.mxu0
        %1101 = vdwg.mxu0
        %1102 = vmatpush.bf16.msra.mxu0 %v966
        %1103 = vmatpush.bf16.msra.mxu0 %v965
        %1104 = vmatpush.bf16.msra.mxu0 %v964
        %1105 = vmatpush.bf16.msra.mxu0 %v963
        %1106 = vmatpush.bf16.msra.mxu0 %v962
        %1107 = vmatpush.bf16.msra.mxu0 %v961
        %1108 = vmatpush.bf16.msra.mxu0 %v960
        %1109 = vmatpush.bf16.msra.mxu0 %v959
        %1110 = vmatmul.bf16.gmra.mxu0 %v687
        %v1111 = vpop.f32.mrf.mxu0
        %v1112 = vadd.f32 %v1099, %v1111
        %v1113 = vpop.f32.mrf.mxu0
        %1114 = vdwg.mxu0
        %1115 = vmatpush.bf16.msra.mxu0 %v974
        %1116 = vmatpush.bf16.msra.mxu0 %v973
        %1117 = vmatpush.bf16.msra.mxu0 %v972
        %1118 = vmatpush.bf16.msra.mxu0 %v971
        %1119 = vmatpush.bf16.msra.mxu0 %v970
        %1120 = vmatpush.bf16.msra.mxu0 %v969
        %1121 = vmatpush.bf16.msra.mxu0 %v968
        %1122 = vmatpush.bf16.msra.mxu0 %v967
        %1123 = vmatmul.bf16.gmra.mxu0 %v688
        %v1124 = vpop.f32.mrf.mxu0
        %v1125 = vadd.f32 %v1112, %v1124
        %v1126 = vpop.f32.mrf.mxu0
        %1127 = vdwg.mxu0
        %1128 = vmatpush.bf16.msra.mxu0 %v982
        %1129 = vmatpush.bf16.msra.mxu0 %v981
        %1130 = vmatpush.bf16.msra.mxu0 %v980
        %1131 = vmatpush.bf16.msra.mxu0 %v979
        %1132 = vmatpush.bf16.msra.mxu0 %v978
        %1133 = vmatpush.bf16.msra.mxu0 %v977
        %1134 = vmatpush.bf16.msra.mxu0 %v976
        %1135 = vmatpush.bf16.msra.mxu0 %v975
        %1136 = vmatmul.bf16.gmra.mxu0 %v689
        %v1137 = vpop.f32.mrf.mxu0
        %v1138 = vadd.f32 %v1125, %v1137
        %v1139 = vpop.f32.mrf.mxu0
        %1140 = vdwg.mxu0
        %1141 = vmatpush.bf16.msra.mxu0 %v990
        %1142 = vmatpush.bf16.msra.mxu0 %v989
        %1143 = vmatpush.bf16.msra.mxu0 %v988
        %1144 = vmatpush.bf16.msra.mxu0 %v987
        %1145 = vmatpush.bf16.msra.mxu0 %v986
        %1146 = vmatpush.bf16.msra.mxu0 %v985
        %1147 = vmatpush.bf16.msra.mxu0 %v984
        %1148 = vmatpush.bf16.msra.mxu0 %v983
        %1149 = vmatmul.bf16.gmra.mxu0 %v690
        %v1150 = vpop.f32.mrf.mxu0
        %v1151 = vadd.f32 %v1138, %v1150
        %v1152 = vpop.f32.mrf.mxu0
        %1153 = vdwg.mxu0
        %1154 = vmatpush.bf16.msra.mxu0 %v998
        %1155 = vmatpush.bf16.msra.mxu0 %v997
        %1156 = vmatpush.bf16.msra.mxu0 %v996
        %1157 = vmatpush.bf16.msra.mxu0 %v995
        %1158 = vmatpush.bf16.msra.mxu0 %v994
        %1159 = vmatpush.bf16.msra.mxu0 %v993
        %1160 = vmatpush.bf16.msra.mxu0 %v992
        %1161 = vmatpush.bf16.msra.mxu0 %v991
        %1162 = vmatmul.bf16.gmra.mxu0 %v691
        %v1163 = vpop.f32.mrf.mxu0
        %v1164 = vadd.f32 %v1151, %v1163
        %v1165 = vpop.f32.mrf.mxu0
        %1166 = vdwg.mxu0
        %1167 = vmatpush.bf16.msra.mxu0 0
        %1168 = vmatpush.bf16.msra.mxu0 %v1074
        %1169 = vmatpush.bf16.msra.mxu0 %v1004
        %1170 = vmatpush.bf16.msra.mxu0 %v1003
        %1171 = vmatpush.bf16.msra.mxu0 %v1002
        %1172 = vmatpush.bf16.msra.mxu0 %v1001
        %1173 = vmatpush.bf16.msra.mxu0 %v1000
        %1174 = vmatpush.bf16.msra.mxu0 %v999
        %1175 = vmatmul.bf16.gmra.mxu0 %v1070
        %v1176 = vpop.f32.mrf.mxu0
        %v1177 = vadd.f32 %v1164, %v1176
        %v1178 = vpop.f32.mrf.mxu0
        %1179 = vdwg.mxu0
        %v1180 = vadd.f32 %v423, %v1177
        %s1181 = sld [smem:[#allocation9 + $0x80]]
        %v1182 = vstv %s1181
        %v1183 = vmul.f32 %v288, %v1182
        %v1184 = vmul.f32 %v289, %v1182
        %v1185 = vmul.f32 %v290, %v1182
        %v1186 = vmul.f32 %v291, %v1182
        %v1187 = vmul.f32 %v292, %v1182
        %v1188 = vmul.f32 %v293, %v1182
        %v1189 = vmul.f32 %v294, %v1182
        %v1190 = vmul.f32 %v295, %v1182
        %s1191 = sld [smem:[#allocation9 + $0x81]]
        %v1192 = vstv %s1191
        %v1193 = vmul.f32 %v288, %v1192
        %v1194 = vmul.f32 %v289, %v1192
        %v1195 = vmul.f32 %v290, %v1192
        %v1196 = vmul.f32 %v291, %v1192
        %v1197 = vmul.f32 %v292, %v1192
        %v1198 = vmul.f32 %v293, %v1192
        %v1199 = vmul.f32 %v294, %v1192
        %v1200 = vmul.f32 %v295, %v1192
        %1209 = vrot.lane.b32.xlu0 %v1193, 127
        %v1210 = vpop.permute.xlu0 %1209
        %1211 = vrot.lane.b32.xlu0 %v1194, 127
        %v1212 = vpop.permute.xlu0 %1211
        %1213 = vrot.lane.b32.xlu0 %v1195, 127
        %v1214 = vpop.permute.xlu0 %1213
        %1215 = vrot.lane.b32.xlu0 %v1196, 127
        %v1216 = vpop.permute.xlu0 %1215
        %1217 = vrot.lane.b32.xlu0 %v1197, 127
        %v1218 = vpop.permute.xlu0 %1217
        %1219 = vrot.lane.b32.xlu0 %v1198, 127
        %v1220 = vpop.permute.xlu0 %1219
        %1221 = vrot.lane.b32.xlu0 %v1199, 127
        %v1222 = vpop.permute.xlu0 %1221
        %1223 = vrot.lane.b32.xlu0 %v1200, 127
        %v1224 = vpop.permute.xlu0 %1223
        %v1225 = vsel %vm469, %v1210, %v1212
        %v1226 = vsel %vm469, %v1212, %v1214
        %v1227 = vsel %vm469, %v1214, %v1216
        %v1228 = vsel %vm469, %v1216, %v1218
        %v1229 = vsel %vm469, %v1218, %v1220
        %v1230 = vsel %vm469, %v1220, %v1222
        %v1231 = vsel %vm469, %v1222, %v1224
        %v1240 = vadd.f32 %v1183, %v1225
        %v1241 = vadd.f32 %v1184, %v1226
        %v1242 = vadd.f32 %v1185, %v1227
        %v1243 = vadd.f32 %v1186, %v1228
        %v1244 = vadd.f32 %v1187, %v1229
        %v1245 = vadd.f32 %v1188, %v1230
        %v1246 = vadd.f32 %v1189, %v1231
        %v1247 = vadd.f32 %v1190, %v1224
        %s1248 = sld [smem:[#allocation9 + $0x82]]
        %v1249 = vstv %s1248
        %v1250 = vmul.f32 %v288, %v1249
        %v1251 = vmul.f32 %v289, %v1249
        %v1252 = vmul.f32 %v290, %v1249
        %v1253 = vmul.f32 %v291, %v1249
        %v1254 = vmul.f32 %v292, %v1249
        %v1255 = vmul.f32 %v293, %v1249
        %v1256 = vmul.f32 %v294, %v1249
        %v1257 = vmul.f32 %v295, %v1249
        %1266 = vrot.lane.b32.xlu0 %v1250, 126
        %v1267 = vpop.permute.xlu0 %1266
        %1268 = vrot.lane.b32.xlu0 %v1251, 126
        %v1269 = vpop.permute.xlu0 %1268
        %1270 = vrot.lane.b32.xlu0 %v1252, 126
        %v1271 = vpop.permute.xlu0 %1270
        %1272 = vrot.lane.b32.xlu0 %v1253, 126
        %v1273 = vpop.permute.xlu0 %1272
        %1274 = vrot.lane.b32.xlu0 %v1254, 126
        %v1275 = vpop.permute.xlu0 %1274
        %1276 = vrot.lane.b32.xlu0 %v1255, 126
        %v1277 = vpop.permute.xlu0 %1276
        %1278 = vrot.lane.b32.xlu0 %v1256, 126
        %v1279 = vpop.permute.xlu0 %1278
        %1280 = vrot.lane.b32.xlu0 %v1257, 126
        %v1281 = vpop.permute.xlu0 %1280
        %v1282 = vsel %vm527, %v1267, %v1269
        %v1283 = vsel %vm527, %v1269, %v1271
        %v1284 = vsel %vm527, %v1271, %v1273
        %v1285 = vsel %vm527, %v1273, %v1275
        %v1286 = vsel %vm527, %v1275, %v1277
        %v1287 = vsel %vm527, %v1277, %v1279
        %v1288 = vsel %vm527, %v1279, %v1281
        %v1297 = vadd.f32 %v1240, %v1282
        %v1298 = vadd.f32 %v1241, %v1283
        %v1299 = vadd.f32 %v1242, %v1284
        %v1300 = vadd.f32 %v1243, %v1285
        %v1301 = vadd.f32 %v1244, %v1286
        %v1302 = vadd.f32 %v1245, %v1287
        %v1303 = vadd.f32 %v1246, %v1288
        %v1304 = vadd.f32 %v1247, %v1281
        %s1305 = sld [smem:[#allocation9 + $0x83]]
        %v1306 = vstv %s1305
        %v1307 = vmul.f32 %v288, %v1306
        %v1308 = vmul.f32 %v289, %v1306
        %v1309 = vmul.f32 %v290, %v1306
        %v1310 = vmul.f32 %v291, %v1306
        %v1311 = vmul.f32 %v292, %v1306
        %v1312 = vmul.f32 %v293, %v1306
        %v1313 = vmul.f32 %v294, %v1306
        %v1314 = vmul.f32 %v295, %v1306
        %1323 = vrot.lane.b32.xlu0 %v1307, 125
        %v1324 = vpop.permute.xlu0 %1323
        %1325 = vrot.lane.b32.xlu0 %v1308, 125
        %v1326 = vpop.permute.xlu0 %1325
        %1327 = vrot.lane.b32.xlu0 %v1309, 125
        %v1328 = vpop.permute.xlu0 %1327
        %1329 = vrot.lane.b32.xlu0 %v1310, 125
        %v1330 = vpop.permute.xlu0 %1329
        %1331 = vrot.lane.b32.xlu0 %v1311, 125
        %v1332 = vpop.permute.xlu0 %1331
        %1333 = vrot.lane.b32.xlu0 %v1312, 125
        %v1334 = vpop.permute.xlu0 %1333
        %1335 = vrot.lane.b32.xlu0 %v1313, 125
        %v1336 = vpop.permute.xlu0 %1335
        %1337 = vrot.lane.b32.xlu0 %v1314, 125
        %v1338 = vpop.permute.xlu0 %1337
        %v1339 = vsel %vm585, %v1324, %v1326
        %v1340 = vsel %vm585, %v1326, %v1328
        %v1341 = vsel %vm585, %v1328, %v1330
        %v1342 = vsel %vm585, %v1330, %v1332
        %v1343 = vsel %vm585, %v1332, %v1334
        %v1344 = vsel %vm585, %v1334, %v1336
        %v1345 = vsel %vm585, %v1336, %v1338
        %v1354 = vadd.f32 %v1297, %v1339
        %v1355 = vadd.f32 %v1298, %v1340
        %v1356 = vadd.f32 %v1299, %v1341
        %v1357 = vadd.f32 %v1300, %v1342
        %v1358 = vadd.f32 %v1301, %v1343
        %v1359 = vadd.f32 %v1302, %v1344
        %v1360 = vadd.f32 %v1303, %v1345
        %v1361 = vadd.f32 %v1304, %v1338
        %s1362 = sld [smem:[#allocation9 + $0x84]]
        %v1363 = vstv %s1362
        %v1364 = vmul.f32 %v288, %v1363
        %v1365 = vmul.f32 %v289, %v1363
        %v1366 = vmul.f32 %v290, %v1363
        %v1367 = vmul.f32 %v291, %v1363
        %v1368 = vmul.f32 %v292, %v1363
        %v1369 = vmul.f32 %v293, %v1363
        %v1370 = vmul.f32 %v294, %v1363
        %v1371 = vmul.f32 %v295, %v1363
        %1380 = vrot.lane.b32.xlu0 %v1364, 124
        %v1381 = vpop.permute.xlu0 %1380
        %1382 = vrot.lane.b32.xlu0 %v1365, 124
        %v1383 = vpop.permute.xlu0 %1382
        %1384 = vrot.lane.b32.xlu0 %v1366, 124
        %v1385 = vpop.permute.xlu0 %1384
        %1386 = vrot.lane.b32.xlu0 %v1367, 124
        %v1387 = vpop.permute.xlu0 %1386
        %1388 = vrot.lane.b32.xlu0 %v1368, 124
        %v1389 = vpop.permute.xlu0 %1388
        %1390 = vrot.lane.b32.xlu0 %v1369, 124
        %v1391 = vpop.permute.xlu0 %1390
        %1392 = vrot.lane.b32.xlu0 %v1370, 124
        %v1393 = vpop.permute.xlu0 %1392
        %1394 = vrot.lane.b32.xlu0 %v1371, 124
        %v1395 = vpop.permute.xlu0 %1394
        %v1396 = vsel %vm643, %v1381, %v1383
        %v1397 = vsel %vm643, %v1383, %v1385
        %v1398 = vsel %vm643, %v1385, %v1387
        %v1399 = vsel %vm643, %v1387, %v1389
        %v1400 = vsel %vm643, %v1389, %v1391
        %v1401 = vsel %vm643, %v1391, %v1393
        %v1402 = vsel %vm643, %v1393, %v1395
        %v1411 = vadd.f32 %v1354, %v1396
        %v1412 = vadd.f32 %v1355, %v1397
        %v1413 = vadd.f32 %v1356, %v1398
        %v1414 = vadd.f32 %v1357, %v1399
        %v1415 = vadd.f32 %v1358, %v1400
        %v1416 = vadd.f32 %v1359, %v1401
        %v1417 = vadd.f32 %v1360, %v1402
        %v1418 = vadd.f32 %v1361, %v1395
        %s1419 = sld [smem:[#allocation10 + $0x1]]
        %v1420 = vstv %s1419
        %v1421 = vadd.f32 %v1411, %v1420
        %v1422 = vadd.f32 %v1412, %v1420
        %v1423 = vadd.f32 %v1413, %v1420
        %v1424 = vadd.f32 %v1414, %v1420
        %v1425 = vadd.f32 %v1415, %v1420
        %v1426 = vadd.f32 %v1416, %v1420
        %v1427 = vadd.f32 %v1417, %v1420
        %v1428 = vadd.f32 %v1418, %v1420
        %v1429 = vmax.f32 %v1421, 0.0
        %v1430 = vmax.f32 %v1422, 0.0
        %v1431 = vmax.f32 %v1423, 0.0
        %v1432 = vmax.f32 %v1424, 0.0
        %v1433 = vmax.f32 %v1425, 0.0
        %v1434 = vmax.f32 %v1426, 0.0
        %v1435 = vmax.f32 %v1427, 0.0
        %v1436 = vmax.f32 %v1428, 0.0
        %v1437 = vpack.c.bf16 %v1429, %v1429
        %v1438 = vpack.c.bf16 %v1430, %v1430
        %v1439 = vpack.c.bf16 %v1431, %v1431
        %v1440 = vpack.c.bf16 %v1432, %v1432
        %v1441 = vpack.c.bf16 %v1433, %v1433
        %v1442 = vpack.c.bf16 %v1434, %v1434
        %v1443 = vpack.c.bf16 %v1435, %v1435
        %v1444 = vpack.c.bf16 %v1436, %v1436
        %v1446 = vsel %vm1068, %v1444, 0
        %1448 = vmatpush.bf16.msra.mxu0 %v950
        %1449 = vmatpush.bf16.msra.mxu0 %v949
        %1450 = vmatpush.bf16.msra.mxu0 %v948
        %1451 = vmatpush.bf16.msra.mxu0 %v947
        %1452 = vmatpush.bf16.msra.mxu0 %v946
        %1453 = vmatpush.bf16.msra.mxu0 %v945
        %1454 = vmatpush.bf16.msra.mxu0 %v944
        %1455 = vmatpush.bf16.msra.mxu0 %v943
        %1456 = vmatmul.bf16.gmra.mxu0 %v1437
        %v1457 = vpop.f32.mrf.mxu0
        %v1458 = vadd.f32 0.0, %v1457
        %v1459 = vpop.f32.mrf.mxu0
        %1460 = vdwg.mxu0
        %1461 = vmatpush.bf16.msra.mxu0 %v958
        %1462 = vmatpush.bf16.msra.mxu0 %v957
        %1463 = vmatpush.bf16.msra.mxu0 %v956
        %1464 = vmatpush.bf16.msra.mxu0 %v955
        %1465 = vmatpush.bf16.msra.mxu0 %v954
        %1466 = vmatpush.bf16.msra.mxu0 %v953
        %1467 = vmatpush.bf16.msra.mxu0 %v952
        %1468 = vmatpush.bf16.msra.mxu0 %v951
        %1469 = vmatmul.bf16.gmra.mxu0 %v1438
        %v1470 = vpop.f32.mrf.mxu0
        %v1471 = vadd.f32 %v1458, %v1470
        %v1472 = vpop.f32.mrf.mxu0
        %1473 = vdwg.mxu0
        %1474 = vmatpush.bf16.msra.mxu0 %v966
        %1475 = vmatpush.bf16.msra.mxu0 %v965
        %1476 = vmatpush.bf16.msra.mxu0 %v964
        %1477 = vmatpush.bf16.msra.mxu0 %v963
        %1478 = vmatpush.bf16.msra.mxu0 %v962
        %1479 = vmatpush.bf16.msra.mxu0 %v961
        %1480 = vmatpush.bf16.msra.mxu0 %v960
        %1481 = vmatpush.bf16.msra.mxu0 %v959
        %1482 = vmatmul.bf16.gmra.mxu0 %v1439
        %v1483 = vpop.f32.mrf.mxu0
        %v1484 = vadd.f32 %v1471, %v1483
        %v1485 = vpop.f32.mrf.mxu0
        %1486 = vdwg.mxu0
        %1487 = vmatpush.bf16.msra.mxu0 %v974
        %1488 = vmatpush.bf16.msra.mxu0 %v973
        %1489 = vmatpush.bf16.msra.mxu0 %v972
        %1490 = vmatpush.bf16.msra.mxu0 %v971
        %1491 = vmatpush.bf16.msra.mxu0 %v970
        %1492 = vmatpush.bf16.msra.mxu0 %v969
        %1493 = vmatpush.bf16.msra.mxu0 %v968
        %1494 = vmatpush.bf16.msra.mxu0 %v967
        %1495 = vmatmul.bf16.gmra.mxu0 %v1440
        %v1496 = vpop.f32.mrf.mxu0
        %v1497 = vadd.f32 %v1484, %v1496
        %v1498 = vpop.f32.mrf.mxu0
        %1499 = vdwg.mxu0
        %1500 = vmatpush.bf16.msra.mxu0 %v982
        %1501 = vmatpush.bf16.msra.mxu0 %v981
        %1502 = vmatpush.bf16.msra.mxu0 %v980
        %1503 = vmatpush.bf16.msra.mxu0 %v979
        %1504 = vmatpush.bf16.msra.mxu0 %v978
        %1505 = vmatpush.bf16.msra.mxu0 %v977
        %1506 = vmatpush.bf16.msra.mxu0 %v976
        %1507 = vmatpush.bf16.msra.mxu0 %v975
        %1508 = vmatmul.bf16.gmra.mxu0 %v1441
        %v1509 = vpop.f32.mrf.mxu0
        %v1510 = vadd.f32 %v1497, %v1509
        %v1511 = vpop.f32.mrf.mxu0
        %1512 = vdwg.mxu0
        %1513 = vmatpush.bf16.msra.mxu0 %v990
        %1514 = vmatpush.bf16.msra.mxu0 %v989
        %1515 = vmatpush.bf16.msra.mxu0 %v988
        %1516 = vmatpush.bf16.msra.mxu0 %v987
        %1517 = vmatpush.bf16.msra.mxu0 %v986
        %1518 = vmatpush.bf16.msra.mxu0 %v985
        %1519 = vmatpush.bf16.msra.mxu0 %v984
        %1520 = vmatpush.bf16.msra.mxu0 %v983
        %1521 = vmatmul.bf16.gmra.mxu0 %v1442
        %v1522 = vpop.f32.mrf.mxu0
        %v1523 = vadd.f32 %v1510, %v1522
        %v1524 = vpop.f32.mrf.mxu0
        %1525 = vdwg.mxu0
        %1526 = vmatpush.bf16.msra.mxu0 %v998
        %1527 = vmatpush.bf16.msra.mxu0 %v997
        %1528 = vmatpush.bf16.msra.mxu0 %v996
        %1529 = vmatpush.bf16.msra.mxu0 %v995
        %1530 = vmatpush.bf16.msra.mxu0 %v994
        %1531 = vmatpush.bf16.msra.mxu0 %v993
        %1532 = vmatpush.bf16.msra.mxu0 %v992
        %1533 = vmatpush.bf16.msra.mxu0 %v991
        %1534 = vmatmul.bf16.gmra.mxu0 %v1443
        %v1535 = vpop.f32.mrf.mxu0
        %v1536 = vadd.f32 %v1523, %v1535
        %v1537 = vpop.f32.mrf.mxu0
        %1538 = vdwg.mxu0
        %1539 = vmatpush.bf16.msra.mxu0 0
        %1540 = vmatpush.bf16.msra.mxu0 %v1074
        %1541 = vmatpush.bf16.msra.mxu0 %v1004
        %1542 = vmatpush.bf16.msra.mxu0 %v1003
        %1543 = vmatpush.bf16.msra.mxu0 %v1002
        %1544 = vmatpush.bf16.msra.mxu0 %v1001
        %1545 = vmatpush.bf16.msra.mxu0 %v1000
        %1546 = vmatpush.bf16.msra.mxu0 %v999
        %1547 = vmatmul.bf16.gmra.mxu0 %v1446
        %v1548 = vpop.f32.mrf.mxu0
        %v1549 = vadd.f32 %v1536, %v1548
        %v1550 = vpop.f32.mrf.mxu0
        %1551 = vdwg.mxu0
        %1553 = vrot.lane.b32.xlu0 %v1549, 112
        %v1554 = vpop.permute.xlu0 %1553
        %v1556 = vadd.f32 %v1180, %v1554
        %s1557 = sld [smem:[#allocation9 + $0x100]]
        %v1558 = vstv %s1557
        %v1559 = vmul.f32 %v288, %v1558
        %v1560 = vmul.f32 %v289, %v1558
        %v1561 = vmul.f32 %v290, %v1558
        %v1562 = vmul.f32 %v291, %v1558
        %v1563 = vmul.f32 %v292, %v1558
        %v1564 = vmul.f32 %v293, %v1558
        %v1565 = vmul.f32 %v294, %v1558
        %v1566 = vmul.f32 %v295, %v1558
        %s1567 = sld [smem:[#allocation9 + $0x101]]
        %v1568 = vstv %s1567
        %v1569 = vmul.f32 %v288, %v1568
        %v1570 = vmul.f32 %v289, %v1568
        %v1571 = vmul.f32 %v290, %v1568
        %v1572 = vmul.f32 %v291, %v1568
        %v1573 = vmul.f32 %v292, %v1568
        %v1574 = vmul.f32 %v293, %v1568
        %v1575 = vmul.f32 %v294, %v1568
        %v1576 = vmul.f32 %v295, %v1568
        %1585 = vrot.lane.b32.xlu0 %v1569, 127
        %v1586 = vpop.permute.xlu0 %1585
        %1587 = vrot.lane.b32.xlu0 %v1570, 127
        %v1588 = vpop.permute.xlu0 %1587
        %1589 = vrot.lane.b32.xlu0 %v1571, 127
        %v1590 = vpop.permute.xlu0 %1589
        %1591 = vrot.lane.b32.xlu0 %v1572, 127
        %v1592 = vpop.permute.xlu0 %1591
        %1593 = vrot.lane.b32.xlu0 %v1573, 127
        %v1594 = vpop.permute.xlu0 %1593
        %1595 = vrot.lane.b32.xlu0 %v1574, 127
        %v1596 = vpop.permute.xlu0 %1595
        %1597 = vrot.lane.b32.xlu0 %v1575, 127
        %v1598 = vpop.permute.xlu0 %1597
        %1599 = vrot.lane.b32.xlu0 %v1576, 127
        %v1600 = vpop.permute.xlu0 %1599
        %v1601 = vsel %vm469, %v1586, %v1588
        %v1602 = vsel %vm469, %v1588, %v1590
        %v1603 = vsel %vm469, %v1590, %v1592
        %v1604 = vsel %vm469, %v1592, %v1594
        %v1605 = vsel %vm469, %v1594, %v1596
        %v1606 = vsel %vm469, %v1596, %v1598
        %v1607 = vsel %vm469, %v1598, %v1600
        %v1616 = vadd.f32 %v1559, %v1601
        %v1617 = vadd.f32 %v1560, %v1602
        %v1618 = vadd.f32 %v1561, %v1603
        %v1619 = vadd.f32 %v1562, %v1604
        %v1620 = vadd.f32 %v1563, %v1605
        %v1621 = vadd.f32 %v1564, %v1606
        %v1622 = vadd.f32 %v1565, %v1607
        %v1623 = vadd.f32 %v1566, %v1600
        %s1624 = sld [smem:[#allocation9 + $0x102]]
        %v1625 = vstv %s1624
        %v1626 = vmul.f32 %v288, %v1625
        %v1627 = vmul.f32 %v289, %v1625
        %v1628 = vmul.f32 %v290, %v1625
        %v1629 = vmul.f32 %v291, %v1625
        %v1630 = vmul.f32 %v292, %v1625
        %v1631 = vmul.f32 %v293, %v1625
        %v1632 = vmul.f32 %v294, %v1625
        %v1633 = vmul.f32 %v295, %v1625
        %1642 = vrot.lane.b32.xlu0 %v1626, 126
        %v1643 = vpop.permute.xlu0 %1642
        %1644 = vrot.lane.b32.xlu0 %v1627, 126
        %v1645 = vpop.permute.xlu0 %1644
        %1646 = vrot.lane.b32.xlu0 %v1628, 126
        %v1647 = vpop.permute.xlu0 %1646
        %1648 = vrot.lane.b32.xlu0 %v1629, 126
        %v1649 = vpop.permute.xlu0 %1648
        %1650 = vrot.lane.b32.xlu0 %v1630, 126
        %v1651 = vpop.permute.xlu0 %1650
        %1652 = vrot.lane.b32.xlu0 %v1631, 126
        %v1653 = vpop.permute.xlu0 %1652
        %1654 = vrot.lane.b32.xlu0 %v1632, 126
        %v1655 = vpop.permute.xlu0 %1654
        %1656 = vrot.lane.b32.xlu0 %v1633, 126
        %v1657 = vpop.permute.xlu0 %1656
        %v1658 = vsel %vm527, %v1643, %v1645
        %v1659 = vsel %vm527, %v1645, %v1647
        %v1660 = vsel %vm527, %v1647, %v1649
        %v1661 = vsel %vm527, %v1649, %v1651
        %v1662 = vsel %vm527, %v1651, %v1653
        %v1663 = vsel %vm527, %v1653, %v1655
        %v1664 = vsel %vm527, %v1655, %v1657
        %v1673 = vadd.f32 %v1616, %v1658
        %v1674 = vadd.f32 %v1617, %v1659
        %v1675 = vadd.f32 %v1618, %v1660
        %v1676 = vadd.f32 %v1619, %v1661
        %v1677 = vadd.f32 %v1620, %v1662
        %v1678 = vadd.f32 %v1621, %v1663
        %v1679 = vadd.f32 %v1622, %v1664
        %v1680 = vadd.f32 %v1623, %v1657
        %s1681 = sld [smem:[#allocation9 + $0x103]]
        %v1682 = vstv %s1681
        %v1683 = vmul.f32 %v288, %v1682
        %v1684 = vmul.f32 %v289, %v1682
        %v1685 = vmul.f32 %v290, %v1682
        %v1686 = vmul.f32 %v291, %v1682
        %v1687 = vmul.f32 %v292, %v1682
        %v1688 = vmul.f32 %v293, %v1682
        %v1689 = vmul.f32 %v294, %v1682
        %v1690 = vmul.f32 %v295, %v1682
        %1699 = vrot.lane.b32.xlu0 %v1683, 125
        %v1700 = vpop.permute.xlu0 %1699
        %1701 = vrot.lane.b32.xlu0 %v1684, 125
        %v1702 = vpop.permute.xlu0 %1701
        %1703 = vrot.lane.b32.xlu0 %v1685, 125
        %v1704 = vpop.permute.xlu0 %1703
        %1705 = vrot.lane.b32.xlu0 %v1686, 125
        %v1706 = vpop.permute.xlu0 %1705
        %1707 = vrot.lane.b32.xlu0 %v1687, 125
        %v1708 = vpop.permute.xlu0 %1707
        %1709 = vrot.lane.b32.xlu0 %v1688, 125
        %v1710 = vpop.permute.xlu0 %1709
        %1711 = vrot.lane.b32.xlu0 %v1689, 125
        %v1712 = vpop.permute.xlu0 %1711
        %1713 = vrot.lane.b32.xlu0 %v1690, 125
        %v1714 = vpop.permute.xlu0 %1713
        %v1715 = vsel %vm585, %v1700, %v1702
        %v1716 = vsel %vm585, %v1702, %v1704
        %v1717 = vsel %vm585, %v1704, %v1706
        %v1718 = vsel %vm585, %v1706, %v1708
        %v1719 = vsel %vm585, %v1708, %v1710
        %v1720 = vsel %vm585, %v1710, %v1712
        %v1721 = vsel %vm585, %v1712, %v1714
        %v1730 = vadd.f32 %v1673, %v1715
        %v1731 = vadd.f32 %v1674, %v1716
        %v1732 = vadd.f32 %v1675, %v1717
        %v1733 = vadd.f32 %v1676, %v1718
        %v1734 = vadd.f32 %v1677, %v1719
        %v1735 = vadd.f32 %v1678, %v1720
        %v1736 = vadd.f32 %v1679, %v1721
        %v1737 = vadd.f32 %v1680, %v1714
        %s1738 = sld [smem:[#allocation9 + $0x104]]
        %v1739 = vstv %s1738
        %v1740 = vmul.f32 %v288, %v1739
        %v1741 = vmul.f32 %v289, %v1739
        %v1742 = vmul.f32 %v290, %v1739
        %v1743 = vmul.f32 %v291, %v1739
        %v1744 = vmul.f32 %v292, %v1739
        %v1745 = vmul.f32 %v293, %v1739
        %v1746 = vmul.f32 %v294, %v1739
        %v1747 = vmul.f32 %v295, %v1739
        %1756 = vrot.lane.b32.xlu0 %v1740, 124
        %v1757 = vpop.permute.xlu0 %1756
        %1758 = vrot.lane.b32.xlu0 %v1741, 124
        %v1759 = vpop.permute.xlu0 %1758
        %1760 = vrot.lane.b32.xlu0 %v1742, 124
        %v1761 = vpop.permute.xlu0 %1760
        %1762 = vrot.lane.b32.xlu0 %v1743, 124
        %v1763 = vpop.permute.xlu0 %1762
        %1764 = vrot.lane.b32.xlu0 %v1744, 124
        %v1765 = vpop.permute.xlu0 %1764
        %1766 = vrot.lane.b32.xlu0 %v1745, 124
        %v1767 = vpop.permute.xlu0 %1766
        %1768 = vrot.lane.b32.xlu0 %v1746, 124
        %v1769 = vpop.permute.xlu0 %1768
        %1770 = vrot.lane.b32.xlu0 %v1747, 124
        %v1771 = vpop.permute.xlu0 %1770
        %v1772 = vsel %vm643, %v1757, %v1759
        %v1773 = vsel %vm643, %v1759, %v1761
        %v1774 = vsel %vm643, %v1761, %v1763
        %v1775 = vsel %vm643, %v1763, %v1765
        %v1776 = vsel %vm643, %v1765, %v1767
        %v1777 = vsel %vm643, %v1767, %v1769
        %v1778 = vsel %vm643, %v1769, %v1771
        %v1787 = vadd.f32 %v1730, %v1772
        %v1788 = vadd.f32 %v1731, %v1773
        %v1789 = vadd.f32 %v1732, %v1774
        %v1790 = vadd.f32 %v1733, %v1775
        %v1791 = vadd.f32 %v1734, %v1776
        %v1792 = vadd.f32 %v1735, %v1777
        %v1793 = vadd.f32 %v1736, %v1778
        %v1794 = vadd.f32 %v1737, %v1771
        %s1795 = sld [smem:[#allocation10 + $0x2]]
        %v1796 = vstv %s1795
        %v1797 = vadd.f32 %v1787, %v1796
        %v1798 = vadd.f32 %v1788, %v1796
        %v1799 = vadd.f32 %v1789, %v1796
        %v1800 = vadd.f32 %v1790, %v1796
        %v1801 = vadd.f32 %v1791, %v1796
        %v1802 = vadd.f32 %v1792, %v1796
        %v1803 = vadd.f32 %v1793, %v1796
        %v1804 = vadd.f32 %v1794, %v1796
        %v1805 = vmax.f32 %v1797, 0.0
        %v1806 = vmax.f32 %v1798, 0.0
        %v1807 = vmax.f32 %v1799, 0.0
        %v1808 = vmax.f32 %v1800, 0.0
        %v1809 = vmax.f32 %v1801, 0.0
        %v1810 = vmax.f32 %v1802, 0.0
        %v1811 = vmax.f32 %v1803, 0.0
        %v1812 = vmax.f32 %v1804, 0.0
        %v1813 = vpack.c.bf16 %v1805, %v1805
        %v1814 = vpack.c.bf16 %v1806, %v1806
        %v1815 = vpack.c.bf16 %v1807, %v1807
        %v1816 = vpack.c.bf16 %v1808, %v1808
        %v1817 = vpack.c.bf16 %v1809, %v1809
        %v1818 = vpack.c.bf16 %v1810, %v1810
        %v1819 = vpack.c.bf16 %v1811, %v1811
        %v1820 = vpack.c.bf16 %v1812, %v1812
        %v1822 = vsel %vm1068, %v1820, 0
        %1824 = vmatpush.bf16.msra.mxu0 %v950
        %1825 = vmatpush.bf16.msra.mxu0 %v949
        %1826 = vmatpush.bf16.msra.mxu0 %v948
        %1827 = vmatpush.bf16.msra.mxu0 %v947
        %1828 = vmatpush.bf16.msra.mxu0 %v946
        %1829 = vmatpush.bf16.msra.mxu0 %v945
        %1830 = vmatpush.bf16.msra.mxu0 %v944
        %1831 = vmatpush.bf16.msra.mxu0 %v943
        %1832 = vmatmul.bf16.gmra.mxu0 %v1813
        %v1833 = vpop.f32.mrf.mxu0
        %v1834 = vadd.f32 0.0, %v1833
        %v1835 = vpop.f32.mrf.mxu0
        %1836 = vdwg.mxu0
        %1837 = vmatpush.bf16.msra.mxu0 %v958
        %1838 = vmatpush.bf16.msra.mxu0 %v957
        %1839 = vmatpush.bf16.msra.mxu0 %v956
        %1840 = vmatpush.bf16.msra.mxu0 %v955
        %1841 = vmatpush.bf16.msra.mxu0 %v954
        %1842 = vmatpush.bf16.msra.mxu0 %v953
        %1843 = vmatpush.bf16.msra.mxu0 %v952
        %1844 = vmatpush.bf16.msra.mxu0 %v951
        %1845 = vmatmul.bf16.gmra.mxu0 %v1814
        %v1846 = vpop.f32.mrf.mxu0
        %v1847 = vadd.f32 %v1834, %v1846
        %v1848 = vpop.f32.mrf.mxu0
        %1849 = vdwg.mxu0
        %1850 = vmatpush.bf16.msra.mxu0 %v966
        %1851 = vmatpush.bf16.msra.mxu0 %v965
        %1852 = vmatpush.bf16.msra.mxu0 %v964
        %1853 = vmatpush.bf16.msra.mxu0 %v963
        %1854 = vmatpush.bf16.msra.mxu0 %v962
        %1855 = vmatpush.bf16.msra.mxu0 %v961
        %1856 = vmatpush.bf16.msra.mxu0 %v960
        %1857 = vmatpush.bf16.msra.mxu0 %v959
        %1858 = vmatmul.bf16.gmra.mxu0 %v1815
        %v1859 = vpop.f32.mrf.mxu0
        %v1860 = vadd.f32 %v1847, %v1859
        %v1861 = vpop.f32.mrf.mxu0
        %1862 = vdwg.mxu0
        %1863 = vmatpush.bf16.msra.mxu0 %v974
        %1864 = vmatpush.bf16.msra.mxu0 %v973
        %1865 = vmatpush.bf16.msra.mxu0 %v972
        %1866 = vmatpush.bf16.msra.mxu0 %v971
        %1867 = vmatpush.bf16.msra.mxu0 %v970
        %1868 = vmatpush.bf16.msra.mxu0 %v969
        %1869 = vmatpush.bf16.msra.mxu0 %v968
        %1870 = vmatpush.bf16.msra.mxu0 %v967
        %1871 = vmatmul.bf16.gmra.mxu0 %v1816
        %v1872 = vpop.f32.mrf.mxu0
        %v1873 = vadd.f32 %v1860, %v1872
        %v1874 = vpop.f32.mrf.mxu0
        %1875 = vdwg.mxu0
        %1876 = vmatpush.bf16.msra.mxu0 %v982
        %1877 = vmatpush.bf16.msra.mxu0 %v981
        %1878 = vmatpush.bf16.msra.mxu0 %v980
        %1879 = vmatpush.bf16.msra.mxu0 %v979
        %1880 = vmatpush.bf16.msra.mxu0 %v978
        %1881 = vmatpush.bf16.msra.mxu0 %v977
        %1882 = vmatpush.bf16.msra.mxu0 %v976
        %1883 = vmatpush.bf16.msra.mxu0 %v975
        %1884 = vmatmul.bf16.gmra.mxu0 %v1817
        %v1885 = vpop.f32.mrf.mxu0
        %v1886 = vadd.f32 %v1873, %v1885
        %v1887 = vpop.f32.mrf.mxu0
        %1888 = vdwg.mxu0
        %1889 = vmatpush.bf16.msra.mxu0 %v990
        %1890 = vmatpush.bf16.msra.mxu0 %v989
        %1891 = vmatpush.bf16.msra.mxu0 %v988
        %1892 = vmatpush.bf16.msra.mxu0 %v987
        %1893 = vmatpush.bf16.msra.mxu0 %v986
        %1894 = vmatpush.bf16.msra.mxu0 %v985
        %1895 = vmatpush.bf16.msra.mxu0 %v984
        %1896 = vmatpush.bf16.msra.mxu0 %v983
        %1897 = vmatmul.bf16.gmra.mxu0 %v1818
        %v1898 = vpop.f32.mrf.mxu0
        %v1899 = vadd.f32 %v1886, %v1898
        %v1900 = vpop.f32.mrf.mxu0
        %1901 = vdwg.mxu0
        %1902 = vmatpush.bf16.msra.mxu0 %v998
        %1903 = vmatpush.bf16.msra.mxu0 %v997
        %1904 = vmatpush.bf16.msra.mxu0 %v996
        %1905 = vmatpush.bf16.msra.mxu0 %v995
        %1906 = vmatpush.bf16.msra.mxu0 %v994
        %1907 = vmatpush.bf16.msra.mxu0 %v993
        %1908 = vmatpush.bf16.msra.mxu0 %v992
        %1909 = vmatpush.bf16.msra.mxu0 %v991
        %1910 = vmatmul.bf16.gmra.mxu0 %v1819
        %v1911 = vpop.f32.mrf.mxu0
        %v1912 = vadd.f32 %v1899, %v1911
        %v1913 = vpop.f32.mrf.mxu0
        %1914 = vdwg.mxu0
        %1915 = vmatpush.bf16.msra.mxu0 0
        %1916 = vmatpush.bf16.msra.mxu0 %v1074
        %1917 = vmatpush.bf16.msra.mxu0 %v1004
        %1918 = vmatpush.bf16.msra.mxu0 %v1003
        %1919 = vmatpush.bf16.msra.mxu0 %v1002
        %1920 = vmatpush.bf16.msra.mxu0 %v1001
        %1921 = vmatpush.bf16.msra.mxu0 %v1000
        %1922 = vmatpush.bf16.msra.mxu0 %v999
        %1923 = vmatmul.bf16.gmra.mxu0 %v1822
        %v1924 = vpop.f32.mrf.mxu0
        %v1925 = vadd.f32 %v1912, %v1924
        %v1926 = vpop.f32.mrf.mxu0
        %1927 = vdwg.mxu0
        %1929 = vrot.lane.b32.xlu0 %v1925, 96
        %v1930 = vpop.permute.xlu0 %1929
        %v1932 = vadd.f32 %v1556, %v1930
        %s1933 = sld [smem:[#allocation9 + $0x180]]
        %v1934 = vstv %s1933
        %v1935 = vmul.f32 %v288, %v1934
        %v1936 = vmul.f32 %v289, %v1934
        %v1937 = vmul.f32 %v290, %v1934
        %v1938 = vmul.f32 %v291, %v1934
        %v1939 = vmul.f32 %v292, %v1934
        %v1940 = vmul.f32 %v293, %v1934
        %v1941 = vmul.f32 %v294, %v1934
        %v1942 = vmul.f32 %v295, %v1934
        %s1943 = sld [smem:[#allocation9 + $0x181]]
        %v1944 = vstv %s1943
        %v1945 = vmul.f32 %v288, %v1944
        %v1946 = vmul.f32 %v289, %v1944
        %v1947 = vmul.f32 %v290, %v1944
        %v1948 = vmul.f32 %v291, %v1944
        %v1949 = vmul.f32 %v292, %v1944
        %v1950 = vmul.f32 %v293, %v1944
        %v1951 = vmul.f32 %v294, %v1944
        %v1952 = vmul.f32 %v295, %v1944
        %1961 = vrot.lane.b32.xlu0 %v1945, 127
        %v1962 = vpop.permute.xlu0 %1961
        %1963 = vrot.lane.b32.xlu0 %v1946, 127
        %v1964 = vpop.permute.xlu0 %1963
        %1965 = vrot.lane.b32.xlu0 %v1947, 127
        %v1966 = vpop.permute.xlu0 %1965
        %1967 = vrot.lane.b32.xlu0 %v1948, 127
        %v1968 = vpop.permute.xlu0 %1967
        %1969 = vrot.lane.b32.xlu0 %v1949, 127
        %v1970 = vpop.permute.xlu0 %1969
        %1971 = vrot.lane.b32.xlu0 %v1950, 127
        %v1972 = vpop.permute.xlu0 %1971
        %1973 = vrot.lane.b32.xlu0 %v1951, 127
        %v1974 = vpop.permute.xlu0 %1973
        %1975 = vrot.lane.b32.xlu0 %v1952, 127
        %v1976 = vpop.permute.xlu0 %1975
        %v1977 = vsel %vm469, %v1962, %v1964
        %v1978 = vsel %vm469, %v1964, %v1966
        %v1979 = vsel %vm469, %v1966, %v1968
        %v1980 = vsel %vm469, %v1968, %v1970
        %v1981 = vsel %vm469, %v1970, %v1972
        %v1982 = vsel %vm469, %v1972, %v1974
        %v1983 = vsel %vm469, %v1974, %v1976
        %v1992 = vadd.f32 %v1935, %v1977
        %v1993 = vadd.f32 %v1936, %v1978
        %v1994 = vadd.f32 %v1937, %v1979
        %v1995 = vadd.f32 %v1938, %v1980
        %v1996 = vadd.f32 %v1939, %v1981
        %v1997 = vadd.f32 %v1940, %v1982
        %v1998 = vadd.f32 %v1941, %v1983
        %v1999 = vadd.f32 %v1942, %v1976
        %s2000 = sld [smem:[#allocation9 + $0x182]]
        %v2001 = vstv %s2000
        %v2002 = vmul.f32 %v288, %v2001
        %v2003 = vmul.f32 %v289, %v2001
        %v2004 = vmul.f32 %v290, %v2001
        %v2005 = vmul.f32 %v291, %v2001
        %v2006 = vmul.f32 %v292, %v2001
        %v2007 = vmul.f32 %v293, %v2001
        %v2008 = vmul.f32 %v294, %v2001
        %v2009 = vmul.f32 %v295, %v2001
        %2018 = vrot.lane.b32.xlu0 %v2002, 126
        %v2019 = vpop.permute.xlu0 %2018
        %2020 = vrot.lane.b32.xlu0 %v2003, 126
        %v2021 = vpop.permute.xlu0 %2020
        %2022 = vrot.lane.b32.xlu0 %v2004, 126
        %v2023 = vpop.permute.xlu0 %2022
        %2024 = vrot.lane.b32.xlu0 %v2005, 126
        %v2025 = vpop.permute.xlu0 %2024
        %2026 = vrot.lane.b32.xlu0 %v2006, 126
        %v2027 = vpop.permute.xlu0 %2026
        %2028 = vrot.lane.b32.xlu0 %v2007, 126
        %v2029 = vpop.permute.xlu0 %2028
        %2030 = vrot.lane.b32.xlu0 %v2008, 126
        %v2031 = vpop.permute.xlu0 %2030
        %2032 = vrot.lane.b32.xlu0 %v2009, 126
        %v2033 = vpop.permute.xlu0 %2032
        %v2034 = vsel %vm527, %v2019, %v2021
        %v2035 = vsel %vm527, %v2021, %v2023
        %v2036 = vsel %vm527, %v2023, %v2025
        %v2037 = vsel %vm527, %v2025, %v2027
        %v2038 = vsel %vm527, %v2027, %v2029
        %v2039 = vsel %vm527, %v2029, %v2031
        %v2040 = vsel %vm527, %v2031, %v2033
        %v2049 = vadd.f32 %v1992, %v2034
        %v2050 = vadd.f32 %v1993, %v2035
        %v2051 = vadd.f32 %v1994, %v2036
        %v2052 = vadd.f32 %v1995, %v2037
        %v2053 = vadd.f32 %v1996, %v2038
        %v2054 = vadd.f32 %v1997, %v2039
        %v2055 = vadd.f32 %v1998, %v2040
        %v2056 = vadd.f32 %v1999, %v2033
        %s2057 = sld [smem:[#allocation9 + $0x183]]
        %v2058 = vstv %s2057
        %v2059 = vmul.f32 %v288, %v2058
        %v2060 = vmul.f32 %v289, %v2058
        %v2061 = vmul.f32 %v290, %v2058
        %v2062 = vmul.f32 %v291, %v2058
        %v2063 = vmul.f32 %v292, %v2058
        %v2064 = vmul.f32 %v293, %v2058
        %v2065 = vmul.f32 %v294, %v2058
        %v2066 = vmul.f32 %v295, %v2058
        %2075 = vrot.lane.b32.xlu0 %v2059, 125
        %v2076 = vpop.permute.xlu0 %2075
        %2077 = vrot.lane.b32.xlu0 %v2060, 125
        %v2078 = vpop.permute.xlu0 %2077
        %2079 = vrot.lane.b32.xlu0 %v2061, 125
        %v2080 = vpop.permute.xlu0 %2079
        %2081 = vrot.lane.b32.xlu0 %v2062, 125
        %v2082 = vpop.permute.xlu0 %2081
        %2083 = vrot.lane.b32.xlu0 %v2063, 125
        %v2084 = vpop.permute.xlu0 %2083
        %2085 = vrot.lane.b32.xlu0 %v2064, 125
        %v2086 = vpop.permute.xlu0 %2085
        %2087 = vrot.lane.b32.xlu0 %v2065, 125
        %v2088 = vpop.permute.xlu0 %2087
        %2089 = vrot.lane.b32.xlu0 %v2066, 125
        %v2090 = vpop.permute.xlu0 %2089
        %v2091 = vsel %vm585, %v2076, %v2078
        %v2092 = vsel %vm585, %v2078, %v2080
        %v2093 = vsel %vm585, %v2080, %v2082
        %v2094 = vsel %vm585, %v2082, %v2084
        %v2095 = vsel %vm585, %v2084, %v2086
        %v2096 = vsel %vm585, %v2086, %v2088
        %v2097 = vsel %vm585, %v2088, %v2090
        %v2106 = vadd.f32 %v2049, %v2091
        %v2107 = vadd.f32 %v2050, %v2092
        %v2108 = vadd.f32 %v2051, %v2093
        %v2109 = vadd.f32 %v2052, %v2094
        %v2110 = vadd.f32 %v2053, %v2095
        %v2111 = vadd.f32 %v2054, %v2096
        %v2112 = vadd.f32 %v2055, %v2097
        %v2113 = vadd.f32 %v2056, %v2090
        %s2114 = sld [smem:[#allocation9 + $0x184]]
        %v2115 = vstv %s2114
        %v2116 = vmul.f32 %v288, %v2115
        %v2117 = vmul.f32 %v289, %v2115
        %v2118 = vmul.f32 %v290, %v2115
        %v2119 = vmul.f32 %v291, %v2115
        %v2120 = vmul.f32 %v292, %v2115
        %v2121 = vmul.f32 %v293, %v2115
        %v2122 = vmul.f32 %v294, %v2115
        %v2123 = vmul.f32 %v295, %v2115
        %2132 = vrot.lane.b32.xlu0 %v2116, 124
        %v2133 = vpop.permute.xlu0 %2132
        %2134 = vrot.lane.b32.xlu0 %v2117, 124
        %v2135 = vpop.permute.xlu0 %2134
        %2136 = vrot.lane.b32.xlu0 %v2118, 124
        %v2137 = vpop.permute.xlu0 %2136
        %2138 = vrot.lane.b32.xlu0 %v2119, 124
        %v2139 = vpop.permute.xlu0 %2138
        %2140 = vrot.lane.b32.xlu0 %v2120, 124
        %v2141 = vpop.permute.xlu0 %2140
        %2142 = vrot.lane.b32.xlu0 %v2121, 124
        %v2143 = vpop.permute.xlu0 %2142
        %2144 = vrot.lane.b32.xlu0 %v2122, 124
        %v2145 = vpop.permute.xlu0 %2144
        %2146 = vrot.lane.b32.xlu0 %v2123, 124
        %v2147 = vpop.permute.xlu0 %2146
        %v2148 = vsel %vm643, %v2133, %v2135
        %v2149 = vsel %vm643, %v2135, %v2137
        %v2150 = vsel %vm643, %v2137, %v2139
        %v2151 = vsel %vm643, %v2139, %v2141
        %v2152 = vsel %vm643, %v2141, %v2143
        %v2153 = vsel %vm643, %v2143, %v2145
        %v2154 = vsel %vm643, %v2145, %v2147
        %v2163 = vadd.f32 %v2106, %v2148
        %v2164 = vadd.f32 %v2107, %v2149
        %v2165 = vadd.f32 %v2108, %v2150
        %v2166 = vadd.f32 %v2109, %v2151
        %v2167 = vadd.f32 %v2110, %v2152
        %v2168 = vadd.f32 %v2111, %v2153
        %v2169 = vadd.f32 %v2112, %v2154
        %v2170 = vadd.f32 %v2113, %v2147
        %s2171 = sld [smem:[#allocation10 + $0x3]]
        %v2172 = vstv %s2171
        %v2173 = vadd.f32 %v2163, %v2172
        %v2174 = vadd.f32 %v2164, %v2172
        %v2175 = vadd.f32 %v2165, %v2172
        %v2176 = vadd.f32 %v2166, %v2172
        %v2177 = vadd.f32 %v2167, %v2172
        %v2178 = vadd.f32 %v2168, %v2172
        %v2179 = vadd.f32 %v2169, %v2172
        %v2180 = vadd.f32 %v2170, %v2172
        %v2181 = vmax.f32 %v2173, 0.0
        %v2182 = vmax.f32 %v2174, 0.0
        %v2183 = vmax.f32 %v2175, 0.0
        %v2184 = vmax.f32 %v2176, 0.0
        %v2185 = vmax.f32 %v2177, 0.0
        %v2186 = vmax.f32 %v2178, 0.0
        %v2187 = vmax.f32 %v2179, 0.0
        %v2188 = vmax.f32 %v2180, 0.0
        %v2189 = vpack.c.bf16 %v2181, %v2181
        %v2190 = vpack.c.bf16 %v2182, %v2182
        %v2191 = vpack.c.bf16 %v2183, %v2183
        %v2192 = vpack.c.bf16 %v2184, %v2184
        %v2193 = vpack.c.bf16 %v2185, %v2185
        %v2194 = vpack.c.bf16 %v2186, %v2186
        %v2195 = vpack.c.bf16 %v2187, %v2187
        %v2196 = vpack.c.bf16 %v2188, %v2188
        %v2198 = vsel %vm1068, %v2196, 0
        %2200 = vmatpush.bf16.msra.mxu0 %v950
        %2201 = vmatpush.bf16.msra.mxu0 %v949
        %2202 = vmatpush.bf16.msra.mxu0 %v948
        %2203 = vmatpush.bf16.msra.mxu0 %v947
        %2204 = vmatpush.bf16.msra.mxu0 %v946
        %2205 = vmatpush.bf16.msra.mxu0 %v945
        %2206 = vmatpush.bf16.msra.mxu0 %v944
        %2207 = vmatpush.bf16.msra.mxu0 %v943
        %2208 = vmatmul.bf16.gmra.mxu0 %v2189
        %v2209 = vpop.f32.mrf.mxu0
        %v2210 = vadd.f32 0.0, %v2209
        %v2211 = vpop.f32.mrf.mxu0
        %2212 = vdwg.mxu0
        %2213 = vmatpush.bf16.msra.mxu0 %v958
        %2214 = vmatpush.bf16.msra.mxu0 %v957
        %2215 = vmatpush.bf16.msra.mxu0 %v956
        %2216 = vmatpush.bf16.msra.mxu0 %v955
        %2217 = vmatpush.bf16.msra.mxu0 %v954
        %2218 = vmatpush.bf16.msra.mxu0 %v953
        %2219 = vmatpush.bf16.msra.mxu0 %v952
        %2220 = vmatpush.bf16.msra.mxu0 %v951
        %2221 = vmatmul.bf16.gmra.mxu0 %v2190
        %v2222 = vpop.f32.mrf.mxu0
        %v2223 = vadd.f32 %v2210, %v2222
        %v2224 = vpop.f32.mrf.mxu0
        %2225 = vdwg.mxu0
        %2226 = vmatpush.bf16.msra.mxu0 %v966
        %2227 = vmatpush.bf16.msra.mxu0 %v965
        %2228 = vmatpush.bf16.msra.mxu0 %v964
        %2229 = vmatpush.bf16.msra.mxu0 %v963
        %2230 = vmatpush.bf16.msra.mxu0 %v962
        %2231 = vmatpush.bf16.msra.mxu0 %v961
        %2232 = vmatpush.bf16.msra.mxu0 %v960
        %2233 = vmatpush.bf16.msra.mxu0 %v959
        %2234 = vmatmul.bf16.gmra.mxu0 %v2191
        %v2235 = vpop.f32.mrf.mxu0
        %v2236 = vadd.f32 %v2223, %v2235
        %v2237 = vpop.f32.mrf.mxu0
        %2238 = vdwg.mxu0
        %2239 = vmatpush.bf16.msra.mxu0 %v974
        %2240 = vmatpush.bf16.msra.mxu0 %v973
        %2241 = vmatpush.bf16.msra.mxu0 %v972
        %2242 = vmatpush.bf16.msra.mxu0 %v971
        %2243 = vmatpush.bf16.msra.mxu0 %v970
        %2244 = vmatpush.bf16.msra.mxu0 %v969
        %2245 = vmatpush.bf16.msra.mxu0 %v968
        %2246 = vmatpush.bf16.msra.mxu0 %v967
        %2247 = vmatmul.bf16.gmra.mxu0 %v2192
        %v2248 = vpop.f32.mrf.mxu0
        %v2249 = vadd.f32 %v2236, %v2248
        %v2250 = vpop.f32.mrf.mxu0
        %2251 = vdwg.mxu0
        %2252 = vmatpush.bf16.msra.mxu0 %v982
        %2253 = vmatpush.bf16.msra.mxu0 %v981
        %2254 = vmatpush.bf16.msra.mxu0 %v980
        %2255 = vmatpush.bf16.msra.mxu0 %v979
        %2256 = vmatpush.bf16.msra.mxu0 %v978
        %2257 = vmatpush.bf16.msra.mxu0 %v977
        %2258 = vmatpush.bf16.msra.mxu0 %v976
        %2259 = vmatpush.bf16.msra.mxu0 %v975
        %2260 = vmatmul.bf16.gmra.mxu0 %v2193
        %v2261 = vpop.f32.mrf.mxu0
        %v2262 = vadd.f32 %v2249, %v2261
        %v2263 = vpop.f32.mrf.mxu0
        %2264 = vdwg.mxu0
        %2265 = vmatpush.bf16.msra.mxu0 %v990
        %2266 = vmatpush.bf16.msra.mxu0 %v989
        %2267 = vmatpush.bf16.msra.mxu0 %v988
        %2268 = vmatpush.bf16.msra.mxu0 %v987
        %2269 = vmatpush.bf16.msra.mxu0 %v986
        %2270 = vmatpush.bf16.msra.mxu0 %v985
        %2271 = vmatpush.bf16.msra.mxu0 %v984
        %2272 = vmatpush.bf16.msra.mxu0 %v983
        %2273 = vmatmul.bf16.gmra.mxu0 %v2194
        %v2274 = vpop.f32.mrf.mxu0
        %v2275 = vadd.f32 %v2262, %v2274
        %v2276 = vpop.f32.mrf.mxu0
        %2277 = vdwg.mxu0
        %2278 = vmatpush.bf16.msra.mxu0 %v998
        %2279 = vmatpush.bf16.msra.mxu0 %v997
        %2280 = vmatpush.bf16.msra.mxu0 %v996
        %2281 = vmatpush.bf16.msra.mxu0 %v995
        %2282 = vmatpush.bf16.msra.mxu0 %v994
        %2283 = vmatpush.bf16.msra.mxu0 %v993
        %2284 = vmatpush.bf16.msra.mxu0 %v992
        %2285 = vmatpush.bf16.msra.mxu0 %v991
        %2286 = vmatmul.bf16.gmra.mxu0 %v2195
        %v2287 = vpop.f32.mrf.mxu0
        %v2288 = vadd.f32 %v2275, %v2287
        %v2289 = vpop.f32.mrf.mxu0
        %2290 = vdwg.mxu0
        %2291 = vmatpush.bf16.msra.mxu0 0
        %2292 = vmatpush.bf16.msra.mxu0 %v1074
        %2293 = vmatpush.bf16.msra.mxu0 %v1004
        %2294 = vmatpush.bf16.msra.mxu0 %v1003
        %2295 = vmatpush.bf16.msra.mxu0 %v1002
        %2296 = vmatpush.bf16.msra.mxu0 %v1001
        %2297 = vmatpush.bf16.msra.mxu0 %v1000
        %2298 = vmatpush.bf16.msra.mxu0 %v999
        %2299 = vmatmul.bf16.gmra.mxu0 %v2198
        %v2300 = vpop.f32.mrf.mxu0
        %v2301 = vadd.f32 %v2288, %v2300
        %v2302 = vpop.f32.mrf.mxu0
        %2303 = vdwg.mxu0
        %2305 = vrot.lane.b32.xlu0 %v2301, 80
        %v2306 = vpop.permute.xlu0 %2305
        %v2308 = vadd.f32 %v1932, %v2306
        %s2309 = sld [smem:[#allocation9 + $0x200]]
        %v2310 = vstv %s2309
        %v2311 = vmul.f32 %v288, %v2310
        %v2312 = vmul.f32 %v289, %v2310
        %v2313 = vmul.f32 %v290, %v2310
        %v2314 = vmul.f32 %v291, %v2310
        %v2315 = vmul.f32 %v292, %v2310
        %v2316 = vmul.f32 %v293, %v2310
        %v2317 = vmul.f32 %v294, %v2310
        %v2318 = vmul.f32 %v295, %v2310
        %s2319 = sld [smem:[#allocation9 + $0x201]]
        %v2320 = vstv %s2319
        %v2321 = vmul.f32 %v288, %v2320
        %v2322 = vmul.f32 %v289, %v2320
        %v2323 = vmul.f32 %v290, %v2320
        %v2324 = vmul.f32 %v291, %v2320
        %v2325 = vmul.f32 %v292, %v2320
        %v2326 = vmul.f32 %v293, %v2320
        %v2327 = vmul.f32 %v294, %v2320
        %v2328 = vmul.f32 %v295, %v2320
        %2337 = vrot.lane.b32.xlu0 %v2321, 127
        %v2338 = vpop.permute.xlu0 %2337
        %2339 = vrot.lane.b32.xlu0 %v2322, 127
        %v2340 = vpop.permute.xlu0 %2339
        %2341 = vrot.lane.b32.xlu0 %v2323, 127
        %v2342 = vpop.permute.xlu0 %2341
        %2343 = vrot.lane.b32.xlu0 %v2324, 127
        %v2344 = vpop.permute.xlu0 %2343
        %2345 = vrot.lane.b32.xlu0 %v2325, 127
        %v2346 = vpop.permute.xlu0 %2345
        %2347 = vrot.lane.b32.xlu0 %v2326, 127
        %v2348 = vpop.permute.xlu0 %2347
        %2349 = vrot.lane.b32.xlu0 %v2327, 127
        %v2350 = vpop.permute.xlu0 %2349
        %2351 = vrot.lane.b32.xlu0 %v2328, 127
        %v2352 = vpop.permute.xlu0 %2351
        %v2353 = vsel %vm469, %v2338, %v2340
        %v2354 = vsel %vm469, %v2340, %v2342
        %v2355 = vsel %vm469, %v2342, %v2344
        %v2356 = vsel %vm469, %v2344, %v2346
        %v2357 = vsel %vm469, %v2346, %v2348
        %v2358 = vsel %vm469, %v2348, %v2350
        %v2359 = vsel %vm469, %v2350, %v2352
        %v2368 = vadd.f32 %v2311, %v2353
        %v2369 = vadd.f32 %v2312, %v2354
        %v2370 = vadd.f32 %v2313, %v2355
        %v2371 = vadd.f32 %v2314, %v2356
        %v2372 = vadd.f32 %v2315, %v2357
        %v2373 = vadd.f32 %v2316, %v2358
        %v2374 = vadd.f32 %v2317, %v2359
        %v2375 = vadd.f32 %v2318, %v2352
        %s2376 = sld [smem:[#allocation9 + $0x202]]
        %v2377 = vstv %s2376
        %v2378 = vmul.f32 %v288, %v2377
        %v2379 = vmul.f32 %v289, %v2377
        %v2380 = vmul.f32 %v290, %v2377
        %v2381 = vmul.f32 %v291, %v2377
        %v2382 = vmul.f32 %v292, %v2377
        %v2383 = vmul.f32 %v293, %v2377
        %v2384 = vmul.f32 %v294, %v2377
        %v2385 = vmul.f32 %v295, %v2377
        %2394 = vrot.lane.b32.xlu0 %v2378, 126
        %v2395 = vpop.permute.xlu0 %2394
        %2396 = vrot.lane.b32.xlu0 %v2379, 126
        %v2397 = vpop.permute.xlu0 %2396
        %2398 = vrot.lane.b32.xlu0 %v2380, 126
        %v2399 = vpop.permute.xlu0 %2398
        %2400 = vrot.lane.b32.xlu0 %v2381, 126
        %v2401 = vpop.permute.xlu0 %2400
        %2402 = vrot.lane.b32.xlu0 %v2382, 126
        %v2403 = vpop.permute.xlu0 %2402
        %2404 = vrot.lane.b32.xlu0 %v2383, 126
        %v2405 = vpop.permute.xlu0 %2404
        %2406 = vrot.lane.b32.xlu0 %v2384, 126
        %v2407 = vpop.permute.xlu0 %2406
        %2408 = vrot.lane.b32.xlu0 %v2385, 126
        %v2409 = vpop.permute.xlu0 %2408
        %v2410 = vsel %vm527, %v2395, %v2397
        %v2411 = vsel %vm527, %v2397, %v2399
        %v2412 = vsel %vm527, %v2399, %v2401
        %v2413 = vsel %vm527, %v2401, %v2403
        %v2414 = vsel %vm527, %v2403, %v2405
        %v2415 = vsel %vm527, %v2405, %v2407
        %v2416 = vsel %vm527, %v2407, %v2409
        %v2425 = vadd.f32 %v2368, %v2410
        %v2426 = vadd.f32 %v2369, %v2411
        %v2427 = vadd.f32 %v2370, %v2412
        %v2428 = vadd.f32 %v2371, %v2413
        %v2429 = vadd.f32 %v2372, %v2414
        %v2430 = vadd.f32 %v2373, %v2415
        %v2431 = vadd.f32 %v2374, %v2416
        %v2432 = vadd.f32 %v2375, %v2409
        %s2433 = sld [smem:[#allocation9 + $0x203]]
        %v2434 = vstv %s2433
        %v2435 = vmul.f32 %v288, %v2434
        %v2436 = vmul.f32 %v289, %v2434
        %v2437 = vmul.f32 %v290, %v2434
        %v2438 = vmul.f32 %v291, %v2434
        %v2439 = vmul.f32 %v292, %v2434
        %v2440 = vmul.f32 %v293, %v2434
        %v2441 = vmul.f32 %v294, %v2434
        %v2442 = vmul.f32 %v295, %v2434
        %2451 = vrot.lane.b32.xlu0 %v2435, 125
        %v2452 = vpop.permute.xlu0 %2451
        %2453 = vrot.lane.b32.xlu0 %v2436, 125
        %v2454 = vpop.permute.xlu0 %2453
        %2455 = vrot.lane.b32.xlu0 %v2437, 125
        %v2456 = vpop.permute.xlu0 %2455
        %2457 = vrot.lane.b32.xlu0 %v2438, 125
        %v2458 = vpop.permute.xlu0 %2457
        %2459 = vrot.lane.b32.xlu0 %v2439, 125
        %v2460 = vpop.permute.xlu0 %2459
        %2461 = vrot.lane.b32.xlu0 %v2440, 125
        %v2462 = vpop.permute.xlu0 %2461
        %2463 = vrot.lane.b32.xlu0 %v2441, 125
        %v2464 = vpop.permute.xlu0 %2463
        %2465 = vrot.lane.b32.xlu0 %v2442, 125
        %v2466 = vpop.permute.xlu0 %2465
        %v2467 = vsel %vm585, %v2452, %v2454
        %v2468 = vsel %vm585, %v2454, %v2456
        %v2469 = vsel %vm585, %v2456, %v2458
        %v2470 = vsel %vm585, %v2458, %v2460
        %v2471 = vsel %vm585, %v2460, %v2462
        %v2472 = vsel %vm585, %v2462, %v2464
        %v2473 = vsel %vm585, %v2464, %v2466
        %v2482 = vadd.f32 %v2425, %v2467
        %v2483 = vadd.f32 %v2426, %v2468
        %v2484 = vadd.f32 %v2427, %v2469
        %v2485 = vadd.f32 %v2428, %v2470
        %v2486 = vadd.f32 %v2429, %v2471
        %v2487 = vadd.f32 %v2430, %v2472
        %v2488 = vadd.f32 %v2431, %v2473
        %v2489 = vadd.f32 %v2432, %v2466
        %s2490 = sld [smem:[#allocation9 + $0x204]]
        %v2491 = vstv %s2490
        %v2492 = vmul.f32 %v288, %v2491
        %v2493 = vmul.f32 %v289, %v2491
        %v2494 = vmul.f32 %v290, %v2491
        %v2495 = vmul.f32 %v291, %v2491
        %v2496 = vmul.f32 %v292, %v2491
        %v2497 = vmul.f32 %v293, %v2491
        %v2498 = vmul.f32 %v294, %v2491
        %v2499 = vmul.f32 %v295, %v2491
        %2508 = vrot.lane.b32.xlu0 %v2492, 124
        %v2509 = vpop.permute.xlu0 %2508
        %2510 = vrot.lane.b32.xlu0 %v2493, 124
        %v2511 = vpop.permute.xlu0 %2510
        %2512 = vrot.lane.b32.xlu0 %v2494, 124
        %v2513 = vpop.permute.xlu0 %2512
        %2514 = vrot.lane.b32.xlu0 %v2495, 124
        %v2515 = vpop.permute.xlu0 %2514
        %2516 = vrot.lane.b32.xlu0 %v2496, 124
        %v2517 = vpop.permute.xlu0 %2516
        %2518 = vrot.lane.b32.xlu0 %v2497, 124
        %v2519 = vpop.permute.xlu0 %2518
        %2520 = vrot.lane.b32.xlu0 %v2498, 124
        %v2521 = vpop.permute.xlu0 %2520
        %2522 = vrot.lane.b32.xlu0 %v2499, 124
        %v2523 = vpop.permute.xlu0 %2522
        %v2524 = vsel %vm643, %v2509, %v2511
        %v2525 = vsel %vm643, %v2511, %v2513
        %v2526 = vsel %vm643, %v2513, %v2515
        %v2527 = vsel %vm643, %v2515, %v2517
        %v2528 = vsel %vm643, %v2517, %v2519
        %v2529 = vsel %vm643, %v2519, %v2521
        %v2530 = vsel %vm643, %v2521, %v2523
        %v2539 = vadd.f32 %v2482, %v2524
        %v2540 = vadd.f32 %v2483, %v2525
        %v2541 = vadd.f32 %v2484, %v2526
        %v2542 = vadd.f32 %v2485, %v2527
        %v2543 = vadd.f32 %v2486, %v2528
        %v2544 = vadd.f32 %v2487, %v2529
        %v2545 = vadd.f32 %v2488, %v2530
        %v2546 = vadd.f32 %v2489, %v2523
        %s2547 = sld [smem:[#allocation10 + $0x4]]
        %v2548 = vstv %s2547
        %v2549 = vadd.f32 %v2539, %v2548
        %v2550 = vadd.f32 %v2540, %v2548
        %v2551 = vadd.f32 %v2541, %v2548
        %v2552 = vadd.f32 %v2542, %v2548
        %v2553 = vadd.f32 %v2543, %v2548
        %v2554 = vadd.f32 %v2544, %v2548
        %v2555 = vadd.f32 %v2545, %v2548
        %v2556 = vadd.f32 %v2546, %v2548
        %v2557 = vmax.f32 %v2549, 0.0
        %v2558 = vmax.f32 %v2550, 0.0
        %v2559 = vmax.f32 %v2551, 0.0
        %v2560 = vmax.f32 %v2552, 0.0
        %v2561 = vmax.f32 %v2553, 0.0
        %v2562 = vmax.f32 %v2554, 0.0
        %v2563 = vmax.f32 %v2555, 0.0
        %v2564 = vmax.f32 %v2556, 0.0
        %v2565 = vpack.c.bf16 %v2557, %v2557
        %v2566 = vpack.c.bf16 %v2558, %v2558
        %v2567 = vpack.c.bf16 %v2559, %v2559
        %v2568 = vpack.c.bf16 %v2560, %v2560
        %v2569 = vpack.c.bf16 %v2561, %v2561
        %v2570 = vpack.c.bf16 %v2562, %v2562
        %v2571 = vpack.c.bf16 %v2563, %v2563
        %v2572 = vpack.c.bf16 %v2564, %v2564
        %v2574 = vsel %vm1068, %v2572, 0
        %2576 = vmatpush.bf16.msra.mxu0 %v950
        %2577 = vmatpush.bf16.msra.mxu0 %v949
        %2578 = vmatpush.bf16.msra.mxu0 %v948
        %2579 = vmatpush.bf16.msra.mxu0 %v947
        %2580 = vmatpush.bf16.msra.mxu0 %v946
        %2581 = vmatpush.bf16.msra.mxu0 %v945
        %2582 = vmatpush.bf16.msra.mxu0 %v944
        %2583 = vmatpush.bf16.msra.mxu0 %v943
        %2584 = vmatmul.bf16.gmra.mxu0 %v2565
        %v2585 = vpop.f32.mrf.mxu0
        %v2586 = vadd.f32 0.0, %v2585
        %v2587 = vpop.f32.mrf.mxu0
        %2588 = vdwg.mxu0
        %2589 = vmatpush.bf16.msra.mxu0 %v958
        %2590 = vmatpush.bf16.msra.mxu0 %v957
        %2591 = vmatpush.bf16.msra.mxu0 %v956
        %2592 = vmatpush.bf16.msra.mxu0 %v955
        %2593 = vmatpush.bf16.msra.mxu0 %v954
        %2594 = vmatpush.bf16.msra.mxu0 %v953
        %2595 = vmatpush.bf16.msra.mxu0 %v952
        %2596 = vmatpush.bf16.msra.mxu0 %v951
        %2597 = vmatmul.bf16.gmra.mxu0 %v2566
        %v2598 = vpop.f32.mrf.mxu0
        %v2599 = vadd.f32 %v2586, %v2598
        %v2600 = vpop.f32.mrf.mxu0
        %2601 = vdwg.mxu0
        %2602 = vmatpush.bf16.msra.mxu0 %v966
        %2603 = vmatpush.bf16.msra.mxu0 %v965
        %2604 = vmatpush.bf16.msra.mxu0 %v964
        %2605 = vmatpush.bf16.msra.mxu0 %v963
        %2606 = vmatpush.bf16.msra.mxu0 %v962
        %2607 = vmatpush.bf16.msra.mxu0 %v961
        %2608 = vmatpush.bf16.msra.mxu0 %v960
        %2609 = vmatpush.bf16.msra.mxu0 %v959
        %2610 = vmatmul.bf16.gmra.mxu0 %v2567
        %v2611 = vpop.f32.mrf.mxu0
        %v2612 = vadd.f32 %v2599, %v2611
        %v2613 = vpop.f32.mrf.mxu0
        %2614 = vdwg.mxu0
        %2615 = vmatpush.bf16.msra.mxu0 %v974
        %2616 = vmatpush.bf16.msra.mxu0 %v973
        %2617 = vmatpush.bf16.msra.mxu0 %v972
        %2618 = vmatpush.bf16.msra.mxu0 %v971
        %2619 = vmatpush.bf16.msra.mxu0 %v970
        %2620 = vmatpush.bf16.msra.mxu0 %v969
        %2621 = vmatpush.bf16.msra.mxu0 %v968
        %2622 = vmatpush.bf16.msra.mxu0 %v967
        %2623 = vmatmul.bf16.gmra.mxu0 %v2568
        %v2624 = vpop.f32.mrf.mxu0
        %v2625 = vadd.f32 %v2612, %v2624
        %v2626 = vpop.f32.mrf.mxu0
        %2627 = vdwg.mxu0
        %2628 = vmatpush.bf16.msra.mxu0 %v982
        %2629 = vmatpush.bf16.msra.mxu0 %v981
        %2630 = vmatpush.bf16.msra.mxu0 %v980
        %2631 = vmatpush.bf16.msra.mxu0 %v979
        %2632 = vmatpush.bf16.msra.mxu0 %v978
        %2633 = vmatpush.bf16.msra.mxu0 %v977
        %2634 = vmatpush.bf16.msra.mxu0 %v976
        %2635 = vmatpush.bf16.msra.mxu0 %v975
        %2636 = vmatmul.bf16.gmra.mxu0 %v2569
        %v2637 = vpop.f32.mrf.mxu0
        %v2638 = vadd.f32 %v2625, %v2637
        %v2639 = vpop.f32.mrf.mxu0
        %2640 = vdwg.mxu0
        %2641 = vmatpush.bf16.msra.mxu0 %v990
        %2642 = vmatpush.bf16.msra.mxu0 %v989
        %2643 = vmatpush.bf16.msra.mxu0 %v988
        %2644 = vmatpush.bf16.msra.mxu0 %v987
        %2645 = vmatpush.bf16.msra.mxu0 %v986
        %2646 = vmatpush.bf16.msra.mxu0 %v985
        %2647 = vmatpush.bf16.msra.mxu0 %v984
        %2648 = vmatpush.bf16.msra.mxu0 %v983
        %2649 = vmatmul.bf16.gmra.mxu0 %v2570
        %v2650 = vpop.f32.mrf.mxu0
        %v2651 = vadd.f32 %v2638, %v2650
        %v2652 = vpop.f32.mrf.mxu0
        %2653 = vdwg.mxu0
        %2654 = vmatpush.bf16.msra.mxu0 %v998
        %2655 = vmatpush.bf16.msra.mxu0 %v997
        %2656 = vmatpush.bf16.msra.mxu0 %v996
        %2657 = vmatpush.bf16.msra.mxu0 %v995
        %2658 = vmatpush.bf16.msra.mxu0 %v994
        %2659 = vmatpush.bf16.msra.mxu0 %v993
        %2660 = vmatpush.bf16.msra.mxu0 %v992
        %2661 = vmatpush.bf16.msra.mxu0 %v991
        %2662 = vmatmul.bf16.gmra.mxu0 %v2571
        %v2663 = vpop.f32.mrf.mxu0
        %v2664 = vadd.f32 %v2651, %v2663
        %v2665 = vpop.f32.mrf.mxu0
        %2666 = vdwg.mxu0
        %2667 = vmatpush.bf16.msra.mxu0 0
        %2668 = vmatpush.bf16.msra.mxu0 %v1074
        %2669 = vmatpush.bf16.msra.mxu0 %v1004
        %2670 = vmatpush.bf16.msra.mxu0 %v1003
        %2671 = vmatpush.bf16.msra.mxu0 %v1002
        %2672 = vmatpush.bf16.msra.mxu0 %v1001
        %2673 = vmatpush.bf16.msra.mxu0 %v1000
        %2674 = vmatpush.bf16.msra.mxu0 %v999
        %2675 = vmatmul.bf16.gmra.mxu0 %v2574
        %v2676 = vpop.f32.mrf.mxu0
        %v2677 = vadd.f32 %v2664, %v2676
        %v2678 = vpop.f32.mrf.mxu0
        %2679 = vdwg.mxu0
        %2681 = vrot.lane.b32.xlu0 %v2677, 64
        %v2682 = vpop.permute.xlu0 %2681
        %v2684 = vadd.f32 %v2308, %v2682
        %s2685 = sld [smem:[#allocation9 + $0x280]]
        %v2686 = vstv %s2685
        %v2687 = vmul.f32 %v288, %v2686
        %v2688 = vmul.f32 %v289, %v2686
        %v2689 = vmul.f32 %v290, %v2686
        %v2690 = vmul.f32 %v291, %v2686
        %v2691 = vmul.f32 %v292, %v2686
        %v2692 = vmul.f32 %v293, %v2686
        %v2693 = vmul.f32 %v294, %v2686
        %v2694 = vmul.f32 %v295, %v2686
        %s2695 = sld [smem:[#allocation9 + $0x281]]
        %v2696 = vstv %s2695
        %v2697 = vmul.f32 %v288, %v2696
        %v2698 = vmul.f32 %v289, %v2696
        %v2699 = vmul.f32 %v290, %v2696
        %v2700 = vmul.f32 %v291, %v2696
        %v2701 = vmul.f32 %v292, %v2696
        %v2702 = vmul.f32 %v293, %v2696
        %v2703 = vmul.f32 %v294, %v2696
        %v2704 = vmul.f32 %v295, %v2696
        %2713 = vrot.lane.b32.xlu0 %v2697, 127
        %v2714 = vpop.permute.xlu0 %2713
        %2715 = vrot.lane.b32.xlu0 %v2698, 127
        %v2716 = vpop.permute.xlu0 %2715
        %2717 = vrot.lane.b32.xlu0 %v2699, 127
        %v2718 = vpop.permute.xlu0 %2717
        %2719 = vrot.lane.b32.xlu0 %v2700, 127
        %v2720 = vpop.permute.xlu0 %2719
        %2721 = vrot.lane.b32.xlu0 %v2701, 127
        %v2722 = vpop.permute.xlu0 %2721
        %2723 = vrot.lane.b32.xlu0 %v2702, 127
        %v2724 = vpop.permute.xlu0 %2723
        %2725 = vrot.lane.b32.xlu0 %v2703, 127
        %v2726 = vpop.permute.xlu0 %2725
        %2727 = vrot.lane.b32.xlu0 %v2704, 127
        %v2728 = vpop.permute.xlu0 %2727
        %v2729 = vsel %vm469, %v2714, %v2716
        %v2730 = vsel %vm469, %v2716, %v2718
        %v2731 = vsel %vm469, %v2718, %v2720
        %v2732 = vsel %vm469, %v2720, %v2722
        %v2733 = vsel %vm469, %v2722, %v2724
        %v2734 = vsel %vm469, %v2724, %v2726
        %v2735 = vsel %vm469, %v2726, %v2728
        %v2744 = vadd.f32 %v2687, %v2729
        %v2745 = vadd.f32 %v2688, %v2730
        %v2746 = vadd.f32 %v2689, %v2731
        %v2747 = vadd.f32 %v2690, %v2732
        %v2748 = vadd.f32 %v2691, %v2733
        %v2749 = vadd.f32 %v2692, %v2734
        %v2750 = vadd.f32 %v2693, %v2735
        %v2751 = vadd.f32 %v2694, %v2728
        %s2752 = sld [smem:[#allocation9 + $0x282]]
        %v2753 = vstv %s2752
        %v2754 = vmul.f32 %v288, %v2753
        %v2755 = vmul.f32 %v289, %v2753
        %v2756 = vmul.f32 %v290, %v2753
        %v2757 = vmul.f32 %v291, %v2753
        %v2758 = vmul.f32 %v292, %v2753
        %v2759 = vmul.f32 %v293, %v2753
        %v2760 = vmul.f32 %v294, %v2753
        %v2761 = vmul.f32 %v295, %v2753
        %2770 = vrot.lane.b32.xlu0 %v2754, 126
        %v2771 = vpop.permute.xlu0 %2770
        %2772 = vrot.lane.b32.xlu0 %v2755, 126
        %v2773 = vpop.permute.xlu0 %2772
        %2774 = vrot.lane.b32.xlu0 %v2756, 126
        %v2775 = vpop.permute.xlu0 %2774
        %2776 = vrot.lane.b32.xlu0 %v2757, 126
        %v2777 = vpop.permute.xlu0 %2776
        %2778 = vrot.lane.b32.xlu0 %v2758, 126
        %v2779 = vpop.permute.xlu0 %2778
        %2780 = vrot.lane.b32.xlu0 %v2759, 126
        %v2781 = vpop.permute.xlu0 %2780
        %2782 = vrot.lane.b32.xlu0 %v2760, 126
        %v2783 = vpop.permute.xlu0 %2782
        %2784 = vrot.lane.b32.xlu0 %v2761, 126
        %v2785 = vpop.permute.xlu0 %2784
        %v2786 = vsel %vm527, %v2771, %v2773
        %v2787 = vsel %vm527, %v2773, %v2775
        %v2788 = vsel %vm527, %v2775, %v2777
        %v2789 = vsel %vm527, %v2777, %v2779
        %v2790 = vsel %vm527, %v2779, %v2781
        %v2791 = vsel %vm527, %v2781, %v2783
        %v2792 = vsel %vm527, %v2783, %v2785
        %v2801 = vadd.f32 %v2744, %v2786
        %v2802 = vadd.f32 %v2745, %v2787
        %v2803 = vadd.f32 %v2746, %v2788
        %v2804 = vadd.f32 %v2747, %v2789
        %v2805 = vadd.f32 %v2748, %v2790
        %v2806 = vadd.f32 %v2749, %v2791
        %v2807 = vadd.f32 %v2750, %v2792
        %v2808 = vadd.f32 %v2751, %v2785
        %s2809 = sld [smem:[#allocation9 + $0x283]]
        %v2810 = vstv %s2809
        %v2811 = vmul.f32 %v288, %v2810
        %v2812 = vmul.f32 %v289, %v2810
        %v2813 = vmul.f32 %v290, %v2810
        %v2814 = vmul.f32 %v291, %v2810
        %v2815 = vmul.f32 %v292, %v2810
        %v2816 = vmul.f32 %v293, %v2810
        %v2817 = vmul.f32 %v294, %v2810
        %v2818 = vmul.f32 %v295, %v2810
        %2827 = vrot.lane.b32.xlu0 %v2811, 125
        %v2828 = vpop.permute.xlu0 %2827
        %2829 = vrot.lane.b32.xlu0 %v2812, 125
        %v2830 = vpop.permute.xlu0 %2829
        %2831 = vrot.lane.b32.xlu0 %v2813, 125
        %v2832 = vpop.permute.xlu0 %2831
        %2833 = vrot.lane.b32.xlu0 %v2814, 125
        %v2834 = vpop.permute.xlu0 %2833
        %2835 = vrot.lane.b32.xlu0 %v2815, 125
        %v2836 = vpop.permute.xlu0 %2835
        %2837 = vrot.lane.b32.xlu0 %v2816, 125
        %v2838 = vpop.permute.xlu0 %2837
        %2839 = vrot.lane.b32.xlu0 %v2817, 125
        %v2840 = vpop.permute.xlu0 %2839
        %2841 = vrot.lane.b32.xlu0 %v2818, 125
        %v2842 = vpop.permute.xlu0 %2841
        %v2843 = vsel %vm585, %v2828, %v2830
        %v2844 = vsel %vm585, %v2830, %v2832
        %v2845 = vsel %vm585, %v2832, %v2834
        %v2846 = vsel %vm585, %v2834, %v2836
        %v2847 = vsel %vm585, %v2836, %v2838
        %v2848 = vsel %vm585, %v2838, %v2840
        %v2849 = vsel %vm585, %v2840, %v2842
        %v2858 = vadd.f32 %v2801, %v2843
        %v2859 = vadd.f32 %v2802, %v2844
        %v2860 = vadd.f32 %v2803, %v2845
        %v2861 = vadd.f32 %v2804, %v2846
        %v2862 = vadd.f32 %v2805, %v2847
        %v2863 = vadd.f32 %v2806, %v2848
        %v2864 = vadd.f32 %v2807, %v2849
        %v2865 = vadd.f32 %v2808, %v2842
        %s2866 = sld [smem:[#allocation9 + $0x284]]
        %v2867 = vstv %s2866
        %v2868 = vmul.f32 %v288, %v2867
        %v2869 = vmul.f32 %v289, %v2867
        %v2870 = vmul.f32 %v290, %v2867
        %v2871 = vmul.f32 %v291, %v2867
        %v2872 = vmul.f32 %v292, %v2867
        %v2873 = vmul.f32 %v293, %v2867
        %v2874 = vmul.f32 %v294, %v2867
        %v2875 = vmul.f32 %v295, %v2867
        %2884 = vrot.lane.b32.xlu0 %v2868, 124
        %v2885 = vpop.permute.xlu0 %2884
        %2886 = vrot.lane.b32.xlu0 %v2869, 124
        %v2887 = vpop.permute.xlu0 %2886
        %2888 = vrot.lane.b32.xlu0 %v2870, 124
        %v2889 = vpop.permute.xlu0 %2888
        %2890 = vrot.lane.b32.xlu0 %v2871, 124
        %v2891 = vpop.permute.xlu0 %2890
        %2892 = vrot.lane.b32.xlu0 %v2872, 124
        %v2893 = vpop.permute.xlu0 %2892
        %2894 = vrot.lane.b32.xlu0 %v2873, 124
        %v2895 = vpop.permute.xlu0 %2894
        %2896 = vrot.lane.b32.xlu0 %v2874, 124
        %v2897 = vpop.permute.xlu0 %2896
        %2898 = vrot.lane.b32.xlu0 %v2875, 124
        %v2899 = vpop.permute.xlu0 %2898
        %v2900 = vsel %vm643, %v2885, %v2887
        %v2901 = vsel %vm643, %v2887, %v2889
        %v2902 = vsel %vm643, %v2889, %v2891
        %v2903 = vsel %vm643, %v2891, %v2893
        %v2904 = vsel %vm643, %v2893, %v2895
        %v2905 = vsel %vm643, %v2895, %v2897
        %v2906 = vsel %vm643, %v2897, %v2899
        %v2915 = vadd.f32 %v2858, %v2900
        %v2916 = vadd.f32 %v2859, %v2901
        %v2917 = vadd.f32 %v2860, %v2902
        %v2918 = vadd.f32 %v2861, %v2903
        %v2919 = vadd.f32 %v2862, %v2904
        %v2920 = vadd.f32 %v2863, %v2905
        %v2921 = vadd.f32 %v2864, %v2906
        %v2922 = vadd.f32 %v2865, %v2899
        %s2923 = sld [smem:[#allocation10 + $0x5]]
        %v2924 = vstv %s2923
        %v2925 = vadd.f32 %v2915, %v2924
        %v2926 = vadd.f32 %v2916, %v2924
        %v2927 = vadd.f32 %v2917, %v2924
        %v2928 = vadd.f32 %v2918, %v2924
        %v2929 = vadd.f32 %v2919, %v2924
        %v2930 = vadd.f32 %v2920, %v2924
        %v2931 = vadd.f32 %v2921, %v2924
        %v2932 = vadd.f32 %v2922, %v2924
        %v2933 = vmax.f32 %v2925, 0.0
        %v2934 = vmax.f32 %v2926, 0.0
        %v2935 = vmax.f32 %v2927, 0.0
        %v2936 = vmax.f32 %v2928, 0.0
        %v2937 = vmax.f32 %v2929, 0.0
        %v2938 = vmax.f32 %v2930, 0.0
        %v2939 = vmax.f32 %v2931, 0.0
        %v2940 = vmax.f32 %v2932, 0.0
        %v2941 = vpack.c.bf16 %v2933, %v2933
        %v2942 = vpack.c.bf16 %v2934, %v2934
        %v2943 = vpack.c.bf16 %v2935, %v2935
        %v2944 = vpack.c.bf16 %v2936, %v2936
        %v2945 = vpack.c.bf16 %v2937, %v2937
        %v2946 = vpack.c.bf16 %v2938, %v2938
        %v2947 = vpack.c.bf16 %v2939, %v2939
        %v2948 = vpack.c.bf16 %v2940, %v2940
        %v2950 = vsel %vm1068, %v2948, 0
        %2952 = vmatpush.bf16.msra.mxu0 %v950
        %2953 = vmatpush.bf16.msra.mxu0 %v949
        %2954 = vmatpush.bf16.msra.mxu0 %v948
        %2955 = vmatpush.bf16.msra.mxu0 %v947
        %2956 = vmatpush.bf16.msra.mxu0 %v946
        %2957 = vmatpush.bf16.msra.mxu0 %v945
        %2958 = vmatpush.bf16.msra.mxu0 %v944
        %2959 = vmatpush.bf16.msra.mxu0 %v943
        %2960 = vmatmul.bf16.gmra.mxu0 %v2941
        %v2961 = vpop.f32.mrf.mxu0
        %v2962 = vadd.f32 0.0, %v2961
        %v2963 = vpop.f32.mrf.mxu0
        %2964 = vdwg.mxu0
        %2965 = vmatpush.bf16.msra.mxu0 %v958
        %2966 = vmatpush.bf16.msra.mxu0 %v957
        %2967 = vmatpush.bf16.msra.mxu0 %v956
        %2968 = vmatpush.bf16.msra.mxu0 %v955
        %2969 = vmatpush.bf16.msra.mxu0 %v954
        %2970 = vmatpush.bf16.msra.mxu0 %v953
        %2971 = vmatpush.bf16.msra.mxu0 %v952
        %2972 = vmatpush.bf16.msra.mxu0 %v951
        %2973 = vmatmul.bf16.gmra.mxu0 %v2942
        %v2974 = vpop.f32.mrf.mxu0
        %v2975 = vadd.f32 %v2962, %v2974
        %v2976 = vpop.f32.mrf.mxu0
        %2977 = vdwg.mxu0
        %2978 = vmatpush.bf16.msra.mxu0 %v966
        %2979 = vmatpush.bf16.msra.mxu0 %v965
        %2980 = vmatpush.bf16.msra.mxu0 %v964
        %2981 = vmatpush.bf16.msra.mxu0 %v963
        %2982 = vmatpush.bf16.msra.mxu0 %v962
        %2983 = vmatpush.bf16.msra.mxu0 %v961
        %2984 = vmatpush.bf16.msra.mxu0 %v960
        %2985 = vmatpush.bf16.msra.mxu0 %v959
        %2986 = vmatmul.bf16.gmra.mxu0 %v2943
        %v2987 = vpop.f32.mrf.mxu0
        %v2988 = vadd.f32 %v2975, %v2987
        %v2989 = vpop.f32.mrf.mxu0
        %2990 = vdwg.mxu0
        %2991 = vmatpush.bf16.msra.mxu0 %v974
        %2992 = vmatpush.bf16.msra.mxu0 %v973
        %2993 = vmatpush.bf16.msra.mxu0 %v972
        %2994 = vmatpush.bf16.msra.mxu0 %v971
        %2995 = vmatpush.bf16.msra.mxu0 %v970
        %2996 = vmatpush.bf16.msra.mxu0 %v969
        %2997 = vmatpush.bf16.msra.mxu0 %v968
        %2998 = vmatpush.bf16.msra.mxu0 %v967
        %2999 = vmatmul.bf16.gmra.mxu0 %v2944
        %v3000 = vpop.f32.mrf.mxu0
        %v3001 = vadd.f32 %v2988, %v3000
        %v3002 = vpop.f32.mrf.mxu0
        %3003 = vdwg.mxu0
        %3004 = vmatpush.bf16.msra.mxu0 %v982
        %3005 = vmatpush.bf16.msra.mxu0 %v981
        %3006 = vmatpush.bf16.msra.mxu0 %v980
        %3007 = vmatpush.bf16.msra.mxu0 %v979
        %3008 = vmatpush.bf16.msra.mxu0 %v978
        %3009 = vmatpush.bf16.msra.mxu0 %v977
        %3010 = vmatpush.bf16.msra.mxu0 %v976
        %3011 = vmatpush.bf16.msra.mxu0 %v975
        %3012 = vmatmul.bf16.gmra.mxu0 %v2945
        %v3013 = vpop.f32.mrf.mxu0
        %v3014 = vadd.f32 %v3001, %v3013
        %v3015 = vpop.f32.mrf.mxu0
        %3016 = vdwg.mxu0
        %3017 = vmatpush.bf16.msra.mxu0 %v990
        %3018 = vmatpush.bf16.msra.mxu0 %v989
        %3019 = vmatpush.bf16.msra.mxu0 %v988
        %3020 = vmatpush.bf16.msra.mxu0 %v987
        %3021 = vmatpush.bf16.msra.mxu0 %v986
        %3022 = vmatpush.bf16.msra.mxu0 %v985
        %3023 = vmatpush.bf16.msra.mxu0 %v984
        %3024 = vmatpush.bf16.msra.mxu0 %v983
        %3025 = vmatmul.bf16.gmra.mxu0 %v2946
        %v3026 = vpop.f32.mrf.mxu0
        %v3027 = vadd.f32 %v3014, %v3026
        %v3028 = vpop.f32.mrf.mxu0
        %3029 = vdwg.mxu0
        %3030 = vmatpush.bf16.msra.mxu0 %v998
        %3031 = vmatpush.bf16.msra.mxu0 %v997
        %3032 = vmatpush.bf16.msra.mxu0 %v996
        %3033 = vmatpush.bf16.msra.mxu0 %v995
        %3034 = vmatpush.bf16.msra.mxu0 %v994
        %3035 = vmatpush.bf16.msra.mxu0 %v993
        %3036 = vmatpush.bf16.msra.mxu0 %v992
        %3037 = vmatpush.bf16.msra.mxu0 %v991
        %3038 = vmatmul.bf16.gmra.mxu0 %v2947
        %v3039 = vpop.f32.mrf.mxu0
        %v3040 = vadd.f32 %v3027, %v3039
        %v3041 = vpop.f32.mrf.mxu0
        %3042 = vdwg.mxu0
        %3043 = vmatpush.bf16.msra.mxu0 0
        %3044 = vmatpush.bf16.msra.mxu0 %v1074
        %3045 = vmatpush.bf16.msra.mxu0 %v1004
        %3046 = vmatpush.bf16.msra.mxu0 %v1003
        %3047 = vmatpush.bf16.msra.mxu0 %v1002
        %3048 = vmatpush.bf16.msra.mxu0 %v1001
        %3049 = vmatpush.bf16.msra.mxu0 %v1000
        %3050 = vmatpush.bf16.msra.mxu0 %v999
        %3051 = vmatmul.bf16.gmra.mxu0 %v2950
        %v3052 = vpop.f32.mrf.mxu0
        %v3053 = vadd.f32 %v3040, %v3052
        %v3054 = vpop.f32.mrf.mxu0
        %3055 = vdwg.mxu0
        %3057 = vrot.lane.b32.xlu0 %v3053, 48
        %v3058 = vpop.permute.xlu0 %3057
        %v3060 = vadd.f32 %v2684, %v3058
        %s3061 = sld [smem:[#allocation9 + $0x300]]
        %v3062 = vstv %s3061
        %v3063 = vmul.f32 %v288, %v3062
        %v3064 = vmul.f32 %v289, %v3062
        %v3065 = vmul.f32 %v290, %v3062
        %v3066 = vmul.f32 %v291, %v3062
        %v3067 = vmul.f32 %v292, %v3062
        %v3068 = vmul.f32 %v293, %v3062
        %v3069 = vmul.f32 %v294, %v3062
        %v3070 = vmul.f32 %v295, %v3062
        %s3071 = sld [smem:[#allocation9 + $0x301]]
        %v3072 = vstv %s3071
        %v3073 = vmul.f32 %v288, %v3072
        %v3074 = vmul.f32 %v289, %v3072
        %v3075 = vmul.f32 %v290, %v3072
        %v3076 = vmul.f32 %v291, %v3072
        %v3077 = vmul.f32 %v292, %v3072
        %v3078 = vmul.f32 %v293, %v3072
        %v3079 = vmul.f32 %v294, %v3072
        %v3080 = vmul.f32 %v295, %v3072
        %3089 = vrot.lane.b32.xlu0 %v3073, 127
        %v3090 = vpop.permute.xlu0 %3089
        %3091 = vrot.lane.b32.xlu0 %v3074, 127
        %v3092 = vpop.permute.xlu0 %3091
        %3093 = vrot.lane.b32.xlu0 %v3075, 127
        %v3094 = vpop.permute.xlu0 %3093
        %3095 = vrot.lane.b32.xlu0 %v3076, 127
        %v3096 = vpop.permute.xlu0 %3095
        %3097 = vrot.lane.b32.xlu0 %v3077, 127
        %v3098 = vpop.permute.xlu0 %3097
        %3099 = vrot.lane.b32.xlu0 %v3078, 127
        %v3100 = vpop.permute.xlu0 %3099
        %3101 = vrot.lane.b32.xlu0 %v3079, 127
        %v3102 = vpop.permute.xlu0 %3101
        %3103 = vrot.lane.b32.xlu0 %v3080, 127
        %v3104 = vpop.permute.xlu0 %3103
        %v3105 = vsel %vm469, %v3090, %v3092
        %v3106 = vsel %vm469, %v3092, %v3094
        %v3107 = vsel %vm469, %v3094, %v3096
        %v3108 = vsel %vm469, %v3096, %v3098
        %v3109 = vsel %vm469, %v3098, %v3100
        %v3110 = vsel %vm469, %v3100, %v3102
        %v3111 = vsel %vm469, %v3102, %v3104
        %v3120 = vadd.f32 %v3063, %v3105
        %v3121 = vadd.f32 %v3064, %v3106
        %v3122 = vadd.f32 %v3065, %v3107
        %v3123 = vadd.f32 %v3066, %v3108
        %v3124 = vadd.f32 %v3067, %v3109
        %v3125 = vadd.f32 %v3068, %v3110
        %v3126 = vadd.f32 %v3069, %v3111
        %v3127 = vadd.f32 %v3070, %v3104
        %s3128 = sld [smem:[#allocation9 + $0x302]]
        %v3129 = vstv %s3128
        %v3130 = vmul.f32 %v288, %v3129
        %v3131 = vmul.f32 %v289, %v3129
        %v3132 = vmul.f32 %v290, %v3129
        %v3133 = vmul.f32 %v291, %v3129
        %v3134 = vmul.f32 %v292, %v3129
        %v3135 = vmul.f32 %v293, %v3129
        %v3136 = vmul.f32 %v294, %v3129
        %v3137 = vmul.f32 %v295, %v3129
        %3146 = vrot.lane.b32.xlu0 %v3130, 126
        %v3147 = vpop.permute.xlu0 %3146
        %3148 = vrot.lane.b32.xlu0 %v3131, 126
        %v3149 = vpop.permute.xlu0 %3148
        %3150 = vrot.lane.b32.xlu0 %v3132, 126
        %v3151 = vpop.permute.xlu0 %3150
        %3152 = vrot.lane.b32.xlu0 %v3133, 126
        %v3153 = vpop.permute.xlu0 %3152
        %3154 = vrot.lane.b32.xlu0 %v3134, 126
        %v3155 = vpop.permute.xlu0 %3154
        %3156 = vrot.lane.b32.xlu0 %v3135, 126
        %v3157 = vpop.permute.xlu0 %3156
        %3158 = vrot.lane.b32.xlu0 %v3136, 126
        %v3159 = vpop.permute.xlu0 %3158
        %3160 = vrot.lane.b32.xlu0 %v3137, 126
        %v3161 = vpop.permute.xlu0 %3160
        %v3162 = vsel %vm527, %v3147, %v3149
        %v3163 = vsel %vm527, %v3149, %v3151
        %v3164 = vsel %vm527, %v3151, %v3153
        %v3165 = vsel %vm527, %v3153, %v3155
        %v3166 = vsel %vm527, %v3155, %v3157
        %v3167 = vsel %vm527, %v3157, %v3159
        %v3168 = vsel %vm527, %v3159, %v3161
        %v3177 = vadd.f32 %v3120, %v3162
        %v3178 = vadd.f32 %v3121, %v3163
        %v3179 = vadd.f32 %v3122, %v3164
        %v3180 = vadd.f32 %v3123, %v3165
        %v3181 = vadd.f32 %v3124, %v3166
        %v3182 = vadd.f32 %v3125, %v3167
        %v3183 = vadd.f32 %v3126, %v3168
        %v3184 = vadd.f32 %v3127, %v3161
        %s3185 = sld [smem:[#allocation9 + $0x303]]
        %v3186 = vstv %s3185
        %v3187 = vmul.f32 %v288, %v3186
        %v3188 = vmul.f32 %v289, %v3186
        %v3189 = vmul.f32 %v290, %v3186
        %v3190 = vmul.f32 %v291, %v3186
        %v3191 = vmul.f32 %v292, %v3186
        %v3192 = vmul.f32 %v293, %v3186
        %v3193 = vmul.f32 %v294, %v3186
        %v3194 = vmul.f32 %v295, %v3186
        %3203 = vrot.lane.b32.xlu0 %v3187, 125
        %v3204 = vpop.permute.xlu0 %3203
        %3205 = vrot.lane.b32.xlu0 %v3188, 125
        %v3206 = vpop.permute.xlu0 %3205
        %3207 = vrot.lane.b32.xlu0 %v3189, 125
        %v3208 = vpop.permute.xlu0 %3207
        %3209 = vrot.lane.b32.xlu0 %v3190, 125
        %v3210 = vpop.permute.xlu0 %3209
        %3211 = vrot.lane.b32.xlu0 %v3191, 125
        %v3212 = vpop.permute.xlu0 %3211
        %3213 = vrot.lane.b32.xlu0 %v3192, 125
        %v3214 = vpop.permute.xlu0 %3213
        %3215 = vrot.lane.b32.xlu0 %v3193, 125
        %v3216 = vpop.permute.xlu0 %3215
        %3217 = vrot.lane.b32.xlu0 %v3194, 125
        %v3218 = vpop.permute.xlu0 %3217
        %v3219 = vsel %vm585, %v3204, %v3206
        %v3220 = vsel %vm585, %v3206, %v3208
        %v3221 = vsel %vm585, %v3208, %v3210
        %v3222 = vsel %vm585, %v3210, %v3212
        %v3223 = vsel %vm585, %v3212, %v3214
        %v3224 = vsel %vm585, %v3214, %v3216
        %v3225 = vsel %vm585, %v3216, %v3218
        %v3234 = vadd.f32 %v3177, %v3219
        %v3235 = vadd.f32 %v3178, %v3220
        %v3236 = vadd.f32 %v3179, %v3221
        %v3237 = vadd.f32 %v3180, %v3222
        %v3238 = vadd.f32 %v3181, %v3223
        %v3239 = vadd.f32 %v3182, %v3224
        %v3240 = vadd.f32 %v3183, %v3225
        %v3241 = vadd.f32 %v3184, %v3218
        %s3242 = sld [smem:[#allocation9 + $0x304]]
        %v3243 = vstv %s3242
        %v3244 = vmul.f32 %v288, %v3243
        %v3245 = vmul.f32 %v289, %v3243
        %v3246 = vmul.f32 %v290, %v3243
        %v3247 = vmul.f32 %v291, %v3243
        %v3248 = vmul.f32 %v292, %v3243
        %v3249 = vmul.f32 %v293, %v3243
        %v3250 = vmul.f32 %v294, %v3243
        %v3251 = vmul.f32 %v295, %v3243
        %3260 = vrot.lane.b32.xlu0 %v3244, 124
        %v3261 = vpop.permute.xlu0 %3260
        %3262 = vrot.lane.b32.xlu0 %v3245, 124
        %v3263 = vpop.permute.xlu0 %3262
        %3264 = vrot.lane.b32.xlu0 %v3246, 124
        %v3265 = vpop.permute.xlu0 %3264
        %3266 = vrot.lane.b32.xlu0 %v3247, 124
        %v3267 = vpop.permute.xlu0 %3266
        %3268 = vrot.lane.b32.xlu0 %v3248, 124
        %v3269 = vpop.permute.xlu0 %3268
        %3270 = vrot.lane.b32.xlu0 %v3249, 124
        %v3271 = vpop.permute.xlu0 %3270
        %3272 = vrot.lane.b32.xlu0 %v3250, 124
        %v3273 = vpop.permute.xlu0 %3272
        %3274 = vrot.lane.b32.xlu0 %v3251, 124
        %v3275 = vpop.permute.xlu0 %3274
        %v3276 = vsel %vm643, %v3261, %v3263
        %v3277 = vsel %vm643, %v3263, %v3265
        %v3278 = vsel %vm643, %v3265, %v3267
        %v3279 = vsel %vm643, %v3267, %v3269
        %v3280 = vsel %vm643, %v3269, %v3271
        %v3281 = vsel %vm643, %v3271, %v3273
        %v3282 = vsel %vm643, %v3273, %v3275
        %v3291 = vadd.f32 %v3234, %v3276
        %v3292 = vadd.f32 %v3235, %v3277
        %v3293 = vadd.f32 %v3236, %v3278
        %v3294 = vadd.f32 %v3237, %v3279
        %v3295 = vadd.f32 %v3238, %v3280
        %v3296 = vadd.f32 %v3239, %v3281
        %v3297 = vadd.f32 %v3240, %v3282
        %v3298 = vadd.f32 %v3241, %v3275
        %s3299 = sld [smem:[#allocation10 + $0x6]]
        %v3300 = vstv %s3299
        %v3301 = vadd.f32 %v3291, %v3300
        %v3302 = vadd.f32 %v3292, %v3300
        %v3303 = vadd.f32 %v3293, %v3300
        %v3304 = vadd.f32 %v3294, %v3300
        %v3305 = vadd.f32 %v3295, %v3300
        %v3306 = vadd.f32 %v3296, %v3300
        %v3307 = vadd.f32 %v3297, %v3300
        %v3308 = vadd.f32 %v3298, %v3300
        %v3309 = vmax.f32 %v3301, 0.0
        %v3310 = vmax.f32 %v3302, 0.0
        %v3311 = vmax.f32 %v3303, 0.0
        %v3312 = vmax.f32 %v3304, 0.0
        %v3313 = vmax.f32 %v3305, 0.0
        %v3314 = vmax.f32 %v3306, 0.0
        %v3315 = vmax.f32 %v3307, 0.0
        %v3316 = vmax.f32 %v3308, 0.0
        %v3317 = vpack.c.bf16 %v3309, %v3309
        %v3318 = vpack.c.bf16 %v3310, %v3310
        %v3319 = vpack.c.bf16 %v3311, %v3311
        %v3320 = vpack.c.bf16 %v3312, %v3312
        %v3321 = vpack.c.bf16 %v3313, %v3313
        %v3322 = vpack.c.bf16 %v3314, %v3314
        %v3323 = vpack.c.bf16 %v3315, %v3315
        %v3324 = vpack.c.bf16 %v3316, %v3316
        %v3326 = vsel %vm1068, %v3324, 0
        %3328 = vmatpush.bf16.msra.mxu0 %v950
        %3329 = vmatpush.bf16.msra.mxu0 %v949
        %3330 = vmatpush.bf16.msra.mxu0 %v948
        %3331 = vmatpush.bf16.msra.mxu0 %v947
        %3332 = vmatpush.bf16.msra.mxu0 %v946
        %3333 = vmatpush.bf16.msra.mxu0 %v945
        %3334 = vmatpush.bf16.msra.mxu0 %v944
        %3335 = vmatpush.bf16.msra.mxu0 %v943
        %3336 = vmatmul.bf16.gmra.mxu0 %v3317
        %v3337 = vpop.f32.mrf.mxu0
        %v3338 = vadd.f32 0.0, %v3337
        %v3339 = vpop.f32.mrf.mxu0
        %3340 = vdwg.mxu0
        %3341 = vmatpush.bf16.msra.mxu0 %v958
        %3342 = vmatpush.bf16.msra.mxu0 %v957
        %3343 = vmatpush.bf16.msra.mxu0 %v956
        %3344 = vmatpush.bf16.msra.mxu0 %v955
        %3345 = vmatpush.bf16.msra.mxu0 %v954
        %3346 = vmatpush.bf16.msra.mxu0 %v953
        %3347 = vmatpush.bf16.msra.mxu0 %v952
        %3348 = vmatpush.bf16.msra.mxu0 %v951
        %3349 = vmatmul.bf16.gmra.mxu0 %v3318
        %v3350 = vpop.f32.mrf.mxu0
        %v3351 = vadd.f32 %v3338, %v3350
        %v3352 = vpop.f32.mrf.mxu0
        %3353 = vdwg.mxu0
        %3354 = vmatpush.bf16.msra.mxu0 %v966
        %3355 = vmatpush.bf16.msra.mxu0 %v965
        %3356 = vmatpush.bf16.msra.mxu0 %v964
        %3357 = vmatpush.bf16.msra.mxu0 %v963
        %3358 = vmatpush.bf16.msra.mxu0 %v962
        %3359 = vmatpush.bf16.msra.mxu0 %v961
        %3360 = vmatpush.bf16.msra.mxu0 %v960
        %3361 = vmatpush.bf16.msra.mxu0 %v959
        %3362 = vmatmul.bf16.gmra.mxu0 %v3319
        %v3363 = vpop.f32.mrf.mxu0
        %v3364 = vadd.f32 %v3351, %v3363
        %v3365 = vpop.f32.mrf.mxu0
        %3366 = vdwg.mxu0
        %3367 = vmatpush.bf16.msra.mxu0 %v974
        %3368 = vmatpush.bf16.msra.mxu0 %v973
        %3369 = vmatpush.bf16.msra.mxu0 %v972
        %3370 = vmatpush.bf16.msra.mxu0 %v971
        %3371 = vmatpush.bf16.msra.mxu0 %v970
        %3372 = vmatpush.bf16.msra.mxu0 %v969
        %3373 = vmatpush.bf16.msra.mxu0 %v968
        %3374 = vmatpush.bf16.msra.mxu0 %v967
        %3375 = vmatmul.bf16.gmra.mxu0 %v3320
        %v3376 = vpop.f32.mrf.mxu0
        %v3377 = vadd.f32 %v3364, %v3376
        %v3378 = vpop.f32.mrf.mxu0
        %3379 = vdwg.mxu0
        %3380 = vmatpush.bf16.msra.mxu0 %v982
        %3381 = vmatpush.bf16.msra.mxu0 %v981
        %3382 = vmatpush.bf16.msra.mxu0 %v980
        %3383 = vmatpush.bf16.msra.mxu0 %v979
        %3384 = vmatpush.bf16.msra.mxu0 %v978
        %3385 = vmatpush.bf16.msra.mxu0 %v977
        %3386 = vmatpush.bf16.msra.mxu0 %v976
        %3387 = vmatpush.bf16.msra.mxu0 %v975
        %3388 = vmatmul.bf16.gmra.mxu0 %v3321
        %v3389 = vpop.f32.mrf.mxu0
        %v3390 = vadd.f32 %v3377, %v3389
        %v3391 = vpop.f32.mrf.mxu0
        %3392 = vdwg.mxu0
        %3393 = vmatpush.bf16.msra.mxu0 %v990
        %3394 = vmatpush.bf16.msra.mxu0 %v989
        %3395 = vmatpush.bf16.msra.mxu0 %v988
        %3396 = vmatpush.bf16.msra.mxu0 %v987
        %3397 = vmatpush.bf16.msra.mxu0 %v986
        %3398 = vmatpush.bf16.msra.mxu0 %v985
        %3399 = vmatpush.bf16.msra.mxu0 %v984
        %3400 = vmatpush.bf16.msra.mxu0 %v983
        %3401 = vmatmul.bf16.gmra.mxu0 %v3322
        %v3402 = vpop.f32.mrf.mxu0
        %v3403 = vadd.f32 %v3390, %v3402
        %v3404 = vpop.f32.mrf.mxu0
        %3405 = vdwg.mxu0
        %3406 = vmatpush.bf16.msra.mxu0 %v998
        %3407 = vmatpush.bf16.msra.mxu0 %v997
        %3408 = vmatpush.bf16.msra.mxu0 %v996
        %3409 = vmatpush.bf16.msra.mxu0 %v995
        %3410 = vmatpush.bf16.msra.mxu0 %v994
        %3411 = vmatpush.bf16.msra.mxu0 %v993
        %3412 = vmatpush.bf16.msra.mxu0 %v992
        %3413 = vmatpush.bf16.msra.mxu0 %v991
        %3414 = vmatmul.bf16.gmra.mxu0 %v3323
        %v3415 = vpop.f32.mrf.mxu0
        %v3416 = vadd.f32 %v3403, %v3415
        %v3417 = vpop.f32.mrf.mxu0
        %3418 = vdwg.mxu0
        %3419 = vmatpush.bf16.msra.mxu0 0
        %3420 = vmatpush.bf16.msra.mxu0 %v1074
        %3421 = vmatpush.bf16.msra.mxu0 %v1004
        %3422 = vmatpush.bf16.msra.mxu0 %v1003
        %3423 = vmatpush.bf16.msra.mxu0 %v1002
        %3424 = vmatpush.bf16.msra.mxu0 %v1001
        %3425 = vmatpush.bf16.msra.mxu0 %v1000
        %3426 = vmatpush.bf16.msra.mxu0 %v999
        %3427 = vmatmul.bf16.gmra.mxu0 %v3326
        %v3428 = vpop.f32.mrf.mxu0
        %v3429 = vadd.f32 %v3416, %v3428
        %v3430 = vpop.f32.mrf.mxu0
        %3431 = vdwg.mxu0
        %3433 = vrot.lane.b32.xlu0 %v3429, 32
        %v3434 = vpop.permute.xlu0 %3433
        %v3436 = vadd.f32 %v3060, %v3434
        %s3437 = sld [smem:[#allocation9 + $0x380]]
        %v3438 = vstv %s3437
        %v3439 = vmul.f32 %v288, %v3438
        %v3440 = vmul.f32 %v289, %v3438
        %v3441 = vmul.f32 %v290, %v3438
        %v3442 = vmul.f32 %v291, %v3438
        %v3443 = vmul.f32 %v292, %v3438
        %v3444 = vmul.f32 %v293, %v3438
        %v3445 = vmul.f32 %v294, %v3438
        %v3446 = vmul.f32 %v295, %v3438
        %s3447 = sld [smem:[#allocation9 + $0x381]]
        %v3448 = vstv %s3447
        %v3449 = vmul.f32 %v288, %v3448
        %v3450 = vmul.f32 %v289, %v3448
        %v3451 = vmul.f32 %v290, %v3448
        %v3452 = vmul.f32 %v291, %v3448
        %v3453 = vmul.f32 %v292, %v3448
        %v3454 = vmul.f32 %v293, %v3448
        %v3455 = vmul.f32 %v294, %v3448
        %v3456 = vmul.f32 %v295, %v3448
        %3465 = vrot.lane.b32.xlu0 %v3449, 127
        %v3466 = vpop.permute.xlu0 %3465
        %3467 = vrot.lane.b32.xlu0 %v3450, 127
        %v3468 = vpop.permute.xlu0 %3467
        %3469 = vrot.lane.b32.xlu0 %v3451, 127
        %v3470 = vpop.permute.xlu0 %3469
        %3471 = vrot.lane.b32.xlu0 %v3452, 127
        %v3472 = vpop.permute.xlu0 %3471
        %3473 = vrot.lane.b32.xlu0 %v3453, 127
        %v3474 = vpop.permute.xlu0 %3473
        %3475 = vrot.lane.b32.xlu0 %v3454, 127
        %v3476 = vpop.permute.xlu0 %3475
        %3477 = vrot.lane.b32.xlu0 %v3455, 127
        %v3478 = vpop.permute.xlu0 %3477
        %3479 = vrot.lane.b32.xlu0 %v3456, 127
        %v3480 = vpop.permute.xlu0 %3479
        %v3481 = vsel %vm469, %v3466, %v3468
        %v3482 = vsel %vm469, %v3468, %v3470
        %v3483 = vsel %vm469, %v3470, %v3472
        %v3484 = vsel %vm469, %v3472, %v3474
        %v3485 = vsel %vm469, %v3474, %v3476
        %v3486 = vsel %vm469, %v3476, %v3478
        %v3487 = vsel %vm469, %v3478, %v3480
        %v3496 = vadd.f32 %v3439, %v3481
        %v3497 = vadd.f32 %v3440, %v3482
        %v3498 = vadd.f32 %v3441, %v3483
        %v3499 = vadd.f32 %v3442, %v3484
        %v3500 = vadd.f32 %v3443, %v3485
        %v3501 = vadd.f32 %v3444, %v3486
        %v3502 = vadd.f32 %v3445, %v3487
        %v3503 = vadd.f32 %v3446, %v3480
        %s3504 = sld [smem:[#allocation9 + $0x382]]
        %v3505 = vstv %s3504
        %v3506 = vmul.f32 %v288, %v3505
        %v3507 = vmul.f32 %v289, %v3505
        %v3508 = vmul.f32 %v290, %v3505
        %v3509 = vmul.f32 %v291, %v3505
        %v3510 = vmul.f32 %v292, %v3505
        %v3511 = vmul.f32 %v293, %v3505
        %v3512 = vmul.f32 %v294, %v3505
        %v3513 = vmul.f32 %v295, %v3505
        %3522 = vrot.lane.b32.xlu0 %v3506, 126
        %v3523 = vpop.permute.xlu0 %3522
        %3524 = vrot.lane.b32.xlu0 %v3507, 126
        %v3525 = vpop.permute.xlu0 %3524
        %3526 = vrot.lane.b32.xlu0 %v3508, 126
        %v3527 = vpop.permute.xlu0 %3526
        %3528 = vrot.lane.b32.xlu0 %v3509, 126
        %v3529 = vpop.permute.xlu0 %3528
        %3530 = vrot.lane.b32.xlu0 %v3510, 126
        %v3531 = vpop.permute.xlu0 %3530
        %3532 = vrot.lane.b32.xlu0 %v3511, 126
        %v3533 = vpop.permute.xlu0 %3532
        %3534 = vrot.lane.b32.xlu0 %v3512, 126
        %v3535 = vpop.permute.xlu0 %3534
        %3536 = vrot.lane.b32.xlu0 %v3513, 126
        %v3537 = vpop.permute.xlu0 %3536
        %v3538 = vsel %vm527, %v3523, %v3525
        %v3539 = vsel %vm527, %v3525, %v3527
        %v3540 = vsel %vm527, %v3527, %v3529
        %v3541 = vsel %vm527, %v3529, %v3531
        %v3542 = vsel %vm527, %v3531, %v3533
        %v3543 = vsel %vm527, %v3533, %v3535
        %v3544 = vsel %vm527, %v3535, %v3537
        %v3553 = vadd.f32 %v3496, %v3538
        %v3554 = vadd.f32 %v3497, %v3539
        %v3555 = vadd.f32 %v3498, %v3540
        %v3556 = vadd.f32 %v3499, %v3541
        %v3557 = vadd.f32 %v3500, %v3542
        %v3558 = vadd.f32 %v3501, %v3543
        %v3559 = vadd.f32 %v3502, %v3544
        %v3560 = vadd.f32 %v3503, %v3537
        %s3561 = sld [smem:[#allocation9 + $0x383]]
        %v3562 = vstv %s3561
        %v3563 = vmul.f32 %v288, %v3562
        %v3564 = vmul.f32 %v289, %v3562
        %v3565 = vmul.f32 %v290, %v3562
        %v3566 = vmul.f32 %v291, %v3562
        %v3567 = vmul.f32 %v292, %v3562
        %v3568 = vmul.f32 %v293, %v3562
        %v3569 = vmul.f32 %v294, %v3562
        %v3570 = vmul.f32 %v295, %v3562
        %3579 = vrot.lane.b32.xlu0 %v3563, 125
        %v3580 = vpop.permute.xlu0 %3579
        %3581 = vrot.lane.b32.xlu0 %v3564, 125
        %v3582 = vpop.permute.xlu0 %3581
        %3583 = vrot.lane.b32.xlu0 %v3565, 125
        %v3584 = vpop.permute.xlu0 %3583
        %3585 = vrot.lane.b32.xlu0 %v3566, 125
        %v3586 = vpop.permute.xlu0 %3585
        %3587 = vrot.lane.b32.xlu0 %v3567, 125
        %v3588 = vpop.permute.xlu0 %3587
        %3589 = vrot.lane.b32.xlu0 %v3568, 125
        %v3590 = vpop.permute.xlu0 %3589
        %3591 = vrot.lane.b32.xlu0 %v3569, 125
        %v3592 = vpop.permute.xlu0 %3591
        %3593 = vrot.lane.b32.xlu0 %v3570, 125
        %v3594 = vpop.permute.xlu0 %3593
        %v3595 = vsel %vm585, %v3580, %v3582
        %v3596 = vsel %vm585, %v3582, %v3584
        %v3597 = vsel %vm585, %v3584, %v3586
        %v3598 = vsel %vm585, %v3586, %v3588
        %v3599 = vsel %vm585, %v3588, %v3590
        %v3600 = vsel %vm585, %v3590, %v3592
        %v3601 = vsel %vm585, %v3592, %v3594
        %v3610 = vadd.f32 %v3553, %v3595
        %v3611 = vadd.f32 %v3554, %v3596
        %v3612 = vadd.f32 %v3555, %v3597
        %v3613 = vadd.f32 %v3556, %v3598
        %v3614 = vadd.f32 %v3557, %v3599
        %v3615 = vadd.f32 %v3558, %v3600
        %v3616 = vadd.f32 %v3559, %v3601
        %v3617 = vadd.f32 %v3560, %v3594
        %s3618 = sld [smem:[#allocation9 + $0x384]]
        %v3619 = vstv %s3618
        %v3620 = vmul.f32 %v288, %v3619
        %v3621 = vmul.f32 %v289, %v3619
        %v3622 = vmul.f32 %v290, %v3619
        %v3623 = vmul.f32 %v291, %v3619
        %v3624 = vmul.f32 %v292, %v3619
        %v3625 = vmul.f32 %v293, %v3619
        %v3626 = vmul.f32 %v294, %v3619
        %v3627 = vmul.f32 %v295, %v3619
        %3636 = vrot.lane.b32.xlu0 %v3620, 124
        %v3637 = vpop.permute.xlu0 %3636
        %3638 = vrot.lane.b32.xlu0 %v3621, 124
        %v3639 = vpop.permute.xlu0 %3638
        %3640 = vrot.lane.b32.xlu0 %v3622, 124
        %v3641 = vpop.permute.xlu0 %3640
        %3642 = vrot.lane.b32.xlu0 %v3623, 124
        %v3643 = vpop.permute.xlu0 %3642
        %3644 = vrot.lane.b32.xlu0 %v3624, 124
        %v3645 = vpop.permute.xlu0 %3644
        %3646 = vrot.lane.b32.xlu0 %v3625, 124
        %v3647 = vpop.permute.xlu0 %3646
        %3648 = vrot.lane.b32.xlu0 %v3626, 124
        %v3649 = vpop.permute.xlu0 %3648
        %3650 = vrot.lane.b32.xlu0 %v3627, 124
        %v3651 = vpop.permute.xlu0 %3650
        %v3652 = vsel %vm643, %v3637, %v3639
        %v3653 = vsel %vm643, %v3639, %v3641
        %v3654 = vsel %vm643, %v3641, %v3643
        %v3655 = vsel %vm643, %v3643, %v3645
        %v3656 = vsel %vm643, %v3645, %v3647
        %v3657 = vsel %vm643, %v3647, %v3649
        %v3658 = vsel %vm643, %v3649, %v3651
        %v3667 = vadd.f32 %v3610, %v3652
        %v3668 = vadd.f32 %v3611, %v3653
        %v3669 = vadd.f32 %v3612, %v3654
        %v3670 = vadd.f32 %v3613, %v3655
        %v3671 = vadd.f32 %v3614, %v3656
        %v3672 = vadd.f32 %v3615, %v3657
        %v3673 = vadd.f32 %v3616, %v3658
        %v3674 = vadd.f32 %v3617, %v3651
        %s3675 = sld [smem:[#allocation10 + $0x7]]
        %v3676 = vstv %s3675
        %v3677 = vadd.f32 %v3667, %v3676
        %v3678 = vadd.f32 %v3668, %v3676
        %v3679 = vadd.f32 %v3669, %v3676
        %v3680 = vadd.f32 %v3670, %v3676
        %v3681 = vadd.f32 %v3671, %v3676
        %v3682 = vadd.f32 %v3672, %v3676
        %v3683 = vadd.f32 %v3673, %v3676
        %v3684 = vadd.f32 %v3674, %v3676
        %v3685 = vmax.f32 %v3677, 0.0
        %v3686 = vmax.f32 %v3678, 0.0
        %v3687 = vmax.f32 %v3679, 0.0
        %v3688 = vmax.f32 %v3680, 0.0
        %v3689 = vmax.f32 %v3681, 0.0
        %v3690 = vmax.f32 %v3682, 0.0
        %v3691 = vmax.f32 %v3683, 0.0
        %v3692 = vmax.f32 %v3684, 0.0
        %v3693 = vpack.c.bf16 %v3685, %v3685
        %v3694 = vpack.c.bf16 %v3686, %v3686
        %v3695 = vpack.c.bf16 %v3687, %v3687
        %v3696 = vpack.c.bf16 %v3688, %v3688
        %v3697 = vpack.c.bf16 %v3689, %v3689
        %v3698 = vpack.c.bf16 %v3690, %v3690
        %v3699 = vpack.c.bf16 %v3691, %v3691
        %v3700 = vpack.c.bf16 %v3692, %v3692
        %v3702 = vsel %vm1068, %v3700, 0
        %3704 = vmatpush.bf16.msra.mxu0 %v950
        %3705 = vmatpush.bf16.msra.mxu0 %v949
        %3706 = vmatpush.bf16.msra.mxu0 %v948
        %3707 = vmatpush.bf16.msra.mxu0 %v947
        %3708 = vmatpush.bf16.msra.mxu0 %v946
        %3709 = vmatpush.bf16.msra.mxu0 %v945
        %3710 = vmatpush.bf16.msra.mxu0 %v944
        %3711 = vmatpush.bf16.msra.mxu0 %v943
        %3712 = vmatmul.bf16.gmra.mxu0 %v3693
        %v3713 = vpop.f32.mrf.mxu0
        %v3714 = vadd.f32 0.0, %v3713
        %v3715 = vpop.f32.mrf.mxu0
        %3716 = vdwg.mxu0
        %3717 = vmatpush.bf16.msra.mxu0 %v958
        %3718 = vmatpush.bf16.msra.mxu0 %v957
        %3719 = vmatpush.bf16.msra.mxu0 %v956
        %3720 = vmatpush.bf16.msra.mxu0 %v955
        %3721 = vmatpush.bf16.msra.mxu0 %v954
        %3722 = vmatpush.bf16.msra.mxu0 %v953
        %3723 = vmatpush.bf16.msra.mxu0 %v952
        %3724 = vmatpush.bf16.msra.mxu0 %v951
        %3725 = vmatmul.bf16.gmra.mxu0 %v3694
        %v3726 = vpop.f32.mrf.mxu0
        %v3727 = vadd.f32 %v3714, %v3726
        %v3728 = vpop.f32.mrf.mxu0
        %3729 = vdwg.mxu0
        %3730 = vmatpush.bf16.msra.mxu0 %v966
        %3731 = vmatpush.bf16.msra.mxu0 %v965
        %3732 = vmatpush.bf16.msra.mxu0 %v964
        %3733 = vmatpush.bf16.msra.mxu0 %v963
        %3734 = vmatpush.bf16.msra.mxu0 %v962
        %3735 = vmatpush.bf16.msra.mxu0 %v961
        %3736 = vmatpush.bf16.msra.mxu0 %v960
        %3737 = vmatpush.bf16.msra.mxu0 %v959
        %3738 = vmatmul.bf16.gmra.mxu0 %v3695
        %v3739 = vpop.f32.mrf.mxu0
        %v3740 = vadd.f32 %v3727, %v3739
        %v3741 = vpop.f32.mrf.mxu0
        %3742 = vdwg.mxu0
        %3743 = vmatpush.bf16.msra.mxu0 %v974
        %3744 = vmatpush.bf16.msra.mxu0 %v973
        %3745 = vmatpush.bf16.msra.mxu0 %v972
        %3746 = vmatpush.bf16.msra.mxu0 %v971
        %3747 = vmatpush.bf16.msra.mxu0 %v970
        %3748 = vmatpush.bf16.msra.mxu0 %v969
        %3749 = vmatpush.bf16.msra.mxu0 %v968
        %3750 = vmatpush.bf16.msra.mxu0 %v967
        %3751 = vmatmul.bf16.gmra.mxu0 %v3696
        %v3752 = vpop.f32.mrf.mxu0
        %v3753 = vadd.f32 %v3740, %v3752
        %v3754 = vpop.f32.mrf.mxu0
        %3755 = vdwg.mxu0
        %3756 = vmatpush.bf16.msra.mxu0 %v982
        %3757 = vmatpush.bf16.msra.mxu0 %v981
        %3758 = vmatpush.bf16.msra.mxu0 %v980
        %3759 = vmatpush.bf16.msra.mxu0 %v979
        %3760 = vmatpush.bf16.msra.mxu0 %v978
        %3761 = vmatpush.bf16.msra.mxu0 %v977
        %3762 = vmatpush.bf16.msra.mxu0 %v976
        %3763 = vmatpush.bf16.msra.mxu0 %v975
        %3764 = vmatmul.bf16.gmra.mxu0 %v3697
        %v3765 = vpop.f32.mrf.mxu0
        %v3766 = vadd.f32 %v3753, %v3765
        %v3767 = vpop.f32.mrf.mxu0
        %3768 = vdwg.mxu0
        %3769 = vmatpush.bf16.msra.mxu0 %v990
        %3770 = vmatpush.bf16.msra.mxu0 %v989
        %3771 = vmatpush.bf16.msra.mxu0 %v988
        %3772 = vmatpush.bf16.msra.mxu0 %v987
        %3773 = vmatpush.bf16.msra.mxu0 %v986
        %3774 = vmatpush.bf16.msra.mxu0 %v985
        %3775 = vmatpush.bf16.msra.mxu0 %v984
        %3776 = vmatpush.bf16.msra.mxu0 %v983
        %3777 = vmatmul.bf16.gmra.mxu0 %v3698
        %v3778 = vpop.f32.mrf.mxu0
        %v3779 = vadd.f32 %v3766, %v3778
        %v3780 = vpop.f32.mrf.mxu0
        %3781 = vdwg.mxu0
        %3782 = vmatpush.bf16.msra.mxu0 %v998
        %3783 = vmatpush.bf16.msra.mxu0 %v997
        %3784 = vmatpush.bf16.msra.mxu0 %v996
        %3785 = vmatpush.bf16.msra.mxu0 %v995
        %3786 = vmatpush.bf16.msra.mxu0 %v994
        %3787 = vmatpush.bf16.msra.mxu0 %v993
        %3788 = vmatpush.bf16.msra.mxu0 %v992
        %3789 = vmatpush.bf16.msra.mxu0 %v991
        %3790 = vmatmul.bf16.gmra.mxu0 %v3699
        %v3791 = vpop.f32.mrf.mxu0
        %v3792 = vadd.f32 %v3779, %v3791
        %v3793 = vpop.f32.mrf.mxu0
        %3794 = vdwg.mxu0
        %3795 = vmatpush.bf16.msra.mxu0 0
        %3796 = vmatpush.bf16.msra.mxu0 %v1074
        %3797 = vmatpush.bf16.msra.mxu0 %v1004
        %3798 = vmatpush.bf16.msra.mxu0 %v1003
        %3799 = vmatpush.bf16.msra.mxu0 %v1002
        %3800 = vmatpush.bf16.msra.mxu0 %v1001
        %3801 = vmatpush.bf16.msra.mxu0 %v1000
        %3802 = vmatpush.bf16.msra.mxu0 %v999
        %3803 = vmatmul.bf16.gmra.mxu0 %v3702
        %v3804 = vpop.f32.mrf.mxu0
        %v3805 = vadd.f32 %v3792, %v3804
        %v3806 = vpop.f32.mrf.mxu0
        %3807 = vdwg.mxu0
        %3809 = vrot.lane.b32.xlu0 %v3805, 16
        %v3810 = vpop.permute.xlu0 %3809
        %v3812 = vadd.f32 %v3436, %v3810
        %vm3813 = vcmask 130048
        %3814 = vst.msk [vmem:[%s286] sm:$0xff] %vm3813, %v3812
        %s3815 = sand.u32 %s143, 1
        %s3816 = scalar_lea.sflag [#allocation4], %s3815
        %s3817 = sand.u32 %s143, 1
        %s3818 = smul.addr %s3817, 8
        %s3819 = scalar_lea.vmem [#allocation11], %s3818
        // Predicated region
        $region57: #{tpu_custom_call.1} parent=39 // pred_check
          %p3820 = pneg %p153
        $region58: #{tpu_custom_call.1} parent=39 // pred_check_branch
          %3822 = sbr.rel (%p3820) target = $region60
        $region59: #{tpu_custom_call.1} parent=39 // pred_region
          %3824 = vsyncadd %s3816, 0
          %s3825 = smul.addr %s25, 8
          %s3826 = scalar_lea.hbm %s5, %s3825
          %s3828 = sshll.u32 %s3819, 4
          %s3829 = int_to_ptr.vmem [resolvable:$true] %s3828
          %s3830 = sshll.u32 %s3826, 4
          %s3831 = int_to_ptr.hbm [resolvable:$true] %s3830
          %3833 = dma.vmem_to_hbm [thread:$0]  %s3829, 128, %s3831, %s3816
        $region60: #{tpu_custom_call.1} parent=39 // pred_fallthru
          _
      $region40: #{tpu_custom_call.1} parent=5 // pred_fallthru
        _
      %p3834 = scmp.le.s32.totalorder 2, %s20
      // Predicated region
      $region61: #{tpu_custom_call.1} parent=5 // pred_check
        %p3835 = pneg %p3834
      $region62: #{tpu_custom_call.1} parent=5 // pred_check_branch
        %3837 = sbr.rel (%p3835) target = $region64
      $region63: #{tpu_custom_call.1} parent=5 // pred_region
        %s3838 = ssub.s32 %s20, 2
        // Predicated region
        $region65: #{tpu_custom_call.1} parent=63 // pred_check
          %p3839 = pneg %p159
        $region66: #{tpu_custom_call.1} parent=63 // pred_check_branch
          %3841 = sbr.rel (%p3839) target = $region68
        $region67: #{tpu_custom_call.1} parent=63 // pred_region
          %s3842 = sand.u32 %s144, 1
          %s3843 = scalar_lea.sflag [#allocation4], %s3842
          %s3844 = sand.u32 %s144, 1
          %s3845 = smul.addr %s3844, 8
          %s3846 = scalar_lea.vmem [#allocation11], %s3845
          %3848 = dma.done %s3843, 128
        $region68: #{tpu_custom_call.1} parent=63 // pred_fallthru
          _
      $region64: #{tpu_custom_call.1} parent=5 // pred_fallthru
        _
    $region6: #{tpu_custom_call.1} parent=1 // loop_footer
      %s24 = sadd.s32 1, %s20
    $region7: #{tpu_custom_call.1} parent=1 // loop_footer_branch
      %19 = sbr.rel target = $region3
    $region8: #{tpu_custom_call.1} parent=1 // loop_exit
      _
    %3849 = vsyncpa [#allocation3], 1
    %s3850 = scalar_lea.sflag [#allocation3], 1
    %3851 = vsyncpa %s3850, 1
    %3852 = vsyncpa [#allocation8], 1
    %3853 = vsyncpa [#allocation4], 1
    %s3854 = scalar_lea.sflag [#allocation4], 1
    %3855 = vsyncpa %s3854, 1
    %3856 = vsyncpa [#allocation5], 1
    %s3857 = scalar_lea.sflag [#allocation5], 1
    %3858 = vsyncpa %s3857, 1
    %3859 = vsyncpa [#allocation6], 1
    %s3860 = scalar_lea.sflag [#allocation6], 1
    %3861 = vsyncpa %s3860, 1

</llo_original>
